<compile_context>
chip_gen: v5e
topology: v5e:2x2
jax: 0.10.0
libtpu: 0.0.40
codegen_flags: <defaults>
</compile_context>

<pallas_src>
import jax
import jax.numpy as jnp
from jax.experimental import pallas as pl
from jax.experimental.pallas import tpu as pltpu

EPS = 1e-5
D_IN = 256
D_HID = 512


def _pick_batch_tile(batch):
    """Batch-tile size: multiples of 256 fill the v6e/v7x MXU, 128 fills v5e."""
    for tb in (512, 256, 128, 64, 32, 16, 8):
        if batch % tb == 0:
            return tb
    return batch  # tiny / odd batch: single tile


def _make_kernel(batch_total):
    inv_b = 1.0 / float(batch_total)

    def kernel(x_ref, w1_ref, g1_ref, be1_ref, w2_ref, g2_ref, be2_ref,
               w3_ref, b3_ref, out_ref, stats1, stats2, fct1, fct2):
        p = pl.program_id(0)   # pass: 0 = layer-1 stats, 1 = layer-2 stats, 2 = final
        i = pl.program_id(1)   # batch tile

        # ---- pass prologues: zero / finalize per-feature statistics (f32) ----
        @pl.when(jnp.logical_and(p == 0, i == 0))
        def _zero_l1():
            stats1[...] = jnp.zeros_like(stats1)

        @pl.when(jnp.logical_and(p == 1, i == 0))
        def _finalize_l1():
            mu = stats1[0:1, :] * inv_b
            var = jnp.maximum(stats1[1:2, :] * inv_b - mu * mu, 0.0)
            s = g1_ref[...] * jax.lax.rsqrt(var + EPS)
            fct1[0:1, :] = s
            fct1[1:2, :] = be1_ref[...] - mu * s
            stats2[...] = jnp.zeros_like(stats2)

        @pl.when(jnp.logical_and(p == 2, i == 0))
        def _finalize_l2():
            mu = stats2[0:1, :] * inv_b
            var = jnp.maximum(stats2[1:2, :] * inv_b - mu * mu, 0.0)
            s = g2_ref[...] * jax.lax.rsqrt(var + EPS)
            fct2[0:1, :] = s
            fct2[1:2, :] = be2_ref[...] - mu * s

        # Layer-1 matmul is needed by every pass (cheaper to recompute than to spill
        # the (B, 512) activation to HBM; weights are VMEM-resident).  bf16 x bf16 with
        # f32 accumulation is the native MXU path on v5e/v6e/v7x.
        h1 = jnp.dot(x_ref[...].astype(jnp.bfloat16), w1_ref[...],
                     preferred_element_type=jnp.float32)

        def layer2_pre():
            # BN1 apply (one per-feature mul-add, f32) + ReLU, then layer-2 matmul.
            a1 = jnp.maximum(h1 * fct1[0:1, :] + fct1[1:2, :], 0.0)
            return jnp.dot(a1.astype(jnp.bfloat16), w2_ref[...],
                           preferred_element_type=jnp.float32)

        @pl.when(p == 0)
        def _pass0():
            stats1[0:1, :] += jnp.sum(h1, axis=0, keepdims=True)
            stats1[1:2, :] += jnp.sum(h1 * h1, axis=0, keepdims=True)

        @pl.when(p == 1)
        def _pass1():
            h2 = layer2_pre()
            stats2[0:1, :] += jnp.sum(h2, axis=0, keepdims=True)
            stats2[1:2, :] += jnp.sum(h2 * h2, axis=0, keepdims=True)

        @pl.when(p == 2)
        def _pass2():
            h2 = layer2_pre()
            a2 = jnp.maximum(h2 * fct2[0:1, :] + fct2[1:2, :], 0.0)
            # Linear(512->1): VPU multiply + lane reduction against the (1, 512) row.
            logits = jnp.sum(a2 * w3_ref[...], axis=-1, keepdims=True) + b3_ref[0, 0]
            out_ref[...] = logits.astype(out_ref.dtype)

    return kernel


def domain_classifier(x, params):
    """x: (B, 256) float32 -> (B, 1) float32."""
    (w1, b1, g1, be1, w2, b2, g2, be2, w3, b3) = params
    del b1, b2  # exactly cancelled by the training-mode BN mean subtraction

    batch = x.shape[0]
    tb = _pick_batch_tile(batch)
    num_tiles = batch // tb
    grid = (3, num_tiles)  # (pass, batch_tile); pass must be the slow (outer) axis

    def invariant(shape):
        return pl.BlockSpec(shape, lambda p, i: (0,) * len(shape))

    in_specs = [
        pl.BlockSpec((tb, D_IN), lambda p, i: (i, 0)),       # x: streamed per batch tile
        invariant(w1.shape),                                  # weights / BN params resident
        invariant(g1.shape),
        invariant(be1.shape),
        invariant(w2.shape),
        invariant(g2.shape),
        invariant(be2.shape),
        invariant(w3.shape),
        pl.BlockSpec(memory_space=pltpu.MemorySpace.SMEM),    # b3 scalar
    ]
    out_specs = pl.BlockSpec((tb, 1), lambda p, i: (i, 0))

    scratch_shapes = [pltpu.VMEM((2, D_HID), jnp.float32)] * 4  # stats1, stats2, fct1, fct2

    # VMEM budget: resident weights/vectors + double-buffered streamed x/out tiles +
    # in-flight activation slabs + stats scratch + compiler headroom.  Capped well
    # below v7x's 64 MiB per-core ceiling; explicit so v5e's 16 MiB default is raised.
    resident = w1.nbytes + w2.nbytes + 5 * 8 * D_HID * 4
    streamed = 2 * (tb * D_IN * 4 + tb * 128 * 4)             # x tile + lane-padded out tile
    act = tb * D_HID * (4 + 2 + 4 + 4)                        # h1(f32) a1(bf16) h2(f32) a2(f32)
    scratch_bytes = 4 * 8 * D_HID * 4
    vmem_limit = int(min(32 << 20,
                         resident + streamed + act + scratch_bytes + (8 << 20)))

    flops = batch * (3 * 2 * D_IN * D_HID      # layer-1 matmul runs in all 3 passes
                     + 2 * 2 * D_HID * D_HID   # layer-2 matmul runs in passes 1 and 2
                     + 2 * D_HID               # final 512 -> 1 reduce
                     + 10 * D_HID)             # BN apply / stats elementwise
    bytes_accessed = (3 * x.nbytes + w1.nbytes + w2.nbytes
                      + g1.nbytes + be1.nbytes + g2.nbytes + be2.nbytes
                      + w3.nbytes + b3.nbytes + 3 * batch * 4)
    cost = pl.CostEstimate(flops=flops, transcendentals=2 * D_HID,
                           bytes_accessed=bytes_accessed)

    return pl.pallas_call(
        _make_kernel(batch),
        out_shape=jax.ShapeDtypeStruct((batch, 1), jnp.float32),
        grid_spec=pltpu.PrefetchScalarGridSpec(
            num_scalar_prefetch=0,
            grid=grid,
            in_specs=in_specs,
            out_specs=out_specs,
            scratch_shapes=scratch_shapes,
        ),
        compiler_params=pltpu.CompilerParams(
            dimension_semantics=("arbitrary", "arbitrary"),
            vmem_limit_bytes=vmem_limit,
        ),
        cost_estimate=cost,
    )(x, w1, g1, be1, w2, g2, be2, w3, b3)


def init_params(key):
    """Deterministic synthetic parameters matching the PyTorch module shapes.

    w1/w2 are stored transposed (in, out) and in bf16 (storage + MXU dtype); w3 is kept
    in PyTorch's (1, 512) layout for the VPU reduce.
    """
    ks = jax.random.split(key, 6)
    w1 = (jax.random.normal(ks[0], (D_IN, D_HID), jnp.float32)
          * (1.0 / jnp.sqrt(float(D_IN)))).astype(jnp.bfloat16)
    b1 = jax.random.normal(ks[1], (1, D_HID), jnp.float32) * 0.01
    w2 = (jax.random.normal(ks[2], (D_HID, D_HID), jnp.float32)
          * (1.0 / jnp.sqrt(float(D_HID)))).astype(jnp.bfloat16)
    b2 = jax.random.normal(ks[3], (1, D_HID), jnp.float32) * 0.01
    w3 = jax.random.normal(ks[4], (1, D_HID), jnp.float32) * (1.0 / jnp.sqrt(float(D_HID)))
    b3 = jax.random.normal(ks[5], (1, 1), jnp.float32) * 0.01
    # BatchNorm affine params (PyTorch init: gamma=1, beta=0).
    g1 = jnp.ones((1, D_HID), jnp.float32)
    be1 = jnp.zeros((1, D_HID), jnp.float32)
    g2 = jnp.ones((1, D_HID), jnp.float32)
    be2 = jnp.zeros((1, D_HID), jnp.float32)
    return (w1, b1, g1, be1, w2, b2, g2, be2, w3, b3)


def reference(x, params):
    """Plain-JAX all-f32 reference matching the PyTorch module (biases included,
    two-pass BN statistics)."""
    (w1, b1, g1, be1, w2, b2, g2, be2, w3, b3) = params
    w1 = w1.astype(jnp.float32)
    w2 = w2.astype(jnp.float32)

    def bn_relu(h, g, b):
        mu = jnp.mean(h, axis=0, keepdims=True)
        var = jnp.mean((h - mu) ** 2, axis=0, keepdims=True)
        return jnp.maximum((h - mu) * jax.lax.rsqrt(var + EPS) * g + b, 0.0)

    h = bn_relu(x @ w1 + b1, g1, be1)
    h = bn_relu(h @ w2 + b2, g2, be2)
    return h @ w3.T + b3


if __name__ == "__main__":
    key = jax.random.PRNGKey(0)
    kx, kp = jax.random.split(key)

    B = 8  # BatchNorm1d (training-mode stats) needs batch > 1
    x = jax.random.normal(kx, (B, D_IN), jnp.float32)
    params = init_params(kp)

    out = jax.block_until_ready(domain_classifier(x, params))
    ref = reference(x, params)

    assert out.shape == (B, 1)
    max_err = float(jnp.max(jnp.abs(out - ref)))
    # Kernel feeds bf16 operands to the MXU (native path) while the reference is all-f32,
    # so allow ~1% discrepancy.
    assert jnp.allclose(out, ref, atol=5e-2, rtol=5e-2), f"max abs err = {max_err}"

    print("KERNEL_OK")
</pallas_src>

<mosaic_0001>
module attributes {stable_mosaic.version = 11 : i64} {
  func.func @kernel(%arg0: i32, %arg1: i32, %arg2: memref<8x256xf32, #tpu.memory_space<vmem>>, %arg3: memref<256x512xbf16, #tpu.memory_space<vmem>>, %arg4: memref<1x512xf32, #tpu.memory_space<vmem>>, %arg5: memref<1x512xf32, #tpu.memory_space<vmem>>, %arg6: memref<512x512xbf16, #tpu.memory_space<vmem>>, %arg7: memref<1x512xf32, #tpu.memory_space<vmem>>, %arg8: memref<1x512xf32, #tpu.memory_space<vmem>>, %arg9: memref<1x512xf32, #tpu.memory_space<vmem>>, %arg10: memref<1x1xf32, #tpu.memory_space<smem>>, %arg11: memref<8x1xf32, #tpu.memory_space<vmem>>, %arg12: memref<2x512xf32, #tpu.memory_space<vmem>>, %arg13: memref<2x512xf32, #tpu.memory_space<vmem>>, %arg14: memref<2x512xf32, #tpu.memory_space<vmem>>, %arg15: memref<2x512xf32, #tpu.memory_space<vmem>>) attributes {dimension_semantics = [#tpu.dimension_semantics<arbitrary>, #tpu.dimension_semantics<arbitrary>], iteration_bounds = array<i64: 3, 1>, scalar_prefetch = 0 : i64, scratch_operands = 4 : i64, tpu.core_type = #tpu.core_type<tc>, window_params = [{transform_indices = @transform_0, window_bounds = array<i64: 8, 256>}, {pipeline_mode = #tpu.pipeline_mode<synchronous>, transform_indices = @transform_1, window_bounds = array<i64: 256, 512>}, {pipeline_mode = #tpu.pipeline_mode<synchronous>, transform_indices = @transform_2, window_bounds = array<i64: 1, 512>}, {pipeline_mode = #tpu.pipeline_mode<synchronous>, transform_indices = @transform_3, window_bounds = array<i64: 1, 512>}, {pipeline_mode = #tpu.pipeline_mode<synchronous>, transform_indices = @transform_4, window_bounds = array<i64: 512, 512>}, {pipeline_mode = #tpu.pipeline_mode<synchronous>, transform_indices = @transform_5, window_bounds = array<i64: 1, 512>}, {pipeline_mode = #tpu.pipeline_mode<synchronous>, transform_indices = @transform_6, window_bounds = array<i64: 1, 512>}, {pipeline_mode = #tpu.pipeline_mode<synchronous>, transform_indices = @transform_7, window_bounds = array<i64: 1, 512>}, {transform_indices = @transform_8, window_bounds = array<i64: 1, 1>}, {transform_indices = @transform_9, window_bounds = array<i64: 8, 1>}]} {
    %c0_i32 = arith.constant 0 : i32
    %0 = arith.cmpi eq, %arg0, %c0_i32 : i32
    %c0_i32_0 = arith.constant 0 : i32
    %1 = arith.cmpi eq, %arg1, %c0_i32_0 : i32
    %2 = arith.andi %0, %1 : i1
    %3 = arith.extui %2 : i1 to i32
    %c0_i32_1 = arith.constant 0 : i32
    %4 = arith.cmpi ne, %3, %c0_i32_1 : i32
    scf.if %4 {
      %cst_15 = arith.constant 0.000000e+00 : f32
      %28 = vector.broadcast %cst_15 : f32 to vector<2x512xf32>
      %c0_16 = arith.constant 0 : index
      %c0_17 = arith.constant 0 : index
      %29 = vector.load %arg12[%c0_16, %c0_17] : memref<2x512xf32, #tpu.memory_space<vmem>>, vector<2x512xf32>
      tpu.vector_store %arg12[%c0_16, %c0_17], %28 {strides = array<i32>} : memref<2x512xf32, #tpu.memory_space<vmem>>, vector<2x512xf32>,
    } else {
    }
    %c1_i32 = arith.constant 1 : i32
    %5 = arith.cmpi eq, %arg0, %c1_i32 : i32
    %c0_i32_2 = arith.constant 0 : i32
    %6 = arith.cmpi eq, %arg1, %c0_i32_2 : i32
    %7 = arith.andi %5, %6 : i1
    %8 = arith.extui %7 : i1 to i32
    %c0_i32_3 = arith.constant 0 : i32
    %9 = arith.cmpi ne, %8, %c0_i32_3 : i32
    scf.if %9 {
      %c0_15 = arith.constant 0 : index
      %c0_16 = arith.constant 0 : index
      %28 = vector.load %arg12[%c0_15, %c0_16] : memref<2x512xf32, #tpu.memory_space<vmem>>, vector<1x512xf32>
      %cst_17 = arith.constant 1.250000e-01 : f32
      %29 = vector.broadcast %cst_17 : f32 to vector<1x512xf32>
      %30 = arith.mulf %28, %29 : vector<1x512xf32>
      %c1 = arith.constant 1 : index
      %c0_18 = arith.constant 0 : index
      %31 = vector.load %arg12[%c1, %c0_18] : memref<2x512xf32, #tpu.memory_space<vmem>>, vector<1x512xf32>
      %cst_19 = arith.constant 1.250000e-01 : f32
      %32 = vector.broadcast %cst_19 : f32 to vector<1x512xf32>
      %33 = arith.mulf %31, %32 : vector<1x512xf32>
      %34 = arith.mulf %30, %30 : vector<1x512xf32>
      %35 = arith.subf %33, %34 : vector<1x512xf32>
      %cst_20 = arith.constant 0.000000e+00 : f32
      %36 = vector.broadcast %cst_20 : f32 to vector<1x512xf32>
      %37 = arith.maximumf %35, %36 : vector<1x512xf32>
      %c0_21 = arith.constant 0 : index
      %c0_22 = arith.constant 0 : index
      %38 = vector.load %arg4[%c0_21, %c0_22] : memref<1x512xf32, #tpu.memory_space<vmem>>, vector<1x512xf32>
      %cst_23 = arith.constant 9.99999974E-6 : f32
      %39 = vector.broadcast %cst_23 : f32 to vector<1x512xf32>
      %40 = arith.addf %37, %39 : vector<1x512xf32>
      %41 = math.rsqrt %40 : vector<1x512xf32>
      %42 = arith.mulf %38, %41 : vector<1x512xf32>
      %c0_24 = arith.constant 0 : index
      %c0_25 = arith.constant 0 : index
      %43 = vector.load %arg14[%c0_24, %c0_25] : memref<2x512xf32, #tpu.memory_space<vmem>>, vector<1x512xf32>
      tpu.vector_store %arg14[%c0_24, %c0_25], %42 {strides = array<i32>} : memref<2x512xf32, #tpu.memory_space<vmem>>, vector<1x512xf32>,
      %c0_26 = arith.constant 0 : index
      %c0_27 = arith.constant 0 : index
      %44 = vector.load %arg5[%c0_26, %c0_27] : memref<1x512xf32, #tpu.memory_space<vmem>>, vector<1x512xf32>
      %45 = arith.mulf %30, %42 : vector<1x512xf32>
      %46 = arith.subf %44, %45 : vector<1x512xf32>
      %c1_28 = arith.constant 1 : index
      %c0_29 = arith.constant 0 : index
      %47 = vector.load %arg14[%c1_28, %c0_29] : memref<2x512xf32, #tpu.memory_space<vmem>>, vector<1x512xf32>
      tpu.vector_store %arg14[%c1_28, %c0_29], %46 {strides = array<i32>} : memref<2x512xf32, #tpu.memory_space<vmem>>, vector<1x512xf32>,
      %cst_30 = arith.constant 0.000000e+00 : f32
      %48 = vector.broadcast %cst_30 : f32 to vector<2x512xf32>
      %c0_31 = arith.constant 0 : index
      %c0_32 = arith.constant 0 : index
      %49 = vector.load %arg13[%c0_31, %c0_32] : memref<2x512xf32, #tpu.memory_space<vmem>>, vector<2x512xf32>
      tpu.vector_store %arg13[%c0_31, %c0_32], %48 {strides = array<i32>} : memref<2x512xf32, #tpu.memory_space<vmem>>, vector<2x512xf32>,
    } else {
    }
    %c2_i32 = arith.constant 2 : i32
    %10 = arith.cmpi eq, %arg0, %c2_i32 : i32
    %c0_i32_4 = arith.constant 0 : i32
    %11 = arith.cmpi eq, %arg1, %c0_i32_4 : i32
    %12 = arith.andi %10, %11 : i1
    %13 = arith.extui %12 : i1 to i32
    %c0_i32_5 = arith.constant 0 : i32
    %14 = arith.cmpi ne, %13, %c0_i32_5 : i32
    scf.if %14 {
      %c0_15 = arith.constant 0 : index
      %c0_16 = arith.constant 0 : index
      %28 = vector.load %arg13[%c0_15, %c0_16] : memref<2x512xf32, #tpu.memory_space<vmem>>, vector<1x512xf32>
      %cst_17 = arith.constant 1.250000e-01 : f32
      %29 = vector.broadcast %cst_17 : f32 to vector<1x512xf32>
      %30 = arith.mulf %28, %29 : vector<1x512xf32>
      %c1 = arith.constant 1 : index
      %c0_18 = arith.constant 0 : index
      %31 = vector.load %arg13[%c1, %c0_18] : memref<2x512xf32, #tpu.memory_space<vmem>>, vector<1x512xf32>
      %cst_19 = arith.constant 1.250000e-01 : f32
      %32 = vector.broadcast %cst_19 : f32 to vector<1x512xf32>
      %33 = arith.mulf %31, %32 : vector<1x512xf32>
      %34 = arith.mulf %30, %30 : vector<1x512xf32>
      %35 = arith.subf %33, %34 : vector<1x512xf32>
      %cst_20 = arith.constant 0.000000e+00 : f32
      %36 = vector.broadcast %cst_20 : f32 to vector<1x512xf32>
      %37 = arith.maximumf %35, %36 : vector<1x512xf32>
      %c0_21 = arith.constant 0 : index
      %c0_22 = arith.constant 0 : index
      %38 = vector.load %arg7[%c0_21, %c0_22] : memref<1x512xf32, #tpu.memory_space<vmem>>, vector<1x512xf32>
      %cst_23 = arith.constant 9.99999974E-6 : f32
      %39 = vector.broadcast %cst_23 : f32 to vector<1x512xf32>
      %40 = arith.addf %37, %39 : vector<1x512xf32>
      %41 = math.rsqrt %40 : vector<1x512xf32>
      %42 = arith.mulf %38, %41 : vector<1x512xf32>
      %c0_24 = arith.constant 0 : index
      %c0_25 = arith.constant 0 : index
      %43 = vector.load %arg15[%c0_24, %c0_25] : memref<2x512xf32, #tpu.memory_space<vmem>>, vector<1x512xf32>
      tpu.vector_store %arg15[%c0_24, %c0_25], %42 {strides = array<i32>} : memref<2x512xf32, #tpu.memory_space<vmem>>, vector<1x512xf32>,
      %c0_26 = arith.constant 0 : index
      %c0_27 = arith.constant 0 : index
      %44 = vector.load %arg8[%c0_26, %c0_27] : memref<1x512xf32, #tpu.memory_space<vmem>>, vector<1x512xf32>
      %45 = arith.mulf %30, %42 : vector<1x512xf32>
      %46 = arith.subf %44, %45 : vector<1x512xf32>
      %c1_28 = arith.constant 1 : index
      %c0_29 = arith.constant 0 : index
      %47 = vector.load %arg15[%c1_28, %c0_29] : memref<2x512xf32, #tpu.memory_space<vmem>>, vector<1x512xf32>
      tpu.vector_store %arg15[%c1_28, %c0_29], %46 {strides = array<i32>} : memref<2x512xf32, #tpu.memory_space<vmem>>, vector<1x512xf32>,
    } else {
    }
    %c0 = arith.constant 0 : index
    %c0_6 = arith.constant 0 : index
    %15 = vector.load %arg2[%c0, %c0_6] : memref<8x256xf32, #tpu.memory_space<vmem>>, vector<8x256xf32>
    %16 = arith.truncf %15 : vector<8x256xf32> to vector<8x256xbf16>
    %c0_7 = arith.constant 0 : index
    %c0_8 = arith.constant 0 : index
    %17 = vector.load %arg3[%c0_7, %c0_8] : memref<256x512xbf16, #tpu.memory_space<vmem>>, vector<256x512xbf16>
    %cst = arith.constant dense<0.000000e+00> : vector<8x512xf32>
    %18 = tpu.matmul %16, %17, %cst {dimension_numbers = #tpu.dot_dimension_numbers<[1], [0], [0], [1], [0, 0, 1, 1], [], []>} : vector<8x256xbf16>, vector<256x512xbf16>, vector<8x512xf32> -> vector<8x512xf32>
    %c0_i32_9 = arith.constant 0 : i32
    %19 = arith.cmpi eq, %arg0, %c0_i32_9 : i32
    %20 = arith.extui %19 : i1 to i32
    %c0_i32_10 = arith.constant 0 : i32
    %21 = arith.cmpi ne, %20, %c0_i32_10 : i32
    scf.if %21 {
      %c0_15 = arith.constant 0 : index
      %c0_16 = arith.constant 0 : index
      %28 = vector.load %arg12[%c0_15, %c0_16] : memref<2x512xf32, #tpu.memory_space<vmem>>, vector<1x512xf32>
      %cst_17 = arith.constant dense<0.000000e+00> : vector<512xf32>
      %29 = vector.multi_reduction <add>, %18, %cst_17 [0] : vector<8x512xf32> to vector<512xf32>
      %30 = vector.shape_cast %29 : vector<512xf32> to vector<1x512xf32>
      %31 = arith.addf %28, %30 : vector<1x512xf32>
      %c0_18 = arith.constant 0 : index
      %c0_19 = arith.constant 0 : index
      %32 = vector.load %arg12[%c0_18, %c0_19] : memref<2x512xf32, #tpu.memory_space<vmem>>, vector<1x512xf32>
      tpu.vector_store %arg12[%c0_18, %c0_19], %31 {strides = array<i32>} : memref<2x512xf32, #tpu.memory_space<vmem>>, vector<1x512xf32>,
      %c1 = arith.constant 1 : index
      %c0_20 = arith.constant 0 : index
      %33 = vector.load %arg12[%c1, %c0_20] : memref<2x512xf32, #tpu.memory_space<vmem>>, vector<1x512xf32>
      %34 = arith.mulf %18, %18 : vector<8x512xf32>
      %cst_21 = arith.constant dense<0.000000e+00> : vector<512xf32>
      %35 = vector.multi_reduction <add>, %34, %cst_21 [0] : vector<8x512xf32> to vector<512xf32>
      %36 = vector.shape_cast %35 : vector<512xf32> to vector<1x512xf32>
      %37 = arith.addf %33, %36 : vector<1x512xf32>
      %c1_22 = arith.constant 1 : index
      %c0_23 = arith.constant 0 : index
      %38 = vector.load %arg12[%c1_22, %c0_23] : memref<2x512xf32, #tpu.memory_space<vmem>>, vector<1x512xf32>
      tpu.vector_store %arg12[%c1_22, %c0_23], %37 {strides = array<i32>} : memref<2x512xf32, #tpu.memory_space<vmem>>, vector<1x512xf32>,
    } else {
    }
    %c1_i32_11 = arith.constant 1 : i32
    %22 = arith.cmpi eq, %arg0, %c1_i32_11 : i32
    %23 = arith.extui %22 : i1 to i32
    %c0_i32_12 = arith.constant 0 : i32
    %24 = arith.cmpi ne, %23, %c0_i32_12 : i32
    scf.if %24 {
      %c0_15 = arith.constant 0 : index
      %c0_16 = arith.constant 0 : index
      %28 = vector.load %arg14[%c0_15, %c0_16] : memref<2x512xf32, #tpu.memory_space<vmem>>, vector<1x512xf32>
      %29 = vector.broadcast %28 : vector<1x512xf32> to vector<8x512xf32>
      %30 = arith.mulf %18, %29 : vector<8x512xf32>
      %c1 = arith.constant 1 : index
      %c0_17 = arith.constant 0 : index
      %31 = vector.load %arg14[%c1, %c0_17] : memref<2x512xf32, #tpu.memory_space<vmem>>, vector<1x512xf32>
      %32 = vector.broadcast %31 : vector<1x512xf32> to vector<8x512xf32>
      %33 = arith.addf %30, %32 : vector<8x512xf32>
      %cst_18 = arith.constant 0.000000e+00 : f32
      %34 = vector.broadcast %cst_18 : f32 to vector<8x512xf32>
      %35 = arith.maximumf %33, %34 : vector<8x512xf32>
      %36 = arith.truncf %35 : vector<8x512xf32> to vector<8x512xbf16>
      %c0_19 = arith.constant 0 : index
      %c0_20 = arith.constant 0 : index
      %37 = vector.load %arg6[%c0_19, %c0_20] : memref<512x512xbf16, #tpu.memory_space<vmem>>, vector<512x512xbf16>
      %cst_21 = arith.constant dense<0.000000e+00> : vector<8x512xf32>
      %38 = tpu.matmul %36, %37, %cst_21 {dimension_numbers = #tpu.dot_dimension_numbers<[1], [0], [0], [1], [0, 0, 1, 1], [], []>} : vector<8x512xbf16>, vector<512x512xbf16>, vector<8x512xf32> -> vector<8x512xf32>
      %c0_22 = arith.constant 0 : index
      %c0_23 = arith.constant 0 : index
      %39 = vector.load %arg13[%c0_22, %c0_23] : memref<2x512xf32, #tpu.memory_space<vmem>>, vector<1x512xf32>
      %cst_24 = arith.constant dense<0.000000e+00> : vector<512xf32>
      %40 = vector.multi_reduction <add>, %38, %cst_24 [0] : vector<8x512xf32> to vector<512xf32>
      %41 = vector.shape_cast %40 : vector<512xf32> to vector<1x512xf32>
      %42 = arith.addf %39, %41 : vector<1x512xf32>
      %c0_25 = arith.constant 0 : index
      %c0_26 = arith.constant 0 : index
      %43 = vector.load %arg13[%c0_25, %c0_26] : memref<2x512xf32, #tpu.memory_space<vmem>>, vector<1x512xf32>
      tpu.vector_store %arg13[%c0_25, %c0_26], %42 {strides = array<i32>} : memref<2x512xf32, #tpu.memory_space<vmem>>, vector<1x512xf32>,
      %c1_27 = arith.constant 1 : index
      %c0_28 = arith.constant 0 : index
      %44 = vector.load %arg13[%c1_27, %c0_28] : memref<2x512xf32, #tpu.memory_space<vmem>>, vector<1x512xf32>
      %45 = arith.mulf %38, %38 : vector<8x512xf32>
      %cst_29 = arith.constant dense<0.000000e+00> : vector<512xf32>
      %46 = vector.multi_reduction <add>, %45, %cst_29 [0] : vector<8x512xf32> to vector<512xf32>
      %47 = vector.shape_cast %46 : vector<512xf32> to vector<1x512xf32>
      %48 = arith.addf %44, %47 : vector<1x512xf32>
      %c1_30 = arith.constant 1 : index
      %c0_31 = arith.constant 0 : index
      %49 = vector.load %arg13[%c1_30, %c0_31] : memref<2x512xf32, #tpu.memory_space<vmem>>, vector<1x512xf32>
      tpu.vector_store %arg13[%c1_30, %c0_31], %48 {strides = array<i32>} : memref<2x512xf32, #tpu.memory_space<vmem>>, vector<1x512xf32>,
    } else {
    }
    %c2_i32_13 = arith.constant 2 : i32
    %25 = arith.cmpi eq, %arg0, %c2_i32_13 : i32
    %26 = arith.extui %25 : i1 to i32
    %c0_i32_14 = arith.constant 0 : i32
    %27 = arith.cmpi ne, %26, %c0_i32_14 : i32
    scf.if %27 {
      %c0_15 = arith.constant 0 : index
      %c0_16 = arith.constant 0 : index
      %28 = vector.load %arg14[%c0_15, %c0_16] : memref<2x512xf32, #tpu.memory_space<vmem>>, vector<1x512xf32>
      %29 = vector.broadcast %28 : vector<1x512xf32> to vector<8x512xf32>
      %30 = arith.mulf %18, %29 : vector<8x512xf32>
      %c1 = arith.constant 1 : index
      %c0_17 = arith.constant 0 : index
      %31 = vector.load %arg14[%c1, %c0_17] : memref<2x512xf32, #tpu.memory_space<vmem>>, vector<1x512xf32>
      %32 = vector.broadcast %31 : vector<1x512xf32> to vector<8x512xf32>
      %33 = arith.addf %30, %32 : vector<8x512xf32>
      %cst_18 = arith.constant 0.000000e+00 : f32
      %34 = vector.broadcast %cst_18 : f32 to vector<8x512xf32>
      %35 = arith.maximumf %33, %34 : vector<8x512xf32>
      %36 = arith.truncf %35 : vector<8x512xf32> to vector<8x512xbf16>
      %c0_19 = arith.constant 0 : index
      %c0_20 = arith.constant 0 : index
      %37 = vector.load %arg6[%c0_19, %c0_20] : memref<512x512xbf16, #tpu.memory_space<vmem>>, vector<512x512xbf16>
      %cst_21 = arith.constant dense<0.000000e+00> : vector<8x512xf32>
      %38 = tpu.matmul %36, %37, %cst_21 {dimension_numbers = #tpu.dot_dimension_numbers<[1], [0], [0], [1], [0, 0, 1, 1], [], []>} : vector<8x512xbf16>, vector<512x512xbf16>, vector<8x512xf32> -> vector<8x512xf32>
      %c0_22 = arith.constant 0 : index
      %c0_23 = arith.constant 0 : index
      %39 = vector.load %arg15[%c0_22, %c0_23] : memref<2x512xf32, #tpu.memory_space<vmem>>, vector<1x512xf32>
      %40 = vector.broadcast %39 : vector<1x512xf32> to vector<8x512xf32>
      %41 = arith.mulf %38, %40 : vector<8x512xf32>
      %c1_24 = arith.constant 1 : index
      %c0_25 = arith.constant 0 : index
      %42 = vector.load %arg15[%c1_24, %c0_25] : memref<2x512xf32, #tpu.memory_space<vmem>>, vector<1x512xf32>
      %43 = vector.broadcast %42 : vector<1x512xf32> to vector<8x512xf32>
      %44 = arith.addf %41, %43 : vector<8x512xf32>
      %cst_26 = arith.constant 0.000000e+00 : f32
      %45 = vector.broadcast %cst_26 : f32 to vector<8x512xf32>
      %46 = arith.maximumf %44, %45 : vector<8x512xf32>
      %c0_27 = arith.constant 0 : index
      %c0_28 = arith.constant 0 : index
      %47 = vector.load %arg9[%c0_27, %c0_28] : memref<1x512xf32, #tpu.memory_space<vmem>>, vector<1x512xf32>
      %48 = vector.broadcast %47 : vector<1x512xf32> to vector<8x512xf32>
      %49 = arith.mulf %46, %48 : vector<8x512xf32>
      %cst_29 = arith.constant dense<0.000000e+00> : vector<8xf32>
      %50 = vector.multi_reduction <add>, %49, %cst_29 [1] : vector<8x512xf32> to vector<8xf32>
      %51 = vector.shape_cast %50 : vector<8xf32> to vector<8x1xf32>
      %c0_30 = arith.constant 0 : index
      %c0_31 = arith.constant 0 : index
      %52 = memref.load %arg10[%c0_30, %c0_31] : memref<1x1xf32, #tpu.memory_space<smem>>
      %53 = vector.broadcast %52 : f32 to vector<8x1xf32>
      %54 = arith.addf %51, %53 : vector<8x1xf32>
      %c0_32 = arith.constant 0 : index
      %c0_33 = arith.constant 0 : index
      %55 = vector.load %arg11[%c0_32, %c0_33] : memref<8x1xf32, #tpu.memory_space<vmem>>, vector<8x1xf32>
      tpu.vector_store %arg11[%c0_32, %c0_33], %54 {strides = array<i32>} : memref<8x1xf32, #tpu.memory_space<vmem>>, vector<8x1xf32>,
    } else {
    }
    return
  }
  func.func @transform_0(%arg0: i32, %arg1: i32) -> (i32, i32) {
    %c0_i32 = arith.constant 0 : i32
    %c0_i32_0 = arith.constant 0 : i32
    return %arg1, %c0_i32 : i32, i32
  }
  func.func @transform_1(%arg0: i32, %arg1: i32) -> (i32, i32) {
    %c0_i32 = arith.constant 0 : i32
    %c0_i32_0 = arith.constant 0 : i32
    %c0_i32_1 = arith.constant 0 : i32
    return %c0_i32, %c0_i32_0 : i32, i32
  }
  func.func @transform_2(%arg0: i32, %arg1: i32) -> (i32, i32) {
    %c0_i32 = arith.constant 0 : i32
    %c0_i32_0 = arith.constant 0 : i32
    %c0_i32_1 = arith.constant 0 : i32
    return %c0_i32, %c0_i32_0 : i32, i32
  }
  func.func @transform_3(%arg0: i32, %arg1: i32) -> (i32, i32) {
    %c0_i32 = arith.constant 0 : i32
    %c0_i32_0 = arith.constant 0 : i32
    %c0_i32_1 = arith.constant 0 : i32
    return %c0_i32, %c0_i32_0 : i32, i32
  }
  func.func @transform_4(%arg0: i32, %arg1: i32) -> (i32, i32) {
    %c0_i32 = arith.constant 0 : i32
    %c0_i32_0 = arith.constant 0 : i32
    %c0_i32_1 = arith.constant 0 : i32
    return %c0_i32, %c0_i32_0 : i32, i32
  }
  func.func @transform_5(%arg0: i32, %arg1: i32) -> (i32, i32) {
    %c0_i32 = arith.constant 0 : i32
    %c0_i32_0 = arith.constant 0 : i32
    %c0_i32_1 = arith.constant 0 : i32
    return %c0_i32, %c0_i32_0 : i32, i32
  }
  func.func @transform_6(%arg0: i32, %arg1: i32) -> (i32, i32) {
    %c0_i32 = arith.constant 0 : i32
    %c0_i32_0 = arith.constant 0 : i32
    %c0_i32_1 = arith.constant 0 : i32
    return %c0_i32, %c0_i32_0 : i32, i32
  }
  func.func @transform_7(%arg0: i32, %arg1: i32) -> (i32, i32) {
    %c0_i32 = arith.constant 0 : i32
    %c0_i32_0 = arith.constant 0 : i32
    %c0_i32_1 = arith.constant 0 : i32
    return %c0_i32, %c0_i32_0 : i32, i32
  }
  func.func @transform_8(%arg0: i32, %arg1: i32) -> (i32, i32) {
    %c0_i32 = arith.constant 0 : i32
    %c0_i32_0 = arith.constant 0 : i32
    %c0_i32_1 = arith.constant 0 : i32
    return %c0_i32, %c0_i32_0 : i32, i32
  }
  func.func @transform_9(%arg0: i32, %arg1: i32) -> (i32, i32) {
    %c0_i32 = arith.constant 0 : i32
    %c0_i32_0 = arith.constant 0 : i32
    return %arg1, %c0_i32 : i32, i32
  }
}

</mosaic_0001>

<llo_original>
// kernel: tpu_custom_call.1
$region0: #{tpu_custom_call.1}
  #allocation0 [shape = 'u32[]', space=smem, size = 0x4, offset = 0x4, fixed_abs, tag = 'smem constant byte address 0x4 - core index']
  #allocation1 [shape = 'u32[72,128]{1,0:T(1,128)}', space=vmem, size = 0x9000, scoped, tag = 'internal scratch']
  #allocation2 [shape = 'f32[2,512]{1,0:T(2,128)}', space=vmem, size = 0x1000, scoped, tag = 'scratch operand']
  #allocation3 [shape = 'f32[2,512]{1,0:T(2,128)}', space=vmem, size = 0x1000, scoped, tag = 'scratch operand']
  #allocation4 [shape = 'f32[2,512]{1,0:T(2,128)}', space=vmem, size = 0x1000, scoped, tag = 'scratch operand']
  #allocation5 [shape = 'f32[2,512]{1,0:T(2,128)}', space=vmem, size = 0x1000, scoped, tag = 'scratch operand']
  #allocation6 [shape = 'f32[1,1]{1,0:T(1,128)S(6)}', space=smem, size = 0x200, scoped, tag = 'scoped memory for tpu_custom_call.1']
  %s0 = inlined_call_operand.hbm [shape: f32[8,256], index: 0, kind: input, shape index: {}]
  %s1 = inlined_call_operand.hbm [shape: bf16[256,512], index: 1, kind: input, shape index: {}]
  %s2 = inlined_call_operand.hbm [shape: f32[1,512], index: 2, kind: input, shape index: {}]
  %s3 = inlined_call_operand.vmem [shape: f32[1,512], index: 3, kind: input, shape index: {}]
  %s4 = inlined_call_operand.hbm [shape: bf16[512,512], index: 4, kind: input, shape index: {}]
  %s5 = inlined_call_operand.hbm [shape: f32[1,512], index: 5, kind: input, shape index: {}]
  %s6 = inlined_call_operand.hbm [shape: f32[1,512], index: 6, kind: input, shape index: {}]
  %s7 = inlined_call_operand.vmem [shape: f32[1,512], index: 7, kind: input, shape index: {}]
  %s8 = inlined_call_operand.<no memory space> [shape: f32[1,1], index: 8, kind: input, shape index: {}]
  %s9 = inlined_call_operand.vmem [shape: f32[8,1], index: 9, kind: output, shape index: {}]
  %s10 = sld [smem:[#allocation0]]
  $region117: #{tpu_custom_call.1} parent=0
    _
  %s12 = ssub.s32 1, %s10
  %s13 = scalar_select 0, %s12, %s10
  %14 = sst [smem:[#allocation6]] %s8
  $region1: #{tpu_custom_call.1} parent=0
    #allocation7 [shape = 'u8[8192]{0}', space=vmem, size = 0x2000, scoped, tag = 'input window, operand 0, single buffered']
    #allocation8 [shape = 's32[2]{0}', space=sflag, size = 0x8, scoped, tag = 'scoped memory for tpu_custom_call.1']
    #allocation9 [shape = 'u8[262144]{0}', space=vmem, size = 0x40000, scoped, tag = 'input window, operand 1, single buffered']
    #allocation10 [shape = 's32[1]{0}', space=sflag, size = 0x4, scoped, tag = 'scoped memory for tpu_custom_call.1']
    #allocation11 [shape = 'u8[2048]{0}', space=vmem, size = 0x800, scoped, tag = 'input window, operand 2, single buffered']
    #allocation12 [shape = 'u8[524288]{0}', space=vmem, size = 0x80000, scoped, tag = 'input window, operand 4, single buffered']
    #allocation13 [shape = 's32[1]{0}', space=sflag, size = 0x4, scoped, tag = 'scoped memory for tpu_custom_call.1']
    #allocation14 [shape = 'u8[2048]{0}', space=vmem, size = 0x800, scoped, tag = 'input window, operand 5, single buffered']
    #allocation15 [shape = 'u8[2048]{0}', space=vmem, size = 0x800, scoped, tag = 'input window, operand 6, single buffered']
    #allocation16 [shape = 's32[1]{0}', space=sflag, size = 0x4, scoped, tag = 'scoped memory for tpu_custom_call.1']
    %15 = vsyncpa [#allocation8], 0
    %16 = vsyncpa [#allocation10], 0
    %17 = vsyncpa [#allocation13], 0
    %18 = vsyncpa [#allocation16], 0
    loop: start=0, step=1, limit=5
    $region2: #{tpu_custom_call.1} parent=1 // loop_pre_header
      _
    $region3: #{tpu_custom_call.1} parent=1 // loop_header
      %s20 = sphi 0, %s24
      %p21 = scmp.ge.s32.totalorder %s20, 5
      %s27 = sphi 0, %s39
      %s28 = sphi 0, %s35
      %s29 = sphi 0, %s27
      %s30 = sphi 0, %s28
      %s31 = sphi 0, %s29
      %s32 = sphi 0, %s30
      %s42 = sphi 0, %s44
      %s45 = sphi 0, %s42
      %s46 = sphi 0, %s45
      %s62 = sphi 0, %s46
      %s66 = sphi 0, %s66
      %s68 = sphi 0, %s66
      %s69 = sphi 0, %s68
      %s83 = sphi 0, %s69
      %s87 = sphi 0, %s87
      %s89 = sphi 0, %s87
      %s90 = sphi 0, %s89
      %s104 = sphi 0, %s90
      %s108 = sphi 0, %s108
      %s110 = sphi 0, %s108
      %s111 = sphi 0, %s110
      %s125 = sphi 0, %s111
      %s129 = sphi 0, %s129
      %s131 = sphi 0, %s129
      %s132 = sphi 0, %s131
      %s146 = sphi 0, %s132
      %s150 = sphi 0, %s150
      %s152 = sphi 0, %s150
      %s153 = sphi 0, %s152
      %s167 = sphi 0, %s153
      %s171 = sphi 0, %s171
      %s173 = sphi 0, %s171
      %s174 = sphi 0, %s173
      %s188 = sphi 0, %s174
      %s192 = sphi 0, %s192
      %s194 = sphi 0, %s192
      %s195 = sphi 0, %s194
      %s209 = sphi 0, %s195
      %s213 = sphi 0, %s213
      %s215 = sphi 0, %s213
      %s216 = sphi 0, %s215
      %s230 = sphi 0, %s216
      %s236 = sphi 0, %s238
      %s239 = sphi 0, %s236
      %s240 = sphi 0, %s239
      %s256 = sphi 0, %s240
    $region4: #{tpu_custom_call.1} parent=1 // loop_header_branch
      %23 = sbr.rel (%p21) target = $region8
    $region5: #{tpu_custom_call.1} parent=1 // loop_body
      %s25 = ssub.s32 %s20, 1
      %s26 = ssub.s32 %s20, 2
      %s33 = sadd.s32 1, %s28
      %p34 = scmp.ge.s32.totalorder %s33, 1
      %s35 = scalar_select %p34, 0, %s33
      %s36 = sadd.s32 1, %s27
      %s37 = scalar_select %p34, %s36, %s27
      %p38 = scmp.ge.s32.totalorder %s37, 3
      %s39 = scalar_select %p38, 0, %s37
      %s40 = ssub.s32 %s28, %s35
      %p41 = scmp.eq.s32.totalorder %s40, 0
      %s43 = sadd.s32 %s42, 1
      %s44 = scalar_select %p41, %s42, %s43
      %p47 = pneg %p41
      %p48 = scmp.eq.s32.totalorder %s20, 2
      %p49 = por %p47, %p48
      %p50 = scmp.ne.s32.totalorder %s42, %s45
      %p51 = scmp.eq.s32.totalorder %s20, 0
      %p52 = por %p50, %p51
      %p53 = scmp.ne.s32.totalorder %s42, %s45
      %p54 = scmp.eq.s32.totalorder %s25, 2
      %p55 = por %p53, %p54
      %p56 = scmp.ne.s32.totalorder %s45, %s46
      %p57 = scmp.eq.s32.totalorder %s25, 0
      %p58 = por %p56, %p57
      %p59 = scmp.ne.s32.totalorder %s45, %s46
      %p60 = scmp.eq.s32.totalorder %s26, 2
      %p61 = por %p59, %p60
      %p63 = scmp.ne.s32.totalorder %s46, %s62
      %p64 = scmp.eq.s32.totalorder %s26, 0
      %p65 = por %p63, %p64
      %s67 = sadd.s32 %s66, 1
      %p70 = scmp.eq.s32.totalorder %s20, 2
      %p71 = scmp.ne.s32.totalorder %s66, %s68
      %p72 = scmp.eq.s32.totalorder %s20, 0
      %p73 = por %p71, %p72
      %p74 = scmp.ne.s32.totalorder %s66, %s68
      %p75 = scmp.eq.s32.totalorder %s25, 2
      %p76 = por %p74, %p75
      %p77 = scmp.ne.s32.totalorder %s68, %s69
      %p78 = scmp.eq.s32.totalorder %s25, 0
      %p79 = por %p77, %p78
      %p80 = scmp.ne.s32.totalorder %s68, %s69
      %p81 = scmp.eq.s32.totalorder %s26, 2
      %p82 = por %p80, %p81
      %p84 = scmp.ne.s32.totalorder %s69, %s83
      %p85 = scmp.eq.s32.totalorder %s26, 0
      %p86 = por %p84, %p85
      %s88 = sadd.s32 %s87, 1
      %p91 = scmp.eq.s32.totalorder %s20, 2
      %p92 = scmp.ne.s32.totalorder %s87, %s89
      %p93 = scmp.eq.s32.totalorder %s20, 0
      %p94 = por %p92, %p93
      %p95 = scmp.ne.s32.totalorder %s87, %s89
      %p96 = scmp.eq.s32.totalorder %s25, 2
      %p97 = por %p95, %p96
      %p98 = scmp.ne.s32.totalorder %s89, %s90
      %p99 = scmp.eq.s32.totalorder %s25, 0
      %p100 = por %p98, %p99
      %p101 = scmp.ne.s32.totalorder %s89, %s90
      %p102 = scmp.eq.s32.totalorder %s26, 2
      %p103 = por %p101, %p102
      %p105 = scmp.ne.s32.totalorder %s90, %s104
      %p106 = scmp.eq.s32.totalorder %s26, 0
      %p107 = por %p105, %p106
      %s109 = sadd.s32 %s108, 1
      %p112 = scmp.eq.s32.totalorder %s20, 2
      %p113 = scmp.ne.s32.totalorder %s108, %s110
      %p114 = scmp.eq.s32.totalorder %s20, 0
      %p115 = por %p113, %p114
      %p116 = scmp.ne.s32.totalorder %s108, %s110
      %p117 = scmp.eq.s32.totalorder %s25, 2
      %p118 = por %p116, %p117
      %p119 = scmp.ne.s32.totalorder %s110, %s111
      %p120 = scmp.eq.s32.totalorder %s25, 0
      %p121 = por %p119, %p120
      %p122 = scmp.ne.s32.totalorder %s110, %s111
      %p123 = scmp.eq.s32.totalorder %s26, 2
      %p124 = por %p122, %p123
      %p126 = scmp.ne.s32.totalorder %s111, %s125
      %p127 = scmp.eq.s32.totalorder %s26, 0
      %p128 = por %p126, %p127
      %s130 = sadd.s32 %s129, 1
      %p133 = scmp.eq.s32.totalorder %s20, 2
      %p134 = scmp.ne.s32.totalorder %s129, %s131
      %p135 = scmp.eq.s32.totalorder %s20, 0
      %p136 = por %p134, %p135
      %p137 = scmp.ne.s32.totalorder %s129, %s131
      %p138 = scmp.eq.s32.totalorder %s25, 2
      %p139 = por %p137, %p138
      %p140 = scmp.ne.s32.totalorder %s131, %s132
      %p141 = scmp.eq.s32.totalorder %s25, 0
      %p142 = por %p140, %p141
      %p143 = scmp.ne.s32.totalorder %s131, %s132
      %p144 = scmp.eq.s32.totalorder %s26, 2
      %p145 = por %p143, %p144
      %p147 = scmp.ne.s32.totalorder %s132, %s146
      %p148 = scmp.eq.s32.totalorder %s26, 0
      %p149 = por %p147, %p148
      %s151 = sadd.s32 %s150, 1
      %p154 = scmp.eq.s32.totalorder %s20, 2
      %p155 = scmp.ne.s32.totalorder %s150, %s152
      %p156 = scmp.eq.s32.totalorder %s20, 0
      %p157 = por %p155, %p156
      %p158 = scmp.ne.s32.totalorder %s150, %s152
      %p159 = scmp.eq.s32.totalorder %s25, 2
      %p160 = por %p158, %p159
      %p161 = scmp.ne.s32.totalorder %s152, %s153
      %p162 = scmp.eq.s32.totalorder %s25, 0
      %p163 = por %p161, %p162
      %p164 = scmp.ne.s32.totalorder %s152, %s153
      %p165 = scmp.eq.s32.totalorder %s26, 2
      %p166 = por %p164, %p165
      %p168 = scmp.ne.s32.totalorder %s153, %s167
      %p169 = scmp.eq.s32.totalorder %s26, 0
      %p170 = por %p168, %p169
      %s172 = sadd.s32 %s171, 1
      %p175 = scmp.eq.s32.totalorder %s20, 2
      %p176 = scmp.ne.s32.totalorder %s171, %s173
      %p177 = scmp.eq.s32.totalorder %s20, 0
      %p178 = por %p176, %p177
      %p179 = scmp.ne.s32.totalorder %s171, %s173
      %p180 = scmp.eq.s32.totalorder %s25, 2
      %p181 = por %p179, %p180
      %p182 = scmp.ne.s32.totalorder %s173, %s174
      %p183 = scmp.eq.s32.totalorder %s25, 0
      %p184 = por %p182, %p183
      %p185 = scmp.ne.s32.totalorder %s173, %s174
      %p186 = scmp.eq.s32.totalorder %s26, 2
      %p187 = por %p185, %p186
      %p189 = scmp.ne.s32.totalorder %s174, %s188
      %p190 = scmp.eq.s32.totalorder %s26, 0
      %p191 = por %p189, %p190
      %s193 = sadd.s32 %s192, 1
      %p196 = scmp.eq.s32.totalorder %s20, 2
      %p197 = scmp.ne.s32.totalorder %s192, %s194
      %p198 = scmp.eq.s32.totalorder %s20, 0
      %p199 = por %p197, %p198
      %p200 = scmp.ne.s32.totalorder %s192, %s194
      %p201 = scmp.eq.s32.totalorder %s25, 2
      %p202 = por %p200, %p201
      %p203 = scmp.ne.s32.totalorder %s194, %s195
      %p204 = scmp.eq.s32.totalorder %s25, 0
      %p205 = por %p203, %p204
      %p206 = scmp.ne.s32.totalorder %s194, %s195
      %p207 = scmp.eq.s32.totalorder %s26, 2
      %p208 = por %p206, %p207
      %p210 = scmp.ne.s32.totalorder %s195, %s209
      %p211 = scmp.eq.s32.totalorder %s26, 0
      %p212 = por %p210, %p211
      %s214 = sadd.s32 %s213, 1
      %p217 = scmp.eq.s32.totalorder %s20, 2
      %p218 = scmp.ne.s32.totalorder %s213, %s215
      %p219 = scmp.eq.s32.totalorder %s20, 0
      %p220 = por %p218, %p219
      %p221 = scmp.ne.s32.totalorder %s213, %s215
      %p222 = scmp.eq.s32.totalorder %s25, 2
      %p223 = por %p221, %p222
      %p224 = scmp.ne.s32.totalorder %s215, %s216
      %p225 = scmp.eq.s32.totalorder %s25, 0
      %p226 = por %p224, %p225
      %p227 = scmp.ne.s32.totalorder %s215, %s216
      %p228 = scmp.eq.s32.totalorder %s26, 2
      %p229 = por %p227, %p228
      %p231 = scmp.ne.s32.totalorder %s216, %s230
      %p232 = scmp.eq.s32.totalorder %s26, 0
      %p233 = por %p231, %p232
      %s234 = ssub.s32 %s28, %s35
      %p235 = scmp.eq.s32.totalorder %s234, 0
      %s237 = sadd.s32 %s236, 1
      %s238 = scalar_select %p235, %s236, %s237
      %p241 = pneg %p235
      %p242 = scmp.eq.s32.totalorder %s20, 2
      %p243 = por %p241, %p242
      %p244 = scmp.ne.s32.totalorder %s236, %s239
      %p245 = scmp.eq.s32.totalorder %s20, 0
      %p246 = por %p244, %p245
      %p247 = scmp.ne.s32.totalorder %s236, %s239
      %p248 = scmp.eq.s32.totalorder %s25, 2
      %p249 = por %p247, %p248
      %p250 = scmp.ne.s32.totalorder %s239, %s240
      %p251 = scmp.eq.s32.totalorder %s25, 0
      %p252 = por %p250, %p251
      %p253 = scmp.ne.s32.totalorder %s239, %s240
      %p254 = scmp.eq.s32.totalorder %s26, 2
      %p255 = por %p253, %p254
      %p257 = scmp.ne.s32.totalorder %s240, %s256
      %p258 = scmp.eq.s32.totalorder %s26, 0
      %p259 = por %p257, %p258
      %p260 = scmp.le.s32.totalorder 1, %s20
      %p261 = scmp.lt.s32.totalorder %s20, 4
      %p262 = pnand %p260, %p261
      %p263 = pneg %p262
      // Predicated region
      $region9: #{tpu_custom_call.1} parent=5 // pred_check
        _
      $region10: #{tpu_custom_call.1} parent=5 // pred_check_branch
        %265 = sbr.rel (%p262) target = $region12
      $region11: #{tpu_custom_call.1} parent=5 // pred_region
        %s266 = ssub.s32 %s20, 1
        // Predicated region
        $region13: #{tpu_custom_call.1} parent=11 // pred_check
          %p267 = pneg %p58
        $region14: #{tpu_custom_call.1} parent=11 // pred_check_branch
          %269 = sbr.rel (%p267) target = $region16
        $region15: #{tpu_custom_call.1} parent=11 // pred_region
          %271 = vsyncadd [#allocation8], 0
          %s272 = smul.addr %s30, 2
          %s273 = smul.addr %s272, 8
          %s274 = scalar_lea.hbm %s0, %s273
          %s276 = sshll.u32 %s274, 4
          %s277 = int_to_ptr.hbm [resolvable:$true] %s276
          %s278 = sshll.u32 [#allocation7], 4
          %s279 = int_to_ptr.vmem [resolvable:$true] %s278
          %281 = dma.hbm_to_vmem [thread:$0]  %s277, 256, %s279, [#allocation8]
        $region16: #{tpu_custom_call.1} parent=11 // pred_fallthru
          _
        // Predicated region
        $region17: #{tpu_custom_call.1} parent=11 // pred_check
          %p282 = pneg %p79
        $region18: #{tpu_custom_call.1} parent=11 // pred_check_branch
          %284 = sbr.rel (%p282) target = $region20
        $region19: #{tpu_custom_call.1} parent=11 // pred_region
          %286 = vsyncadd [#allocation10], 0
          %s287 = sshll.u32 %s1, 4
          %s288 = int_to_ptr.hbm [resolvable:$true] %s287
          %s289 = sshll.u32 [#allocation9], 4
          %s290 = int_to_ptr.vmem [resolvable:$true] %s289
          %295 = dma.hbm_to_vmem [thread:$0]  %s288, 8192, %s290, [#allocation10], 256, 256, 16
        $region20: #{tpu_custom_call.1} parent=11 // pred_fallthru
          _
        // Predicated region
        $region21: #{tpu_custom_call.1} parent=11 // pred_check
          %p296 = pneg %p100
        $region22: #{tpu_custom_call.1} parent=11 // pred_check_branch
          %298 = sbr.rel (%p296) target = $region24
        $region23: #{tpu_custom_call.1} parent=11 // pred_region
          %300 = vsyncadd [#allocation10], 0
          %s302 = sshll.u32 %s2, 4
          %s303 = int_to_ptr.hbm [resolvable:$true] %s302
          %s304 = sshll.u32 [#allocation11], 4
          %s305 = int_to_ptr.vmem [resolvable:$true] %s304
          %307 = dma.hbm_to_vmem [thread:$0]  %s303, 64, %s305, [#allocation10]
        $region24: #{tpu_custom_call.1} parent=11 // pred_fallthru
          _
        // Predicated region
        $region25: #{tpu_custom_call.1} parent=11 // pred_check
          %p308 = pneg %p121
        $region26: #{tpu_custom_call.1} parent=11 // pred_check_branch
          %310 = sbr.rel (%p308) target = $region28
        $region27: #{tpu_custom_call.1} parent=11 // pred_region
          _
        $region28: #{tpu_custom_call.1} parent=11 // pred_fallthru
          _
        // Predicated region
        $region29: #{tpu_custom_call.1} parent=11 // pred_check
          %p311 = pneg %p142
        $region30: #{tpu_custom_call.1} parent=11 // pred_check_branch
          %313 = sbr.rel (%p311) target = $region32
        $region31: #{tpu_custom_call.1} parent=11 // pred_region
          %315 = vsyncadd [#allocation13], 0
          %s316 = sshll.u32 %s4, 4
          %s317 = int_to_ptr.hbm [resolvable:$true] %s316
          %s318 = sshll.u32 [#allocation12], 4
          %s319 = int_to_ptr.vmem [resolvable:$true] %s318
          %324 = dma.hbm_to_vmem [thread:$0]  %s317, 16384, %s319, [#allocation13], 256, 256, 16
        $region32: #{tpu_custom_call.1} parent=11 // pred_fallthru
          _
        // Predicated region
        $region33: #{tpu_custom_call.1} parent=11 // pred_check
          %p325 = pneg %p163
        $region34: #{tpu_custom_call.1} parent=11 // pred_check_branch
          %327 = sbr.rel (%p325) target = $region36
        $region35: #{tpu_custom_call.1} parent=11 // pred_region
          %329 = vsyncadd [#allocation13], 0
          %s331 = sshll.u32 %s5, 4
          %s332 = int_to_ptr.hbm [resolvable:$true] %s331
          %s333 = sshll.u32 [#allocation14], 4
          %s334 = int_to_ptr.vmem [resolvable:$true] %s333
          %336 = dma.hbm_to_vmem [thread:$0]  %s332, 64, %s334, [#allocation13]
        $region36: #{tpu_custom_call.1} parent=11 // pred_fallthru
          _
        // Predicated region
        $region37: #{tpu_custom_call.1} parent=11 // pred_check
          %p337 = pneg %p184
        $region38: #{tpu_custom_call.1} parent=11 // pred_check_branch
          %339 = sbr.rel (%p337) target = $region40
        $region39: #{tpu_custom_call.1} parent=11 // pred_region
          %341 = vsyncadd [#allocation16], 0
          %s343 = sshll.u32 %s6, 4
          %s344 = int_to_ptr.hbm [resolvable:$true] %s343
          %s345 = sshll.u32 [#allocation15], 4
          %s346 = int_to_ptr.vmem [resolvable:$true] %s345
          %348 = dma.hbm_to_vmem [thread:$0]  %s344, 64, %s346, [#allocation16]
        $region40: #{tpu_custom_call.1} parent=11 // pred_fallthru
          _
        // Predicated region
        $region41: #{tpu_custom_call.1} parent=11 // pred_check
          %p349 = pneg %p205
        $region42: #{tpu_custom_call.1} parent=11 // pred_check_branch
          %351 = sbr.rel (%p349) target = $region44
        $region43: #{tpu_custom_call.1} parent=11 // pred_region
          _
        $region44: #{tpu_custom_call.1} parent=11 // pred_fallthru
          _
        // Predicated region
        $region45: #{tpu_custom_call.1} parent=11 // pred_check
          %p352 = pneg %p226
        $region46: #{tpu_custom_call.1} parent=11 // pred_check_branch
          %354 = sbr.rel (%p352) target = $region48
        $region47: #{tpu_custom_call.1} parent=11 // pred_region
          _
        $region48: #{tpu_custom_call.1} parent=11 // pred_fallthru
          _
      $region12: #{tpu_custom_call.1} parent=5 // pred_fallthru
        _
      %p355 = scmp.lt.s32.totalorder %s20, 3
      // Predicated region
      $region49: #{tpu_custom_call.1} parent=5 // pred_check
        %p356 = pneg %p355
      $region50: #{tpu_custom_call.1} parent=5 // pred_check_branch
        %358 = sbr.rel (%p356) target = $region52
      $region51: #{tpu_custom_call.1} parent=5 // pred_region
        _
      $region52: #{tpu_custom_call.1} parent=5 // pred_fallthru
        _
      %p359 = scmp.le.s32.totalorder 1, %s20
      %p360 = scmp.lt.s32.totalorder %s20, 4
      %p361 = pnand %p359, %p360
      %p362 = pneg %p361
      // Predicated region
      $region53: #{tpu_custom_call.1} parent=5 // pred_check
        _
      $region54: #{tpu_custom_call.1} parent=5 // pred_check_branch
        %364 = sbr.rel (%p361) target = $region56
      $region55: #{tpu_custom_call.1} parent=5 // pred_region
        %s365 = ssub.s32 %s20, 1
        // Predicated region
        $region57: #{tpu_custom_call.1} parent=55 // pred_check
          %p366 = pneg %p58
        $region58: #{tpu_custom_call.1} parent=55 // pred_check_branch
          %368 = sbr.rel (%p366) target = $region60
        $region59: #{tpu_custom_call.1} parent=55 // pred_region
          %370 = dma.done [#allocation8], 256
        $region60: #{tpu_custom_call.1} parent=55 // pred_fallthru
          _
        // Predicated region
        $region61: #{tpu_custom_call.1} parent=55 // pred_check
          %p371 = pneg %p79
        $region62: #{tpu_custom_call.1} parent=55 // pred_check_branch
          %373 = sbr.rel (%p371) target = $region64
        $region63: #{tpu_custom_call.1} parent=55 // pred_region
          %375 = dma.done [#allocation10], 8192
        $region64: #{tpu_custom_call.1} parent=55 // pred_fallthru
          _
        // Predicated region
        $region65: #{tpu_custom_call.1} parent=55 // pred_check
          %p376 = pneg %p100
        $region66: #{tpu_custom_call.1} parent=55 // pred_check_branch
          %378 = sbr.rel (%p376) target = $region68
        $region67: #{tpu_custom_call.1} parent=55 // pred_region
          %380 = dma.done [#allocation10], 64
        $region68: #{tpu_custom_call.1} parent=55 // pred_fallthru
          _
        // Predicated region
        $region69: #{tpu_custom_call.1} parent=55 // pred_check
          %p381 = pneg %p142
        $region70: #{tpu_custom_call.1} parent=55 // pred_check_branch
          %383 = sbr.rel (%p381) target = $region72
        $region71: #{tpu_custom_call.1} parent=55 // pred_region
          %385 = dma.done [#allocation13], 16384
        $region72: #{tpu_custom_call.1} parent=55 // pred_fallthru
          _
        // Predicated region
        $region73: #{tpu_custom_call.1} parent=55 // pred_check
          %p386 = pneg %p163
        $region74: #{tpu_custom_call.1} parent=55 // pred_check_branch
          %388 = sbr.rel (%p386) target = $region76
        $region75: #{tpu_custom_call.1} parent=55 // pred_region
          %390 = dma.done [#allocation13], 64
        $region76: #{tpu_custom_call.1} parent=55 // pred_fallthru
          _
        // Predicated region
        $region77: #{tpu_custom_call.1} parent=55 // pred_check
          %p391 = pneg %p184
        $region78: #{tpu_custom_call.1} parent=55 // pred_check_branch
          %393 = sbr.rel (%p391) target = $region80
        $region79: #{tpu_custom_call.1} parent=55 // pred_region
          %395 = dma.done [#allocation16], 64
        $region80: #{tpu_custom_call.1} parent=55 // pred_fallthru
          _
        %p396 = pneg %p58
        %p397 = pneg %p55
        %p398 = pneg %p79
        %p399 = pneg %p76
        %p400 = pneg %p100
        %p401 = pneg %p97
        %p402 = pneg %p121
        %p403 = pneg %p118
        %p404 = pneg %p142
        %p405 = pneg %p139
        %p406 = pneg %p163
        %p407 = pneg %p160
        %p408 = pneg %p184
        %p409 = pneg %p181
        %p410 = pneg %p205
        %p411 = pneg %p202
        %p412 = pneg %p226
        %p413 = pneg %p223
        %p414 = pneg %p252
        %p415 = pneg %p249
        %p416 = scmp.lt.s32.totalorder %s30, 0
        %s417 = scalar_select %p416, %s30, 0
        %s418 = smul.addr %s417, 8
        %s419 = scalar_lea.vmem %s9, %s418
        %p420 = scmp.lt.s32.totalorder %s30, 0
        %s421 = scalar_select %p420, %s30, 0
        %s422 = smul.addr %s421, 8
        %s423 = scalar_lea.vmem %s9, %s422
        %p424 = scmp.eq.s32.totalorder %s29, 0
        %p425 = scmp.eq.s32.totalorder %s30, 0
        %p426 = pnand %p424, %p425
        %p427 = pneg %p426
        // Predicated region
        $region81: #{tpu_custom_call.1} parent=55 // pred_check
          _
        $region82: #{tpu_custom_call.1} parent=55 // pred_check_branch
          %429 = sbr.rel (%p426) target = $region84
        $region83: #{tpu_custom_call.1} parent=55 // pred_region
          %430 = vst [vmem:[#allocation2] sm:$0xff] 0.0
        $region84: #{tpu_custom_call.1} parent=55 // pred_fallthru
          _
        %p431 = scmp.eq.s32.totalorder %s29, 1
        %p432 = pnand %p431, %p425
        %p433 = pneg %p432
        // Predicated region
        $region85: #{tpu_custom_call.1} parent=55 // pred_check
          _
        $region86: #{tpu_custom_call.1} parent=55 // pred_check_branch
          %435 = sbr.rel (%p432) target = $region88
        $region87: #{tpu_custom_call.1} parent=55 // pred_region
          %v436 = vld [vmem:[#allocation2] ss:$2 sm:$0xf]
          %v437 = vmul.f32 %v436, 0.125
          %s438 = scalar_lea.vmem [#allocation2], 1
          %v439 = vld [vmem:[%s438] ss:$2 sm:$0xf]
          %v440 = vmul.f32 %v439, 0.125
          %v441 = vmul.f32 %v437, %v437
          %v442 = vsub.f32 %v440, %v441
          %v443 = vmax.f32 %v442, 0.0
          %v444 = vld [vmem:[#allocation11] sm:$0xf]
          %v445 = vadd.f32 %v443, 1e-05
          %v446 = vrsqrt.pop %v445
          %v447 = vmul.f32 %v446, %v445
          %v448 = vmul.f32 %v447, %v446
          %v449 = vmul.f32 0.5, %v448
          %v450 = vsub.f32 1.5, %v449
          %v451 = vmul.f32 %v446, %v450
          %vm452 = vweird.f32 %v445
          %vm453 = vweird.f32 %v446
          %vm454 = vmor %vm452, %vm453
          %v455 = vsel %vm454, %v446, %v451
          %v456 = vmul.f32 %v444, %v455
          %v457 = vlaneseq
          %vm458 = vcmp.ge.s32.totalorder %v457, 0
          %vm459 = vcmp.lt.s32.totalorder %v457, 512
          %vm460 = vmand %vm458, %vm459
          %461 = vst.msk [vmem:[#allocation4] ss:$2 sm:$0xf] %vm460, %v456
          %v462 = vld [vmem:[%s3] sm:$0xf]
          %v463 = vmul.f32 %v437, %v456
          %v464 = vsub.f32 %v462, %v463
          %s465 = scalar_lea.vmem [#allocation4], 1
          %466 = vst.msk [vmem:[%s465] ss:$2 sm:$0xf] %vm460, %v464
          %467 = vst [vmem:[#allocation3] sm:$0xff] 0.0
        $region88: #{tpu_custom_call.1} parent=55 // pred_fallthru
          _
        %p468 = scmp.eq.s32.totalorder %s29, 2
        %p469 = pnand %p468, %p425
        %p470 = pneg %p469
        // Predicated region
        $region89: #{tpu_custom_call.1} parent=55 // pred_check
          _
        $region90: #{tpu_custom_call.1} parent=55 // pred_check_branch
          %472 = sbr.rel (%p469) target = $region92
        $region91: #{tpu_custom_call.1} parent=55 // pred_region
          %v473 = vld [vmem:[#allocation3] ss:$2 sm:$0xf]
          %v474 = vmul.f32 %v473, 0.125
          %s475 = scalar_lea.vmem [#allocation3], 1
          %v476 = vld [vmem:[%s475] ss:$2 sm:$0xf]
          %v477 = vmul.f32 %v476, 0.125
          %v478 = vmul.f32 %v474, %v474
          %v479 = vsub.f32 %v477, %v478
          %v480 = vmax.f32 %v479, 0.0
          %v481 = vld [vmem:[#allocation14] sm:$0xf]
          %v482 = vadd.f32 %v480, 1e-05
          %v483 = vrsqrt.pop %v482
          %v484 = vmul.f32 %v483, %v482
          %v485 = vmul.f32 %v484, %v483
          %v486 = vmul.f32 0.5, %v485
          %v487 = vsub.f32 1.5, %v486
          %v488 = vmul.f32 %v483, %v487
          %vm489 = vweird.f32 %v482
          %vm490 = vweird.f32 %v483
          %vm491 = vmor %vm489, %vm490
          %v492 = vsel %vm491, %v483, %v488
          %v493 = vmul.f32 %v481, %v492
          %v494 = vlaneseq
          %vm495 = vcmp.ge.s32.totalorder %v494, 0
          %vm496 = vcmp.lt.s32.totalorder %v494, 512
          %vm497 = vmand %vm495, %vm496
          %498 = vst.msk [vmem:[#allocation5] ss:$2 sm:$0xf] %vm497, %v493
          %v499 = vld [vmem:[#allocation15] sm:$0xf]
          %v500 = vmul.f32 %v474, %v493
          %v501 = vsub.f32 %v499, %v500
          %s502 = scalar_lea.vmem [#allocation5], 1
          %503 = vst.msk [vmem:[%s502] ss:$2 sm:$0xf] %vm497, %v501
        $region92: #{tpu_custom_call.1} parent=55 // pred_fallthru
          _
        %v504 = vld [vmem:[#allocation7] sm:$0xff]
        %v505 = vld [vmem:[#allocation7 + $0x8] sm:$0xff]
        %v506 = vpack.c.bf16 %v504, %v504
        %v507 = vpack.c.bf16 %v505, %v505
        %v508 = vld [vmem:[#allocation9] sm:$0xff]
        %v509 = vld [vmem:[#allocation9 + $0x8] sm:$0xff]
        %v510 = vld [vmem:[#allocation9 + $0x10] sm:$0xff]
        %v511 = vld [vmem:[#allocation9 + $0x18] sm:$0xff]
        %v512 = vld [vmem:[#allocation9 + $0x20] sm:$0xff]
        %v513 = vld [vmem:[#allocation9 + $0x28] sm:$0xff]
        %v514 = vld [vmem:[#allocation9 + $0x30] sm:$0xff]
        %v515 = vld [vmem:[#allocation9 + $0x38] sm:$0xff]
        %v516 = vld [vmem:[#allocation9 + $0x40] sm:$0xff]
        %v517 = vld [vmem:[#allocation9 + $0x48] sm:$0xff]
        %v518 = vld [vmem:[#allocation9 + $0x50] sm:$0xff]
        %v519 = vld [vmem:[#allocation9 + $0x58] sm:$0xff]
        %v520 = vld [vmem:[#allocation9 + $0x60] sm:$0xff]
        %v521 = vld [vmem:[#allocation9 + $0x68] sm:$0xff]
        %v522 = vld [vmem:[#allocation9 + $0x70] sm:$0xff]
        %v523 = vld [vmem:[#allocation9 + $0x78] sm:$0xff]
        %v524 = vld [vmem:[#allocation9 + $0x80] sm:$0xff]
        %v525 = vld [vmem:[#allocation9 + $0x88] sm:$0xff]
        %v526 = vld [vmem:[#allocation9 + $0x90] sm:$0xff]
        %v527 = vld [vmem:[#allocation9 + $0x98] sm:$0xff]
        %v528 = vld [vmem:[#allocation9 + $0xa0] sm:$0xff]
        %v529 = vld [vmem:[#allocation9 + $0xa8] sm:$0xff]
        %v530 = vld [vmem:[#allocation9 + $0xb0] sm:$0xff]
        %v531 = vld [vmem:[#allocation9 + $0xb8] sm:$0xff]
        %v532 = vld [vmem:[#allocation9 + $0xc0] sm:$0xff]
        %v533 = vld [vmem:[#allocation9 + $0xc8] sm:$0xff]
        %v534 = vld [vmem:[#allocation9 + $0xd0] sm:$0xff]
        %v535 = vld [vmem:[#allocation9 + $0xd8] sm:$0xff]
        %v536 = vld [vmem:[#allocation9 + $0xe0] sm:$0xff]
        %v537 = vld [vmem:[#allocation9 + $0xe8] sm:$0xff]
        %v538 = vld [vmem:[#allocation9 + $0xf0] sm:$0xff]
        %v539 = vld [vmem:[#allocation9 + $0xf8] sm:$0xff]
        %v540 = vld [vmem:[#allocation9 + $0x100] sm:$0xff]
        %v541 = vld [vmem:[#allocation9 + $0x108] sm:$0xff]
        %v542 = vld [vmem:[#allocation9 + $0x110] sm:$0xff]
        %v543 = vld [vmem:[#allocation9 + $0x118] sm:$0xff]
        %v544 = vld [vmem:[#allocation9 + $0x120] sm:$0xff]
        %v545 = vld [vmem:[#allocation9 + $0x128] sm:$0xff]
        %v546 = vld [vmem:[#allocation9 + $0x130] sm:$0xff]
        %v547 = vld [vmem:[#allocation9 + $0x138] sm:$0xff]
        %v548 = vld [vmem:[#allocation9 + $0x140] sm:$0xff]
        %v549 = vld [vmem:[#allocation9 + $0x148] sm:$0xff]
        %v550 = vld [vmem:[#allocation9 + $0x150] sm:$0xff]
        %v551 = vld [vmem:[#allocation9 + $0x158] sm:$0xff]
        %v552 = vld [vmem:[#allocation9 + $0x160] sm:$0xff]
        %v553 = vld [vmem:[#allocation9 + $0x168] sm:$0xff]
        %v554 = vld [vmem:[#allocation9 + $0x170] sm:$0xff]
        %v555 = vld [vmem:[#allocation9 + $0x178] sm:$0xff]
        %v556 = vld [vmem:[#allocation9 + $0x180] sm:$0xff]
        %v557 = vld [vmem:[#allocation9 + $0x188] sm:$0xff]
        %v558 = vld [vmem:[#allocation9 + $0x190] sm:$0xff]
        %v559 = vld [vmem:[#allocation9 + $0x198] sm:$0xff]
        %v560 = vld [vmem:[#allocation9 + $0x1a0] sm:$0xff]
        %v561 = vld [vmem:[#allocation9 + $0x1a8] sm:$0xff]
        %v562 = vld [vmem:[#allocation9 + $0x1b0] sm:$0xff]
        %v563 = vld [vmem:[#allocation9 + $0x1b8] sm:$0xff]
        %v564 = vld [vmem:[#allocation9 + $0x1c0] sm:$0xff]
        %v565 = vld [vmem:[#allocation9 + $0x1c8] sm:$0xff]
        %v566 = vld [vmem:[#allocation9 + $0x1d0] sm:$0xff]
        %v567 = vld [vmem:[#allocation9 + $0x1d8] sm:$0xff]
        %v568 = vld [vmem:[#allocation9 + $0x1e0] sm:$0xff]
        %v569 = vld [vmem:[#allocation9 + $0x1e8] sm:$0xff]
        %v570 = vld [vmem:[#allocation9 + $0x1f0] sm:$0xff]
        %v571 = vld [vmem:[#allocation9 + $0x1f8] sm:$0xff]
        %v636 = vunpack.c.l.b16 %v508
        %v637 = vunpack.c.h.b16 %v508
        %v638 = vunpack.c.l.b16 %v509
        %v639 = vunpack.c.h.b16 %v509
        %v640 = vunpack.c.l.b16 %v510
        %v641 = vunpack.c.h.b16 %v510
        %v642 = vunpack.c.l.b16 %v511
        %v643 = vunpack.c.h.b16 %v511
        %v644 = vunpack.c.l.b16 %v512
        %v645 = vunpack.c.h.b16 %v512
        %v646 = vunpack.c.l.b16 %v513
        %v647 = vunpack.c.h.b16 %v513
        %v648 = vunpack.c.l.b16 %v514
        %v649 = vunpack.c.h.b16 %v514
        %v650 = vunpack.c.l.b16 %v515
        %v651 = vunpack.c.h.b16 %v515
        %v652 = vunpack.c.l.b16 %v516
        %v653 = vunpack.c.h.b16 %v516
        %v654 = vunpack.c.l.b16 %v517
        %v655 = vunpack.c.h.b16 %v517
        %v656 = vunpack.c.l.b16 %v518
        %v657 = vunpack.c.h.b16 %v518
        %v658 = vunpack.c.l.b16 %v519
        %v659 = vunpack.c.h.b16 %v519
        %v660 = vunpack.c.l.b16 %v520
        %v661 = vunpack.c.h.b16 %v520
        %v662 = vunpack.c.l.b16 %v521
        %v663 = vunpack.c.h.b16 %v521
        %v664 = vunpack.c.l.b16 %v522
        %v665 = vunpack.c.h.b16 %v522
        %v666 = vunpack.c.l.b16 %v523
        %v667 = vunpack.c.h.b16 %v523
        %v668 = vunpack.c.l.b16 %v524
        %v669 = vunpack.c.h.b16 %v524
        %v670 = vunpack.c.l.b16 %v525
        %v671 = vunpack.c.h.b16 %v525
        %v672 = vunpack.c.l.b16 %v526
        %v673 = vunpack.c.h.b16 %v526
        %v674 = vunpack.c.l.b16 %v527
        %v675 = vunpack.c.h.b16 %v527
        %v676 = vunpack.c.l.b16 %v528
        %v677 = vunpack.c.h.b16 %v528
        %v678 = vunpack.c.l.b16 %v529
        %v679 = vunpack.c.h.b16 %v529
        %v680 = vunpack.c.l.b16 %v530
        %v681 = vunpack.c.h.b16 %v530
        %v682 = vunpack.c.l.b16 %v531
        %v683 = vunpack.c.h.b16 %v531
        %v684 = vunpack.c.l.b16 %v532
        %v685 = vunpack.c.h.b16 %v532
        %v686 = vunpack.c.l.b16 %v533
        %v687 = vunpack.c.h.b16 %v533
        %v688 = vunpack.c.l.b16 %v534
        %v689 = vunpack.c.h.b16 %v534
        %v690 = vunpack.c.l.b16 %v535
        %v691 = vunpack.c.h.b16 %v535
        %v692 = vunpack.c.l.b16 %v536
        %v693 = vunpack.c.h.b16 %v536
        %v694 = vunpack.c.l.b16 %v537
        %v695 = vunpack.c.h.b16 %v537
        %v696 = vunpack.c.l.b16 %v538
        %v697 = vunpack.c.h.b16 %v538
        %v698 = vunpack.c.l.b16 %v539
        %v699 = vunpack.c.h.b16 %v539
        %v700 = vunpack.c.l.b16 %v540
        %v701 = vunpack.c.h.b16 %v540
        %v702 = vunpack.c.l.b16 %v541
        %v703 = vunpack.c.h.b16 %v541
        %v704 = vunpack.c.l.b16 %v542
        %v705 = vunpack.c.h.b16 %v542
        %v706 = vunpack.c.l.b16 %v543
        %v707 = vunpack.c.h.b16 %v543
        %v708 = vunpack.c.l.b16 %v544
        %v709 = vunpack.c.h.b16 %v544
        %v710 = vunpack.c.l.b16 %v545
        %v711 = vunpack.c.h.b16 %v545
        %v712 = vunpack.c.l.b16 %v546
        %v713 = vunpack.c.h.b16 %v546
        %v714 = vunpack.c.l.b16 %v547
        %v715 = vunpack.c.h.b16 %v547
        %v716 = vunpack.c.l.b16 %v548
        %v717 = vunpack.c.h.b16 %v548
        %v718 = vunpack.c.l.b16 %v549
        %v719 = vunpack.c.h.b16 %v549
        %v720 = vunpack.c.l.b16 %v550
        %v721 = vunpack.c.h.b16 %v550
        %v722 = vunpack.c.l.b16 %v551
        %v723 = vunpack.c.h.b16 %v551
        %v724 = vunpack.c.l.b16 %v552
        %v725 = vunpack.c.h.b16 %v552
        %v726 = vunpack.c.l.b16 %v553
        %v727 = vunpack.c.h.b16 %v553
        %v728 = vunpack.c.l.b16 %v554
        %v729 = vunpack.c.h.b16 %v554
        %v730 = vunpack.c.l.b16 %v555
        %v731 = vunpack.c.h.b16 %v555
        %v732 = vunpack.c.l.b16 %v556
        %v733 = vunpack.c.h.b16 %v556
        %v734 = vunpack.c.l.b16 %v557
        %v735 = vunpack.c.h.b16 %v557
        %v736 = vunpack.c.l.b16 %v558
        %v737 = vunpack.c.h.b16 %v558
        %v738 = vunpack.c.l.b16 %v559
        %v739 = vunpack.c.h.b16 %v559
        %v740 = vunpack.c.l.b16 %v560
        %v741 = vunpack.c.h.b16 %v560
        %v742 = vunpack.c.l.b16 %v561
        %v743 = vunpack.c.h.b16 %v561
        %v744 = vunpack.c.l.b16 %v562
        %v745 = vunpack.c.h.b16 %v562
        %v746 = vunpack.c.l.b16 %v563
        %v747 = vunpack.c.h.b16 %v563
        %v748 = vunpack.c.l.b16 %v564
        %v749 = vunpack.c.h.b16 %v564
        %v750 = vunpack.c.l.b16 %v565
        %v751 = vunpack.c.h.b16 %v565
        %v752 = vunpack.c.l.b16 %v566
        %v753 = vunpack.c.h.b16 %v566
        %v754 = vunpack.c.l.b16 %v567
        %v755 = vunpack.c.h.b16 %v567
        %v756 = vunpack.c.l.b16 %v568
        %v757 = vunpack.c.h.b16 %v568
        %v758 = vunpack.c.l.b16 %v569
        %v759 = vunpack.c.h.b16 %v569
        %v760 = vunpack.c.l.b16 %v570
        %v761 = vunpack.c.h.b16 %v570
        %v762 = vunpack.c.l.b16 %v571
        %v763 = vunpack.c.h.b16 %v571
        %v764 = vpack.c.b16 %v640, %v636
        %v765 = vpack.c.b16 %v641, %v637
        %v766 = vpack.c.b16 %v642, %v638
        %v767 = vpack.c.b16 %v643, %v639
        %v768 = vpack.c.b16 %v648, %v644
        %v769 = vpack.c.b16 %v649, %v645
        %v770 = vpack.c.b16 %v650, %v646
        %v771 = vpack.c.b16 %v651, %v647
        %v772 = vpack.c.b16 %v656, %v652
        %v773 = vpack.c.b16 %v657, %v653
        %v774 = vpack.c.b16 %v658, %v654
        %v775 = vpack.c.b16 %v659, %v655
        %v776 = vpack.c.b16 %v664, %v660
        %v777 = vpack.c.b16 %v665, %v661
        %v778 = vpack.c.b16 %v666, %v662
        %v779 = vpack.c.b16 %v667, %v663
        %v780 = vpack.c.b16 %v672, %v668
        %v781 = vpack.c.b16 %v673, %v669
        %v782 = vpack.c.b16 %v674, %v670
        %v783 = vpack.c.b16 %v675, %v671
        %v784 = vpack.c.b16 %v680, %v676
        %v785 = vpack.c.b16 %v681, %v677
        %v786 = vpack.c.b16 %v682, %v678
        %v787 = vpack.c.b16 %v683, %v679
        %v788 = vpack.c.b16 %v688, %v684
        %v789 = vpack.c.b16 %v689, %v685
        %v790 = vpack.c.b16 %v690, %v686
        %v791 = vpack.c.b16 %v691, %v687
        %v792 = vpack.c.b16 %v696, %v692
        %v793 = vpack.c.b16 %v697, %v693
        %v794 = vpack.c.b16 %v698, %v694
        %v795 = vpack.c.b16 %v699, %v695
        %v796 = vpack.c.b16 %v704, %v700
        %v797 = vpack.c.b16 %v705, %v701
        %v798 = vpack.c.b16 %v706, %v702
        %v799 = vpack.c.b16 %v707, %v703
        %v800 = vpack.c.b16 %v712, %v708
        %v801 = vpack.c.b16 %v713, %v709
        %v802 = vpack.c.b16 %v714, %v710
        %v803 = vpack.c.b16 %v715, %v711
        %v804 = vpack.c.b16 %v720, %v716
        %v805 = vpack.c.b16 %v721, %v717
        %v806 = vpack.c.b16 %v722, %v718
        %v807 = vpack.c.b16 %v723, %v719
        %v808 = vpack.c.b16 %v728, %v724
        %v809 = vpack.c.b16 %v729, %v725
        %v810 = vpack.c.b16 %v730, %v726
        %v811 = vpack.c.b16 %v731, %v727
        %v812 = vpack.c.b16 %v736, %v732
        %v813 = vpack.c.b16 %v737, %v733
        %v814 = vpack.c.b16 %v738, %v734
        %v815 = vpack.c.b16 %v739, %v735
        %v816 = vpack.c.b16 %v744, %v740
        %v817 = vpack.c.b16 %v745, %v741
        %v818 = vpack.c.b16 %v746, %v742
        %v819 = vpack.c.b16 %v747, %v743
        %v820 = vpack.c.b16 %v752, %v748
        %v821 = vpack.c.b16 %v753, %v749
        %v822 = vpack.c.b16 %v754, %v750
        %v823 = vpack.c.b16 %v755, %v751
        %v824 = vpack.c.b16 %v760, %v756
        %v825 = vpack.c.b16 %v761, %v757
        %v826 = vpack.c.b16 %v762, %v758
        %v827 = vpack.c.b16 %v763, %v759
        %892 = vmatpush.bf16.msra.mxu0 %v792
        %893 = vmatpush.bf16.msra.mxu0 %v788
        %894 = vmatpush.bf16.msra.mxu0 %v784
        %895 = vmatpush.bf16.msra.mxu0 %v780
        %896 = vmatpush.bf16.msra.mxu0 %v776
        %897 = vmatpush.bf16.msra.mxu0 %v772
        %898 = vmatpush.bf16.msra.mxu0 %v768
        %899 = vmatpush.bf16.msra.mxu0 %v764
        %900 = vmatmul.bf16.gmra.mxu0 %v506
        %v901 = vpop.f32.mrf.mxu0
        %v902 = vadd.f32 0.0, %v901
        %v903 = vpop.f32.mrf.mxu0
        %904 = vdwg.mxu0
        %905 = vmatpush.bf16.msra.mxu0 %v824
        %906 = vmatpush.bf16.msra.mxu0 %v820
        %907 = vmatpush.bf16.msra.mxu0 %v816
        %908 = vmatpush.bf16.msra.mxu0 %v812
        %909 = vmatpush.bf16.msra.mxu0 %v808
        %910 = vmatpush.bf16.msra.mxu0 %v804
        %911 = vmatpush.bf16.msra.mxu0 %v800
        %912 = vmatpush.bf16.msra.mxu0 %v796
        %913 = vmatmul.bf16.gmra.mxu0 %v507
        %v914 = vpop.f32.mrf.mxu0
        %v915 = vadd.f32 %v902, %v914
        %v916 = vpop.f32.mrf.mxu0
        %917 = vdwg.mxu0
        %918 = vmatpush.bf16.msra.mxu0 %v793
        %919 = vmatpush.bf16.msra.mxu0 %v789
        %920 = vmatpush.bf16.msra.mxu0 %v785
        %921 = vmatpush.bf16.msra.mxu0 %v781
        %922 = vmatpush.bf16.msra.mxu0 %v777
        %923 = vmatpush.bf16.msra.mxu0 %v773
        %924 = vmatpush.bf16.msra.mxu0 %v769
        %925 = vmatpush.bf16.msra.mxu0 %v765
        %926 = vmatmul.bf16.gmra.mxu0 %v506
        %v927 = vpop.f32.mrf.mxu0
        %v928 = vadd.f32 0.0, %v927
        %v929 = vpop.f32.mrf.mxu0
        %930 = vdwg.mxu0
        %931 = vmatpush.bf16.msra.mxu0 %v825
        %932 = vmatpush.bf16.msra.mxu0 %v821
        %933 = vmatpush.bf16.msra.mxu0 %v817
        %934 = vmatpush.bf16.msra.mxu0 %v813
        %935 = vmatpush.bf16.msra.mxu0 %v809
        %936 = vmatpush.bf16.msra.mxu0 %v805
        %937 = vmatpush.bf16.msra.mxu0 %v801
        %938 = vmatpush.bf16.msra.mxu0 %v797
        %939 = vmatmul.bf16.gmra.mxu0 %v507
        %v940 = vpop.f32.mrf.mxu0
        %v941 = vadd.f32 %v928, %v940
        %v942 = vpop.f32.mrf.mxu0
        %943 = vdwg.mxu0
        %944 = vmatpush.bf16.msra.mxu0 %v794
        %945 = vmatpush.bf16.msra.mxu0 %v790
        %946 = vmatpush.bf16.msra.mxu0 %v786
        %947 = vmatpush.bf16.msra.mxu0 %v782
        %948 = vmatpush.bf16.msra.mxu0 %v778
        %949 = vmatpush.bf16.msra.mxu0 %v774
        %950 = vmatpush.bf16.msra.mxu0 %v770
        %951 = vmatpush.bf16.msra.mxu0 %v766
        %952 = vmatmul.bf16.gmra.mxu0 %v506
        %v953 = vpop.f32.mrf.mxu0
        %v954 = vadd.f32 0.0, %v953
        %v955 = vpop.f32.mrf.mxu0
        %956 = vdwg.mxu0
        %957 = vmatpush.bf16.msra.mxu0 %v826
        %958 = vmatpush.bf16.msra.mxu0 %v822
        %959 = vmatpush.bf16.msra.mxu0 %v818
        %960 = vmatpush.bf16.msra.mxu0 %v814
        %961 = vmatpush.bf16.msra.mxu0 %v810
        %962 = vmatpush.bf16.msra.mxu0 %v806
        %963 = vmatpush.bf16.msra.mxu0 %v802
        %964 = vmatpush.bf16.msra.mxu0 %v798
        %965 = vmatmul.bf16.gmra.mxu0 %v507
        %v966 = vpop.f32.mrf.mxu0
        %v967 = vadd.f32 %v954, %v966
        %v968 = vpop.f32.mrf.mxu0
        %969 = vdwg.mxu0
        %970 = vmatpush.bf16.msra.mxu0 %v795
        %971 = vmatpush.bf16.msra.mxu0 %v791
        %972 = vmatpush.bf16.msra.mxu0 %v787
        %973 = vmatpush.bf16.msra.mxu0 %v783
        %974 = vmatpush.bf16.msra.mxu0 %v779
        %975 = vmatpush.bf16.msra.mxu0 %v775
        %976 = vmatpush.bf16.msra.mxu0 %v771
        %977 = vmatpush.bf16.msra.mxu0 %v767
        %978 = vmatmul.bf16.gmra.mxu0 %v506
        %v979 = vpop.f32.mrf.mxu0
        %v980 = vadd.f32 0.0, %v979
        %v981 = vpop.f32.mrf.mxu0
        %982 = vdwg.mxu0
        %983 = vmatpush.bf16.msra.mxu0 %v827
        %984 = vmatpush.bf16.msra.mxu0 %v823
        %985 = vmatpush.bf16.msra.mxu0 %v819
        %986 = vmatpush.bf16.msra.mxu0 %v815
        %987 = vmatpush.bf16.msra.mxu0 %v811
        %988 = vmatpush.bf16.msra.mxu0 %v807
        %989 = vmatpush.bf16.msra.mxu0 %v803
        %990 = vmatpush.bf16.msra.mxu0 %v799
        %991 = vmatmul.bf16.gmra.mxu0 %v507
        %v992 = vpop.f32.mrf.mxu0
        %v993 = vadd.f32 %v980, %v992
        %v994 = vpop.f32.mrf.mxu0
        %995 = vdwg.mxu0
        // Predicated region
        $region93: #{tpu_custom_call.1} parent=55 // pred_check
          %p996 = pneg %p424
        $region94: #{tpu_custom_call.1} parent=55 // pred_check_branch
          %998 = sbr.rel (%p996) target = $region96
        $region95: #{tpu_custom_call.1} parent=55 // pred_region
          %v999 = vld [vmem:[#allocation2] ss:$2 sm:$0xf]
          %v1000 = vrot.slane %v915, 4
          %v1001 = vadd.f32 %v915, %v1000
          %v1002 = vrot.slane %v1001, 2
          %v1003 = vadd.f32 %v1001, %v1002
          %v1004 = vrot.slane %v1003, 1
          %v1005 = vadd.f32 %v1003, %v1004
          %v1006 = vrot.slane %v941, 4
          %v1007 = vadd.f32 %v941, %v1006
          %v1008 = vrot.slane %v1007, 2
          %v1009 = vadd.f32 %v1007, %v1008
          %v1010 = vrot.slane %v1009, 1
          %v1011 = vadd.f32 %v1009, %v1010
          %v1012 = vrot.slane %v967, 4
          %v1013 = vadd.f32 %v967, %v1012
          %v1014 = vrot.slane %v1013, 2
          %v1015 = vadd.f32 %v1013, %v1014
          %v1016 = vrot.slane %v1015, 1
          %v1017 = vadd.f32 %v1015, %v1016
          %v1018 = vrot.slane %v993, 4
          %v1019 = vadd.f32 %v993, %v1018
          %v1020 = vrot.slane %v1019, 2
          %v1021 = vadd.f32 %v1019, %v1020
          %v1022 = vrot.slane %v1021, 1
          %v1023 = vadd.f32 %v1021, %v1022
          %v1028 = vrot.slane %v1011, 7
          %v1029 = vrot.slane %v1017, 6
          %v1030 = vrot.slane %v1023, 5
          %vm1031 = vcmask 1040384
          %v1032 = vsel %vm1031, %v1005, %v1028
          %vm1033 = vcmask 1042434
          %v1034 = vsel %vm1033, %v1029, %v1030
          %vm1035 = vcmask 1041408
          %v1036 = vsel %vm1035, %v1032, %v1034
          %v1038 = vadd.f32 %v999, %v1036
          %v1039 = vlaneseq
          %vm1040 = vcmp.ge.s32.totalorder %v1039, 0
          %vm1041 = vcmp.lt.s32.totalorder %v1039, 512
          %vm1042 = vmand %vm1040, %vm1041
          %1043 = vst.msk [vmem:[#allocation2] ss:$2 sm:$0xf] %vm1042, %v1038
          %s1044 = scalar_lea.vmem [#allocation2], 1
          %v1045 = vld [vmem:[%s1044] ss:$2 sm:$0xf]
          %v1046 = vmul.f32 %v915, %v915
          %v1047 = vmul.f32 %v941, %v941
          %v1048 = vmul.f32 %v967, %v967
          %v1049 = vmul.f32 %v993, %v993
          %v1050 = vrot.slane %v1046, 4
          %v1051 = vadd.f32 %v1046, %v1050
          %v1052 = vrot.slane %v1051, 2
          %v1053 = vadd.f32 %v1051, %v1052
          %v1054 = vrot.slane %v1053, 1
          %v1055 = vadd.f32 %v1053, %v1054
          %v1056 = vrot.slane %v1047, 4
          %v1057 = vadd.f32 %v1047, %v1056
          %v1058 = vrot.slane %v1057, 2
          %v1059 = vadd.f32 %v1057, %v1058
          %v1060 = vrot.slane %v1059, 1
          %v1061 = vadd.f32 %v1059, %v1060
          %v1062 = vrot.slane %v1048, 4
          %v1063 = vadd.f32 %v1048, %v1062
          %v1064 = vrot.slane %v1063, 2
          %v1065 = vadd.f32 %v1063, %v1064
          %v1066 = vrot.slane %v1065, 1
          %v1067 = vadd.f32 %v1065, %v1066
          %v1068 = vrot.slane %v1049, 4
          %v1069 = vadd.f32 %v1049, %v1068
          %v1070 = vrot.slane %v1069, 2
          %v1071 = vadd.f32 %v1069, %v1070
          %v1072 = vrot.slane %v1071, 1
          %v1073 = vadd.f32 %v1071, %v1072
          %v1078 = vrot.slane %v1061, 7
          %v1079 = vrot.slane %v1067, 6
          %v1080 = vrot.slane %v1073, 5
          %v1081 = vsel %vm1031, %v1055, %v1078
          %v1082 = vsel %vm1033, %v1079, %v1080
          %v1083 = vsel %vm1035, %v1081, %v1082
          %v1085 = vadd.f32 %v1045, %v1083
          %1086 = vst.msk [vmem:[%s1044] ss:$2 sm:$0xf] %vm1042, %v1085
        $region96: #{tpu_custom_call.1} parent=55 // pred_fallthru
          _
        // Predicated region
        $region97: #{tpu_custom_call.1} parent=55 // pred_check
          %p1087 = pneg %p431
        $region98: #{tpu_custom_call.1} parent=55 // pred_check_branch
          %1089 = sbr.rel (%p1087) target = $region100
        $region99: #{tpu_custom_call.1} parent=55 // pred_region
          %v1090 = vld [vmem:[#allocation4] ss:$2 sm:$0xf]
          %v1092 = vperm.slane %v1090, 0
          %v1093 = vperm.slane %v1090, 1
          %v1094 = vperm.slane %v1090, 2
          %v1095 = vperm.slane %v1090, 3
          %v1100 = vmul.f32 %v915, %v1092
          %v1101 = vmul.f32 %v941, %v1093
          %v1102 = vmul.f32 %v967, %v1094
          %v1103 = vmul.f32 %v993, %v1095
          %s1104 = scalar_lea.vmem [#allocation4], 1
          %v1105 = vld [vmem:[%s1104] ss:$2 sm:$0xf]
          %v1107 = vperm.slane %v1105, 0
          %v1108 = vperm.slane %v1105, 1
          %v1109 = vperm.slane %v1105, 2
          %v1110 = vperm.slane %v1105, 3
          %v1115 = vadd.f32 %v1100, %v1107
          %v1116 = vadd.f32 %v1101, %v1108
          %v1117 = vadd.f32 %v1102, %v1109
          %v1118 = vadd.f32 %v1103, %v1110
          %v1119 = vmax.f32 %v1115, 0.0
          %v1120 = vmax.f32 %v1116, 0.0
          %v1121 = vmax.f32 %v1117, 0.0
          %v1122 = vmax.f32 %v1118, 0.0
          %v1123 = vpack.c.bf16 %v1119, %v1119
          %v1124 = vpack.c.bf16 %v1120, %v1120
          %v1125 = vpack.c.bf16 %v1121, %v1121
          %v1126 = vpack.c.bf16 %v1122, %v1122
          %v1127 = vld [vmem:[#allocation12] sm:$0xff]
          %v1128 = vld [vmem:[#allocation12 + $0x8] sm:$0xff]
          %v1129 = vld [vmem:[#allocation12 + $0x10] sm:$0xff]
          %v1130 = vld [vmem:[#allocation12 + $0x18] sm:$0xff]
          %v1131 = vld [vmem:[#allocation12 + $0x20] sm:$0xff]
          %v1132 = vld [vmem:[#allocation12 + $0x28] sm:$0xff]
          %v1133 = vld [vmem:[#allocation12 + $0x30] sm:$0xff]
          %v1134 = vld [vmem:[#allocation12 + $0x38] sm:$0xff]
          %v1135 = vld [vmem:[#allocation12 + $0x40] sm:$0xff]
          %v1136 = vld [vmem:[#allocation12 + $0x48] sm:$0xff]
          %v1137 = vld [vmem:[#allocation12 + $0x50] sm:$0xff]
          %v1138 = vld [vmem:[#allocation12 + $0x58] sm:$0xff]
          %v1139 = vld [vmem:[#allocation12 + $0x60] sm:$0xff]
          %v1140 = vld [vmem:[#allocation12 + $0x68] sm:$0xff]
          %v1141 = vld [vmem:[#allocation12 + $0x70] sm:$0xff]
          %v1142 = vld [vmem:[#allocation12 + $0x78] sm:$0xff]
          %v1143 = vld [vmem:[#allocation12 + $0x80] sm:$0xff]
          %v1144 = vld [vmem:[#allocation12 + $0x88] sm:$0xff]
          %v1145 = vld [vmem:[#allocation12 + $0x90] sm:$0xff]
          %v1146 = vld [vmem:[#allocation12 + $0x98] sm:$0xff]
          %v1147 = vld [vmem:[#allocation12 + $0xa0] sm:$0xff]
          %v1148 = vld [vmem:[#allocation12 + $0xa8] sm:$0xff]
          %v1149 = vld [vmem:[#allocation12 + $0xb0] sm:$0xff]
          %v1150 = vld [vmem:[#allocation12 + $0xb8] sm:$0xff]
          %v1151 = vld [vmem:[#allocation12 + $0xc0] sm:$0xff]
          %v1152 = vld [vmem:[#allocation12 + $0xc8] sm:$0xff]
          %v1153 = vld [vmem:[#allocation12 + $0xd0] sm:$0xff]
          %v1154 = vld [vmem:[#allocation12 + $0xd8] sm:$0xff]
          %v1155 = vld [vmem:[#allocation12 + $0xe0] sm:$0xff]
          %v1156 = vld [vmem:[#allocation12 + $0xe8] sm:$0xff]
          %v1157 = vld [vmem:[#allocation12 + $0xf0] sm:$0xff]
          %v1158 = vld [vmem:[#allocation12 + $0xf8] sm:$0xff]
          %v1159 = vld [vmem:[#allocation12 + $0x100] sm:$0xff]
          %v1160 = vld [vmem:[#allocation12 + $0x108] sm:$0xff]
          %v1161 = vld [vmem:[#allocation12 + $0x110] sm:$0xff]
          %v1162 = vld [vmem:[#allocation12 + $0x118] sm:$0xff]
          %v1163 = vld [vmem:[#allocation12 + $0x120] sm:$0xff]
          %v1164 = vld [vmem:[#allocation12 + $0x128] sm:$0xff]
          %v1165 = vld [vmem:[#allocation12 + $0x130] sm:$0xff]
          %v1166 = vld [vmem:[#allocation12 + $0x138] sm:$0xff]
          %v1167 = vld [vmem:[#allocation12 + $0x140] sm:$0xff]
          %v1168 = vld [vmem:[#allocation12 + $0x148] sm:$0xff]
          %v1169 = vld [vmem:[#allocation12 + $0x150] sm:$0xff]
          %v1170 = vld [vmem:[#allocation12 + $0x158] sm:$0xff]
          %v1171 = vld [vmem:[#allocation12 + $0x160] sm:$0xff]
          %v1172 = vld [vmem:[#allocation12 + $0x168] sm:$0xff]
          %v1173 = vld [vmem:[#allocation12 + $0x170] sm:$0xff]
          %v1174 = vld [vmem:[#allocation12 + $0x178] sm:$0xff]
          %v1175 = vld [vmem:[#allocation12 + $0x180] sm:$0xff]
          %v1176 = vld [vmem:[#allocation12 + $0x188] sm:$0xff]
          %v1177 = vld [vmem:[#allocation12 + $0x190] sm:$0xff]
          %v1178 = vld [vmem:[#allocation12 + $0x198] sm:$0xff]
          %v1179 = vld [vmem:[#allocation12 + $0x1a0] sm:$0xff]
          %v1180 = vld [vmem:[#allocation12 + $0x1a8] sm:$0xff]
          %v1181 = vld [vmem:[#allocation12 + $0x1b0] sm:$0xff]
          %v1182 = vld [vmem:[#allocation12 + $0x1b8] sm:$0xff]
          %v1183 = vld [vmem:[#allocation12 + $0x1c0] sm:$0xff]
          %v1184 = vld [vmem:[#allocation12 + $0x1c8] sm:$0xff]
          %v1185 = vld [vmem:[#allocation12 + $0x1d0] sm:$0xff]
          %v1186 = vld [vmem:[#allocation12 + $0x1d8] sm:$0xff]
          %v1187 = vld [vmem:[#allocation12 + $0x1e0] sm:$0xff]
          %v1188 = vld [vmem:[#allocation12 + $0x1e8] sm:$0xff]
          %v1189 = vld [vmem:[#allocation12 + $0x1f0] sm:$0xff]
          %v1190 = vld [vmem:[#allocation12 + $0x1f8] sm:$0xff]
          %v1191 = vld [vmem:[#allocation12 + $0x200] sm:$0xff]
          %v1192 = vld [vmem:[#allocation12 + $0x208] sm:$0xff]
          %v1193 = vld [vmem:[#allocation12 + $0x210] sm:$0xff]
          %v1194 = vld [vmem:[#allocation12 + $0x218] sm:$0xff]
          %v1195 = vld [vmem:[#allocation12 + $0x220] sm:$0xff]
          %v1196 = vld [vmem:[#allocation12 + $0x228] sm:$0xff]
          %v1197 = vld [vmem:[#allocation12 + $0x230] sm:$0xff]
          %v1198 = vld [vmem:[#allocation12 + $0x238] sm:$0xff]
          %v1199 = vld [vmem:[#allocation12 + $0x240] sm:$0xff]
          %v1200 = vld [vmem:[#allocation12 + $0x248] sm:$0xff]
          %v1201 = vld [vmem:[#allocation12 + $0x250] sm:$0xff]
          %v1202 = vld [vmem:[#allocation12 + $0x258] sm:$0xff]
          %v1203 = vld [vmem:[#allocation12 + $0x260] sm:$0xff]
          %v1204 = vld [vmem:[#allocation12 + $0x268] sm:$0xff]
          %v1205 = vld [vmem:[#allocation12 + $0x270] sm:$0xff]
          %v1206 = vld [vmem:[#allocation12 + $0x278] sm:$0xff]
          %v1207 = vld [vmem:[#allocation12 + $0x280] sm:$0xff]
          %v1208 = vld [vmem:[#allocation12 + $0x288] sm:$0xff]
          %v1209 = vld [vmem:[#allocation12 + $0x290] sm:$0xff]
          %v1210 = vld [vmem:[#allocation12 + $0x298] sm:$0xff]
          %v1211 = vld [vmem:[#allocation12 + $0x2a0] sm:$0xff]
          %v1212 = vld [vmem:[#allocation12 + $0x2a8] sm:$0xff]
          %v1213 = vld [vmem:[#allocation12 + $0x2b0] sm:$0xff]
          %v1214 = vld [vmem:[#allocation12 + $0x2b8] sm:$0xff]
          %v1215 = vld [vmem:[#allocation12 + $0x2c0] sm:$0xff]
          %v1216 = vld [vmem:[#allocation12 + $0x2c8] sm:$0xff]
          %v1217 = vld [vmem:[#allocation12 + $0x2d0] sm:$0xff]
          %v1218 = vld [vmem:[#allocation12 + $0x2d8] sm:$0xff]
          %v1219 = vld [vmem:[#allocation12 + $0x2e0] sm:$0xff]
          %v1220 = vld [vmem:[#allocation12 + $0x2e8] sm:$0xff]
          %v1221 = vld [vmem:[#allocation12 + $0x2f0] sm:$0xff]
          %v1222 = vld [vmem:[#allocation12 + $0x2f8] sm:$0xff]
          %v1223 = vld [vmem:[#allocation12 + $0x300] sm:$0xff]
          %v1224 = vld [vmem:[#allocation12 + $0x308] sm:$0xff]
          %v1225 = vld [vmem:[#allocation12 + $0x310] sm:$0xff]
          %v1226 = vld [vmem:[#allocation12 + $0x318] sm:$0xff]
          %v1227 = vld [vmem:[#allocation12 + $0x320] sm:$0xff]
          %v1228 = vld [vmem:[#allocation12 + $0x328] sm:$0xff]
          %v1229 = vld [vmem:[#allocation12 + $0x330] sm:$0xff]
          %v1230 = vld [vmem:[#allocation12 + $0x338] sm:$0xff]
          %v1231 = vld [vmem:[#allocation12 + $0x340] sm:$0xff]
          %v1232 = vld [vmem:[#allocation12 + $0x348] sm:$0xff]
          %v1233 = vld [vmem:[#allocation12 + $0x350] sm:$0xff]
          %v1234 = vld [vmem:[#allocation12 + $0x358] sm:$0xff]
          %v1235 = vld [vmem:[#allocation12 + $0x360] sm:$0xff]
          %v1236 = vld [vmem:[#allocation12 + $0x368] sm:$0xff]
          %v1237 = vld [vmem:[#allocation12 + $0x370] sm:$0xff]
          %v1238 = vld [vmem:[#allocation12 + $0x378] sm:$0xff]
          %v1239 = vld [vmem:[#allocation12 + $0x380] sm:$0xff]
          %v1240 = vld [vmem:[#allocation12 + $0x388] sm:$0xff]
          %v1241 = vld [vmem:[#allocation12 + $0x390] sm:$0xff]
          %v1242 = vld [vmem:[#allocation12 + $0x398] sm:$0xff]
          %v1243 = vld [vmem:[#allocation12 + $0x3a0] sm:$0xff]
          %v1244 = vld [vmem:[#allocation12 + $0x3a8] sm:$0xff]
          %v1245 = vld [vmem:[#allocation12 + $0x3b0] sm:$0xff]
          %v1246 = vld [vmem:[#allocation12 + $0x3b8] sm:$0xff]
          %v1247 = vld [vmem:[#allocation12 + $0x3c0] sm:$0xff]
          %v1248 = vld [vmem:[#allocation12 + $0x3c8] sm:$0xff]
          %v1249 = vld [vmem:[#allocation12 + $0x3d0] sm:$0xff]
          %v1250 = vld [vmem:[#allocation12 + $0x3d8] sm:$0xff]
          %v1251 = vld [vmem:[#allocation12 + $0x3e0] sm:$0xff]
          %v1252 = vld [vmem:[#allocation12 + $0x3e8] sm:$0xff]
          %v1253 = vld [vmem:[#allocation12 + $0x3f0] sm:$0xff]
          %v1254 = vld [vmem:[#allocation12 + $0x3f8] sm:$0xff]
          %v1383 = vunpack.c.l.b16 %v1127
          %v1384 = vunpack.c.h.b16 %v1127
          %v1385 = vunpack.c.l.b16 %v1128
          %v1386 = vunpack.c.h.b16 %v1128
          %v1387 = vunpack.c.l.b16 %v1129
          %v1388 = vunpack.c.h.b16 %v1129
          %v1389 = vunpack.c.l.b16 %v1130
          %v1390 = vunpack.c.h.b16 %v1130
          %v1391 = vunpack.c.l.b16 %v1131
          %v1392 = vunpack.c.h.b16 %v1131
          %v1393 = vunpack.c.l.b16 %v1132
          %v1394 = vunpack.c.h.b16 %v1132
          %v1395 = vunpack.c.l.b16 %v1133
          %v1396 = vunpack.c.h.b16 %v1133
          %v1397 = vunpack.c.l.b16 %v1134
          %v1398 = vunpack.c.h.b16 %v1134
          %v1399 = vunpack.c.l.b16 %v1135
          %v1400 = vunpack.c.h.b16 %v1135
          %v1401 = vunpack.c.l.b16 %v1136
          %v1402 = vunpack.c.h.b16 %v1136
          %v1403 = vunpack.c.l.b16 %v1137
          %v1404 = vunpack.c.h.b16 %v1137
          %v1405 = vunpack.c.l.b16 %v1138
          %v1406 = vunpack.c.h.b16 %v1138
          %v1407 = vunpack.c.l.b16 %v1139
          %v1408 = vunpack.c.h.b16 %v1139
          %v1409 = vunpack.c.l.b16 %v1140
          %v1410 = vunpack.c.h.b16 %v1140
          %v1411 = vunpack.c.l.b16 %v1141
          %v1412 = vunpack.c.h.b16 %v1141
          %v1413 = vunpack.c.l.b16 %v1142
          %v1414 = vunpack.c.h.b16 %v1142
          %v1415 = vunpack.c.l.b16 %v1143
          %v1416 = vunpack.c.h.b16 %v1143
          %v1417 = vunpack.c.l.b16 %v1144
          %v1418 = vunpack.c.h.b16 %v1144
          %v1419 = vunpack.c.l.b16 %v1145
          %v1420 = vunpack.c.h.b16 %v1145
          %v1421 = vunpack.c.l.b16 %v1146
          %v1422 = vunpack.c.h.b16 %v1146
          %v1423 = vunpack.c.l.b16 %v1147
          %v1424 = vunpack.c.h.b16 %v1147
          %v1425 = vunpack.c.l.b16 %v1148
          %v1426 = vunpack.c.h.b16 %v1148
          %v1427 = vunpack.c.l.b16 %v1149
          %v1428 = vunpack.c.h.b16 %v1149
          %v1429 = vunpack.c.l.b16 %v1150
          %v1430 = vunpack.c.h.b16 %v1150
          %v1431 = vunpack.c.l.b16 %v1151
          %v1432 = vunpack.c.h.b16 %v1151
          %v1433 = vunpack.c.l.b16 %v1152
          %v1434 = vunpack.c.h.b16 %v1152
          %v1435 = vunpack.c.l.b16 %v1153
          %v1436 = vunpack.c.h.b16 %v1153
          %v1437 = vunpack.c.l.b16 %v1154
          %v1438 = vunpack.c.h.b16 %v1154
          %v1439 = vunpack.c.l.b16 %v1155
          %v1440 = vunpack.c.h.b16 %v1155
          %v1441 = vunpack.c.l.b16 %v1156
          %v1442 = vunpack.c.h.b16 %v1156
          %v1443 = vunpack.c.l.b16 %v1157
          %v1444 = vunpack.c.h.b16 %v1157
          %v1445 = vunpack.c.l.b16 %v1158
          %v1446 = vunpack.c.h.b16 %v1158
          %v1447 = vunpack.c.l.b16 %v1159
          %v1448 = vunpack.c.h.b16 %v1159
          %v1449 = vunpack.c.l.b16 %v1160
          %v1450 = vunpack.c.h.b16 %v1160
          %v1451 = vunpack.c.l.b16 %v1161
          %v1452 = vunpack.c.h.b16 %v1161
          %v1453 = vunpack.c.l.b16 %v1162
          %v1454 = vunpack.c.h.b16 %v1162
          %v1455 = vunpack.c.l.b16 %v1163
          %v1456 = vunpack.c.h.b16 %v1163
          %v1457 = vunpack.c.l.b16 %v1164
          %v1458 = vunpack.c.h.b16 %v1164
          %v1459 = vunpack.c.l.b16 %v1165
          %v1460 = vunpack.c.h.b16 %v1165
          %v1461 = vunpack.c.l.b16 %v1166
          %v1462 = vunpack.c.h.b16 %v1166
          %v1463 = vunpack.c.l.b16 %v1167
          %v1464 = vunpack.c.h.b16 %v1167
          %v1465 = vunpack.c.l.b16 %v1168
          %v1466 = vunpack.c.h.b16 %v1168
          %v1467 = vunpack.c.l.b16 %v1169
          %v1468 = vunpack.c.h.b16 %v1169
          %v1469 = vunpack.c.l.b16 %v1170
          %v1470 = vunpack.c.h.b16 %v1170
          %v1471 = vunpack.c.l.b16 %v1171
          %v1472 = vunpack.c.h.b16 %v1171
          %v1473 = vunpack.c.l.b16 %v1172
          %v1474 = vunpack.c.h.b16 %v1172
          %v1475 = vunpack.c.l.b16 %v1173
          %v1476 = vunpack.c.h.b16 %v1173
          %v1477 = vunpack.c.l.b16 %v1174
          %v1478 = vunpack.c.h.b16 %v1174
          %v1479 = vunpack.c.l.b16 %v1175
          %v1480 = vunpack.c.h.b16 %v1175
          %v1481 = vunpack.c.l.b16 %v1176
          %v1482 = vunpack.c.h.b16 %v1176
          %v1483 = vunpack.c.l.b16 %v1177
          %v1484 = vunpack.c.h.b16 %v1177
          %v1485 = vunpack.c.l.b16 %v1178
          %v1486 = vunpack.c.h.b16 %v1178
          %v1487 = vunpack.c.l.b16 %v1179
          %v1488 = vunpack.c.h.b16 %v1179
          %v1489 = vunpack.c.l.b16 %v1180
          %v1490 = vunpack.c.h.b16 %v1180
          %v1491 = vunpack.c.l.b16 %v1181
          %v1492 = vunpack.c.h.b16 %v1181
          %v1493 = vunpack.c.l.b16 %v1182
          %v1494 = vunpack.c.h.b16 %v1182
          %v1495 = vunpack.c.l.b16 %v1183
          %v1496 = vunpack.c.h.b16 %v1183
          %v1497 = vunpack.c.l.b16 %v1184
          %v1498 = vunpack.c.h.b16 %v1184
          %v1499 = vunpack.c.l.b16 %v1185
          %v1500 = vunpack.c.h.b16 %v1185
          %v1501 = vunpack.c.l.b16 %v1186
          %v1502 = vunpack.c.h.b16 %v1186
          %v1503 = vunpack.c.l.b16 %v1187
          %v1504 = vunpack.c.h.b16 %v1187
          %v1505 = vunpack.c.l.b16 %v1188
          %v1506 = vunpack.c.h.b16 %v1188
          %v1507 = vunpack.c.l.b16 %v1189
          %v1508 = vunpack.c.h.b16 %v1189
          %v1509 = vunpack.c.l.b16 %v1190
          %v1510 = vunpack.c.h.b16 %v1190
          %v1511 = vunpack.c.l.b16 %v1191
          %v1512 = vunpack.c.h.b16 %v1191
          %v1513 = vunpack.c.l.b16 %v1192
          %v1514 = vunpack.c.h.b16 %v1192
          %v1515 = vunpack.c.l.b16 %v1193
          %v1516 = vunpack.c.h.b16 %v1193
          %v1517 = vunpack.c.l.b16 %v1194
          %v1518 = vunpack.c.h.b16 %v1194
          %v1519 = vunpack.c.l.b16 %v1195
          %v1520 = vunpack.c.h.b16 %v1195
          %v1521 = vunpack.c.l.b16 %v1196
          %v1522 = vunpack.c.h.b16 %v1196
          %v1523 = vunpack.c.l.b16 %v1197
          %v1524 = vunpack.c.h.b16 %v1197
          %v1525 = vunpack.c.l.b16 %v1198
          %v1526 = vunpack.c.h.b16 %v1198
          %v1527 = vunpack.c.l.b16 %v1199
          %v1528 = vunpack.c.h.b16 %v1199
          %v1529 = vunpack.c.l.b16 %v1200
          %v1530 = vunpack.c.h.b16 %v1200
          %v1531 = vunpack.c.l.b16 %v1201
          %v1532 = vunpack.c.h.b16 %v1201
          %v1533 = vunpack.c.l.b16 %v1202
          %v1534 = vunpack.c.h.b16 %v1202
          %v1535 = vunpack.c.l.b16 %v1203
          %v1536 = vunpack.c.h.b16 %v1203
          %v1537 = vunpack.c.l.b16 %v1204
          %v1538 = vunpack.c.h.b16 %v1204
          %v1539 = vunpack.c.l.b16 %v1205
          %v1540 = vunpack.c.h.b16 %v1205
          %v1541 = vunpack.c.l.b16 %v1206
          %v1542 = vunpack.c.h.b16 %v1206
          %v1543 = vunpack.c.l.b16 %v1207
          %v1544 = vunpack.c.h.b16 %v1207
          %v1545 = vunpack.c.l.b16 %v1208
          %v1546 = vunpack.c.h.b16 %v1208
          %v1547 = vunpack.c.l.b16 %v1209
          %v1548 = vunpack.c.h.b16 %v1209
          %v1549 = vunpack.c.l.b16 %v1210
          %v1550 = vunpack.c.h.b16 %v1210
          %v1551 = vunpack.c.l.b16 %v1211
          %v1552 = vunpack.c.h.b16 %v1211
          %v1553 = vunpack.c.l.b16 %v1212
          %v1554 = vunpack.c.h.b16 %v1212
          %v1555 = vunpack.c.l.b16 %v1213
          %v1556 = vunpack.c.h.b16 %v1213
          %v1557 = vunpack.c.l.b16 %v1214
          %v1558 = vunpack.c.h.b16 %v1214
          %v1559 = vunpack.c.l.b16 %v1215
          %v1560 = vunpack.c.h.b16 %v1215
          %v1561 = vunpack.c.l.b16 %v1216
          %v1562 = vunpack.c.h.b16 %v1216
          %v1563 = vunpack.c.l.b16 %v1217
          %v1564 = vunpack.c.h.b16 %v1217
          %v1565 = vunpack.c.l.b16 %v1218
          %v1566 = vunpack.c.h.b16 %v1218
          %v1567 = vunpack.c.l.b16 %v1219
          %v1568 = vunpack.c.h.b16 %v1219
          %v1569 = vunpack.c.l.b16 %v1220
          %v1570 = vunpack.c.h.b16 %v1220
          %v1571 = vunpack.c.l.b16 %v1221
          %v1572 = vunpack.c.h.b16 %v1221
          %v1573 = vunpack.c.l.b16 %v1222
          %v1574 = vunpack.c.h.b16 %v1222
          %v1575 = vunpack.c.l.b16 %v1223
          %v1576 = vunpack.c.h.b16 %v1223
          %v1577 = vunpack.c.l.b16 %v1224
          %v1578 = vunpack.c.h.b16 %v1224
          %v1579 = vunpack.c.l.b16 %v1225
          %v1580 = vunpack.c.h.b16 %v1225
          %v1581 = vunpack.c.l.b16 %v1226
          %v1582 = vunpack.c.h.b16 %v1226
          %v1583 = vunpack.c.l.b16 %v1227
          %v1584 = vunpack.c.h.b16 %v1227
          %v1585 = vunpack.c.l.b16 %v1228
          %v1586 = vunpack.c.h.b16 %v1228
          %v1587 = vunpack.c.l.b16 %v1229
          %v1588 = vunpack.c.h.b16 %v1229
          %v1589 = vunpack.c.l.b16 %v1230
          %v1590 = vunpack.c.h.b16 %v1230
          %v1591 = vunpack.c.l.b16 %v1231
          %v1592 = vunpack.c.h.b16 %v1231
          %v1593 = vunpack.c.l.b16 %v1232
          %v1594 = vunpack.c.h.b16 %v1232
          %v1595 = vunpack.c.l.b16 %v1233
          %v1596 = vunpack.c.h.b16 %v1233
          %v1597 = vunpack.c.l.b16 %v1234
          %v1598 = vunpack.c.h.b16 %v1234
          %v1599 = vunpack.c.l.b16 %v1235
          %v1600 = vunpack.c.h.b16 %v1235
          %v1601 = vunpack.c.l.b16 %v1236
          %v1602 = vunpack.c.h.b16 %v1236
          %v1603 = vunpack.c.l.b16 %v1237
          %v1604 = vunpack.c.h.b16 %v1237
          %v1605 = vunpack.c.l.b16 %v1238
          %v1606 = vunpack.c.h.b16 %v1238
          %v1607 = vunpack.c.l.b16 %v1239
          %v1608 = vunpack.c.h.b16 %v1239
          %v1609 = vunpack.c.l.b16 %v1240
          %v1610 = vunpack.c.h.b16 %v1240
          %v1611 = vunpack.c.l.b16 %v1241
          %v1612 = vunpack.c.h.b16 %v1241
          %v1613 = vunpack.c.l.b16 %v1242
          %v1614 = vunpack.c.h.b16 %v1242
          %v1615 = vunpack.c.l.b16 %v1243
          %v1616 = vunpack.c.h.b16 %v1243
          %v1617 = vunpack.c.l.b16 %v1244
          %v1618 = vunpack.c.h.b16 %v1244
          %v1619 = vunpack.c.l.b16 %v1245
          %v1620 = vunpack.c.h.b16 %v1245
          %v1621 = vunpack.c.l.b16 %v1246
          %v1622 = vunpack.c.h.b16 %v1246
          %v1623 = vunpack.c.l.b16 %v1247
          %v1624 = vunpack.c.h.b16 %v1247
          %v1625 = vunpack.c.l.b16 %v1248
          %v1626 = vunpack.c.h.b16 %v1248
          %v1627 = vunpack.c.l.b16 %v1249
          %v1628 = vunpack.c.h.b16 %v1249
          %v1629 = vunpack.c.l.b16 %v1250
          %v1630 = vunpack.c.h.b16 %v1250
          %v1631 = vunpack.c.l.b16 %v1251
          %v1632 = vunpack.c.h.b16 %v1251
          %v1633 = vunpack.c.l.b16 %v1252
          %v1634 = vunpack.c.h.b16 %v1252
          %v1635 = vunpack.c.l.b16 %v1253
          %v1636 = vunpack.c.h.b16 %v1253
          %v1637 = vunpack.c.l.b16 %v1254
          %v1638 = vunpack.c.h.b16 %v1254
          %v1639 = vpack.c.b16 %v1387, %v1383
          %v1640 = vpack.c.b16 %v1388, %v1384
          %v1641 = vpack.c.b16 %v1389, %v1385
          %v1642 = vpack.c.b16 %v1390, %v1386
          %v1643 = vpack.c.b16 %v1395, %v1391
          %v1644 = vpack.c.b16 %v1396, %v1392
          %v1645 = vpack.c.b16 %v1397, %v1393
          %v1646 = vpack.c.b16 %v1398, %v1394
          %v1647 = vpack.c.b16 %v1403, %v1399
          %v1648 = vpack.c.b16 %v1404, %v1400
          %v1649 = vpack.c.b16 %v1405, %v1401
          %v1650 = vpack.c.b16 %v1406, %v1402
          %v1651 = vpack.c.b16 %v1411, %v1407
          %v1652 = vpack.c.b16 %v1412, %v1408
          %v1653 = vpack.c.b16 %v1413, %v1409
          %v1654 = vpack.c.b16 %v1414, %v1410
          %v1655 = vpack.c.b16 %v1419, %v1415
          %v1656 = vpack.c.b16 %v1420, %v1416
          %v1657 = vpack.c.b16 %v1421, %v1417
          %v1658 = vpack.c.b16 %v1422, %v1418
          %v1659 = vpack.c.b16 %v1427, %v1423
          %v1660 = vpack.c.b16 %v1428, %v1424
          %v1661 = vpack.c.b16 %v1429, %v1425
          %v1662 = vpack.c.b16 %v1430, %v1426
          %v1663 = vpack.c.b16 %v1435, %v1431
          %v1664 = vpack.c.b16 %v1436, %v1432
          %v1665 = vpack.c.b16 %v1437, %v1433
          %v1666 = vpack.c.b16 %v1438, %v1434
          %v1667 = vpack.c.b16 %v1443, %v1439
          %v1668 = vpack.c.b16 %v1444, %v1440
          %v1669 = vpack.c.b16 %v1445, %v1441
          %v1670 = vpack.c.b16 %v1446, %v1442
          %v1671 = vpack.c.b16 %v1451, %v1447
          %v1672 = vpack.c.b16 %v1452, %v1448
          %v1673 = vpack.c.b16 %v1453, %v1449
          %v1674 = vpack.c.b16 %v1454, %v1450
          %v1675 = vpack.c.b16 %v1459, %v1455
          %v1676 = vpack.c.b16 %v1460, %v1456
          %v1677 = vpack.c.b16 %v1461, %v1457
          %v1678 = vpack.c.b16 %v1462, %v1458
          %v1679 = vpack.c.b16 %v1467, %v1463
          %v1680 = vpack.c.b16 %v1468, %v1464
          %v1681 = vpack.c.b16 %v1469, %v1465
          %v1682 = vpack.c.b16 %v1470, %v1466
          %v1683 = vpack.c.b16 %v1475, %v1471
          %v1684 = vpack.c.b16 %v1476, %v1472
          %v1685 = vpack.c.b16 %v1477, %v1473
          %v1686 = vpack.c.b16 %v1478, %v1474
          %v1687 = vpack.c.b16 %v1483, %v1479
          %v1688 = vpack.c.b16 %v1484, %v1480
          %v1689 = vpack.c.b16 %v1485, %v1481
          %v1690 = vpack.c.b16 %v1486, %v1482
          %v1691 = vpack.c.b16 %v1491, %v1487
          %v1692 = vpack.c.b16 %v1492, %v1488
          %v1693 = vpack.c.b16 %v1493, %v1489
          %v1694 = vpack.c.b16 %v1494, %v1490
          %v1695 = vpack.c.b16 %v1499, %v1495
          %v1696 = vpack.c.b16 %v1500, %v1496
          %v1697 = vpack.c.b16 %v1501, %v1497
          %v1698 = vpack.c.b16 %v1502, %v1498
          %v1699 = vpack.c.b16 %v1507, %v1503
          %v1700 = vpack.c.b16 %v1508, %v1504
          %v1701 = vpack.c.b16 %v1509, %v1505
          %v1702 = vpack.c.b16 %v1510, %v1506
          %v1703 = vpack.c.b16 %v1515, %v1511
          %v1704 = vpack.c.b16 %v1516, %v1512
          %v1705 = vpack.c.b16 %v1517, %v1513
          %v1706 = vpack.c.b16 %v1518, %v1514
          %v1707 = vpack.c.b16 %v1523, %v1519
          %v1708 = vpack.c.b16 %v1524, %v1520
          %v1709 = vpack.c.b16 %v1525, %v1521
          %v1710 = vpack.c.b16 %v1526, %v1522
          %v1711 = vpack.c.b16 %v1531, %v1527
          %v1712 = vpack.c.b16 %v1532, %v1528
          %v1713 = vpack.c.b16 %v1533, %v1529
          %v1714 = vpack.c.b16 %v1534, %v1530
          %v1715 = vpack.c.b16 %v1539, %v1535
          %v1716 = vpack.c.b16 %v1540, %v1536
          %v1717 = vpack.c.b16 %v1541, %v1537
          %v1718 = vpack.c.b16 %v1542, %v1538
          %v1719 = vpack.c.b16 %v1547, %v1543
          %v1720 = vpack.c.b16 %v1548, %v1544
          %v1721 = vpack.c.b16 %v1549, %v1545
          %v1722 = vpack.c.b16 %v1550, %v1546
          %v1723 = vpack.c.b16 %v1555, %v1551
          %v1724 = vpack.c.b16 %v1556, %v1552
          %v1725 = vpack.c.b16 %v1557, %v1553
          %v1726 = vpack.c.b16 %v1558, %v1554
          %v1727 = vpack.c.b16 %v1563, %v1559
          %v1728 = vpack.c.b16 %v1564, %v1560
          %v1729 = vpack.c.b16 %v1565, %v1561
          %v1730 = vpack.c.b16 %v1566, %v1562
          %v1731 = vpack.c.b16 %v1571, %v1567
          %v1732 = vpack.c.b16 %v1572, %v1568
          %v1733 = vpack.c.b16 %v1573, %v1569
          %v1734 = vpack.c.b16 %v1574, %v1570
          %v1735 = vpack.c.b16 %v1579, %v1575
          %v1736 = vpack.c.b16 %v1580, %v1576
          %v1737 = vpack.c.b16 %v1581, %v1577
          %v1738 = vpack.c.b16 %v1582, %v1578
          %v1739 = vpack.c.b16 %v1587, %v1583
          %v1740 = vpack.c.b16 %v1588, %v1584
          %v1741 = vpack.c.b16 %v1589, %v1585
          %v1742 = vpack.c.b16 %v1590, %v1586
          %v1743 = vpack.c.b16 %v1595, %v1591
          %v1744 = vpack.c.b16 %v1596, %v1592
          %v1745 = vpack.c.b16 %v1597, %v1593
          %v1746 = vpack.c.b16 %v1598, %v1594
          %v1747 = vpack.c.b16 %v1603, %v1599
          %v1748 = vpack.c.b16 %v1604, %v1600
          %v1749 = vpack.c.b16 %v1605, %v1601
          %v1750 = vpack.c.b16 %v1606, %v1602
          %v1751 = vpack.c.b16 %v1611, %v1607
          %v1752 = vpack.c.b16 %v1612, %v1608
          %v1753 = vpack.c.b16 %v1613, %v1609
          %v1754 = vpack.c.b16 %v1614, %v1610
          %v1755 = vpack.c.b16 %v1619, %v1615
          %v1756 = vpack.c.b16 %v1620, %v1616
          %v1757 = vpack.c.b16 %v1621, %v1617
          %v1758 = vpack.c.b16 %v1622, %v1618
          %v1759 = vpack.c.b16 %v1627, %v1623
          %v1760 = vpack.c.b16 %v1628, %v1624
          %v1761 = vpack.c.b16 %v1629, %v1625
          %v1762 = vpack.c.b16 %v1630, %v1626
          %v1763 = vpack.c.b16 %v1635, %v1631
          %v1764 = vpack.c.b16 %v1636, %v1632
          %v1765 = vpack.c.b16 %v1637, %v1633
          %v1766 = vpack.c.b16 %v1638, %v1634
          %1895 = vmatpush.bf16.msra.mxu0 %v1667
          %1896 = vmatpush.bf16.msra.mxu0 %v1663
          %1897 = vmatpush.bf16.msra.mxu0 %v1659
          %1898 = vmatpush.bf16.msra.mxu0 %v1655
          %1899 = vmatpush.bf16.msra.mxu0 %v1651
          %1900 = vmatpush.bf16.msra.mxu0 %v1647
          %1901 = vmatpush.bf16.msra.mxu0 %v1643
          %1902 = vmatpush.bf16.msra.mxu0 %v1639
          %1903 = vmatmul.bf16.gmra.mxu0 %v1123
          %v1904 = vpop.f32.mrf.mxu0
          %v1905 = vadd.f32 0.0, %v1904
          %v1906 = vpop.f32.mrf.mxu0
          %1907 = vdwg.mxu0
          %1908 = vmatpush.bf16.msra.mxu0 %v1699
          %1909 = vmatpush.bf16.msra.mxu0 %v1695
          %1910 = vmatpush.bf16.msra.mxu0 %v1691
          %1911 = vmatpush.bf16.msra.mxu0 %v1687
          %1912 = vmatpush.bf16.msra.mxu0 %v1683
          %1913 = vmatpush.bf16.msra.mxu0 %v1679
          %1914 = vmatpush.bf16.msra.mxu0 %v1675
          %1915 = vmatpush.bf16.msra.mxu0 %v1671
          %1916 = vmatmul.bf16.gmra.mxu0 %v1124
          %v1917 = vpop.f32.mrf.mxu0
          %v1918 = vadd.f32 %v1905, %v1917
          %v1919 = vpop.f32.mrf.mxu0
          %1920 = vdwg.mxu0
          %1921 = vmatpush.bf16.msra.mxu0 %v1731
          %1922 = vmatpush.bf16.msra.mxu0 %v1727
          %1923 = vmatpush.bf16.msra.mxu0 %v1723
          %1924 = vmatpush.bf16.msra.mxu0 %v1719
          %1925 = vmatpush.bf16.msra.mxu0 %v1715
          %1926 = vmatpush.bf16.msra.mxu0 %v1711
          %1927 = vmatpush.bf16.msra.mxu0 %v1707
          %1928 = vmatpush.bf16.msra.mxu0 %v1703
          %1929 = vmatmul.bf16.gmra.mxu0 %v1125
          %v1930 = vpop.f32.mrf.mxu0
          %v1931 = vadd.f32 %v1918, %v1930
          %v1932 = vpop.f32.mrf.mxu0
          %1933 = vdwg.mxu0
          %1934 = vmatpush.bf16.msra.mxu0 %v1763
          %1935 = vmatpush.bf16.msra.mxu0 %v1759
          %1936 = vmatpush.bf16.msra.mxu0 %v1755
          %1937 = vmatpush.bf16.msra.mxu0 %v1751
          %1938 = vmatpush.bf16.msra.mxu0 %v1747
          %1939 = vmatpush.bf16.msra.mxu0 %v1743
          %1940 = vmatpush.bf16.msra.mxu0 %v1739
          %1941 = vmatpush.bf16.msra.mxu0 %v1735
          %1942 = vmatmul.bf16.gmra.mxu0 %v1126
          %v1943 = vpop.f32.mrf.mxu0
          %v1944 = vadd.f32 %v1931, %v1943
          %v1945 = vpop.f32.mrf.mxu0
          %1946 = vdwg.mxu0
          %1947 = vmatpush.bf16.msra.mxu0 %v1668
          %1948 = vmatpush.bf16.msra.mxu0 %v1664
          %1949 = vmatpush.bf16.msra.mxu0 %v1660
          %1950 = vmatpush.bf16.msra.mxu0 %v1656
          %1951 = vmatpush.bf16.msra.mxu0 %v1652
          %1952 = vmatpush.bf16.msra.mxu0 %v1648
          %1953 = vmatpush.bf16.msra.mxu0 %v1644
          %1954 = vmatpush.bf16.msra.mxu0 %v1640
          %1955 = vmatmul.bf16.gmra.mxu0 %v1123
          %v1956 = vpop.f32.mrf.mxu0
          %v1957 = vadd.f32 0.0, %v1956
          %v1958 = vpop.f32.mrf.mxu0
          %1959 = vdwg.mxu0
          %1960 = vmatpush.bf16.msra.mxu0 %v1700
          %1961 = vmatpush.bf16.msra.mxu0 %v1696
          %1962 = vmatpush.bf16.msra.mxu0 %v1692
          %1963 = vmatpush.bf16.msra.mxu0 %v1688
          %1964 = vmatpush.bf16.msra.mxu0 %v1684
          %1965 = vmatpush.bf16.msra.mxu0 %v1680
          %1966 = vmatpush.bf16.msra.mxu0 %v1676
          %1967 = vmatpush.bf16.msra.mxu0 %v1672
          %1968 = vmatmul.bf16.gmra.mxu0 %v1124
          %v1969 = vpop.f32.mrf.mxu0
          %v1970 = vadd.f32 %v1957, %v1969
          %v1971 = vpop.f32.mrf.mxu0
          %1972 = vdwg.mxu0
          %1973 = vmatpush.bf16.msra.mxu0 %v1732
          %1974 = vmatpush.bf16.msra.mxu0 %v1728
          %1975 = vmatpush.bf16.msra.mxu0 %v1724
          %1976 = vmatpush.bf16.msra.mxu0 %v1720
          %1977 = vmatpush.bf16.msra.mxu0 %v1716
          %1978 = vmatpush.bf16.msra.mxu0 %v1712
          %1979 = vmatpush.bf16.msra.mxu0 %v1708
          %1980 = vmatpush.bf16.msra.mxu0 %v1704
          %1981 = vmatmul.bf16.gmra.mxu0 %v1125
          %v1982 = vpop.f32.mrf.mxu0
          %v1983 = vadd.f32 %v1970, %v1982
          %v1984 = vpop.f32.mrf.mxu0
          %1985 = vdwg.mxu0
          %1986 = vmatpush.bf16.msra.mxu0 %v1764
          %1987 = vmatpush.bf16.msra.mxu0 %v1760
          %1988 = vmatpush.bf16.msra.mxu0 %v1756
          %1989 = vmatpush.bf16.msra.mxu0 %v1752
          %1990 = vmatpush.bf16.msra.mxu0 %v1748
          %1991 = vmatpush.bf16.msra.mxu0 %v1744
          %1992 = vmatpush.bf16.msra.mxu0 %v1740
          %1993 = vmatpush.bf16.msra.mxu0 %v1736
          %1994 = vmatmul.bf16.gmra.mxu0 %v1126
          %v1995 = vpop.f32.mrf.mxu0
          %v1996 = vadd.f32 %v1983, %v1995
          %v1997 = vpop.f32.mrf.mxu0
          %1998 = vdwg.mxu0
          %1999 = vmatpush.bf16.msra.mxu0 %v1669
          %2000 = vmatpush.bf16.msra.mxu0 %v1665
          %2001 = vmatpush.bf16.msra.mxu0 %v1661
          %2002 = vmatpush.bf16.msra.mxu0 %v1657
          %2003 = vmatpush.bf16.msra.mxu0 %v1653
          %2004 = vmatpush.bf16.msra.mxu0 %v1649
          %2005 = vmatpush.bf16.msra.mxu0 %v1645
          %2006 = vmatpush.bf16.msra.mxu0 %v1641
          %2007 = vmatmul.bf16.gmra.mxu0 %v1123
          %v2008 = vpop.f32.mrf.mxu0
          %v2009 = vadd.f32 0.0, %v2008
          %v2010 = vpop.f32.mrf.mxu0
          %2011 = vdwg.mxu0
          %2012 = vmatpush.bf16.msra.mxu0 %v1701
          %2013 = vmatpush.bf16.msra.mxu0 %v1697
          %2014 = vmatpush.bf16.msra.mxu0 %v1693
          %2015 = vmatpush.bf16.msra.mxu0 %v1689
          %2016 = vmatpush.bf16.msra.mxu0 %v1685
          %2017 = vmatpush.bf16.msra.mxu0 %v1681
          %2018 = vmatpush.bf16.msra.mxu0 %v1677
          %2019 = vmatpush.bf16.msra.mxu0 %v1673
          %2020 = vmatmul.bf16.gmra.mxu0 %v1124
          %v2021 = vpop.f32.mrf.mxu0
          %v2022 = vadd.f32 %v2009, %v2021
          %v2023 = vpop.f32.mrf.mxu0
          %2024 = vdwg.mxu0
          %2025 = vmatpush.bf16.msra.mxu0 %v1733
          %2026 = vmatpush.bf16.msra.mxu0 %v1729
          %2027 = vmatpush.bf16.msra.mxu0 %v1725
          %2028 = vmatpush.bf16.msra.mxu0 %v1721
          %2029 = vmatpush.bf16.msra.mxu0 %v1717
          %2030 = vmatpush.bf16.msra.mxu0 %v1713
          %2031 = vmatpush.bf16.msra.mxu0 %v1709
          %2032 = vmatpush.bf16.msra.mxu0 %v1705
          %2033 = vmatmul.bf16.gmra.mxu0 %v1125
          %v2034 = vpop.f32.mrf.mxu0
          %v2035 = vadd.f32 %v2022, %v2034
          %v2036 = vpop.f32.mrf.mxu0
          %2037 = vdwg.mxu0
          %2038 = vmatpush.bf16.msra.mxu0 %v1765
          %2039 = vmatpush.bf16.msra.mxu0 %v1761
          %2040 = vmatpush.bf16.msra.mxu0 %v1757
          %2041 = vmatpush.bf16.msra.mxu0 %v1753
          %2042 = vmatpush.bf16.msra.mxu0 %v1749
          %2043 = vmatpush.bf16.msra.mxu0 %v1745
          %2044 = vmatpush.bf16.msra.mxu0 %v1741
          %2045 = vmatpush.bf16.msra.mxu0 %v1737
          %2046 = vmatmul.bf16.gmra.mxu0 %v1126
          %v2047 = vpop.f32.mrf.mxu0
          %v2048 = vadd.f32 %v2035, %v2047
          %v2049 = vpop.f32.mrf.mxu0
          %2050 = vdwg.mxu0
          %2051 = vmatpush.bf16.msra.mxu0 %v1670
          %2052 = vmatpush.bf16.msra.mxu0 %v1666
          %2053 = vmatpush.bf16.msra.mxu0 %v1662
          %2054 = vmatpush.bf16.msra.mxu0 %v1658
          %2055 = vmatpush.bf16.msra.mxu0 %v1654
          %2056 = vmatpush.bf16.msra.mxu0 %v1650
          %2057 = vmatpush.bf16.msra.mxu0 %v1646
          %2058 = vmatpush.bf16.msra.mxu0 %v1642
          %2059 = vmatmul.bf16.gmra.mxu0 %v1123
          %v2060 = vpop.f32.mrf.mxu0
          %v2061 = vadd.f32 0.0, %v2060
          %v2062 = vpop.f32.mrf.mxu0
          %2063 = vdwg.mxu0
          %2064 = vmatpush.bf16.msra.mxu0 %v1702
          %2065 = vmatpush.bf16.msra.mxu0 %v1698
          %2066 = vmatpush.bf16.msra.mxu0 %v1694
          %2067 = vmatpush.bf16.msra.mxu0 %v1690
          %2068 = vmatpush.bf16.msra.mxu0 %v1686
          %2069 = vmatpush.bf16.msra.mxu0 %v1682
          %2070 = vmatpush.bf16.msra.mxu0 %v1678
          %2071 = vmatpush.bf16.msra.mxu0 %v1674
          %2072 = vmatmul.bf16.gmra.mxu0 %v1124
          %v2073 = vpop.f32.mrf.mxu0
          %v2074 = vadd.f32 %v2061, %v2073
          %v2075 = vpop.f32.mrf.mxu0
          %2076 = vdwg.mxu0
          %2077 = vmatpush.bf16.msra.mxu0 %v1734
          %2078 = vmatpush.bf16.msra.mxu0 %v1730
          %2079 = vmatpush.bf16.msra.mxu0 %v1726
          %2080 = vmatpush.bf16.msra.mxu0 %v1722
          %2081 = vmatpush.bf16.msra.mxu0 %v1718
          %2082 = vmatpush.bf16.msra.mxu0 %v1714
          %2083 = vmatpush.bf16.msra.mxu0 %v1710
          %2084 = vmatpush.bf16.msra.mxu0 %v1706
          %2085 = vmatmul.bf16.gmra.mxu0 %v1125
          %v2086 = vpop.f32.mrf.mxu0
          %v2087 = vadd.f32 %v2074, %v2086
          %v2088 = vpop.f32.mrf.mxu0
          %2089 = vdwg.mxu0
          %2090 = vmatpush.bf16.msra.mxu0 %v1766
          %2091 = vmatpush.bf16.msra.mxu0 %v1762
          %2092 = vmatpush.bf16.msra.mxu0 %v1758
          %2093 = vmatpush.bf16.msra.mxu0 %v1754
          %2094 = vmatpush.bf16.msra.mxu0 %v1750
          %2095 = vmatpush.bf16.msra.mxu0 %v1746
          %2096 = vmatpush.bf16.msra.mxu0 %v1742
          %2097 = vmatpush.bf16.msra.mxu0 %v1738
          %2098 = vmatmul.bf16.gmra.mxu0 %v1126
          %v2099 = vpop.f32.mrf.mxu0
          %v2100 = vadd.f32 %v2087, %v2099
          %v2101 = vpop.f32.mrf.mxu0
          %2102 = vdwg.mxu0
          %v2103 = vld [vmem:[#allocation3] ss:$2 sm:$0xf]
          %v2104 = vrot.slane %v1944, 4
          %v2105 = vadd.f32 %v1944, %v2104
          %v2106 = vrot.slane %v2105, 2
          %v2107 = vadd.f32 %v2105, %v2106
          %v2108 = vrot.slane %v2107, 1
          %v2109 = vadd.f32 %v2107, %v2108
          %v2110 = vrot.slane %v1996, 4
          %v2111 = vadd.f32 %v1996, %v2110
          %v2112 = vrot.slane %v2111, 2
          %v2113 = vadd.f32 %v2111, %v2112
          %v2114 = vrot.slane %v2113, 1
          %v2115 = vadd.f32 %v2113, %v2114
          %v2116 = vrot.slane %v2048, 4
          %v2117 = vadd.f32 %v2048, %v2116
          %v2118 = vrot.slane %v2117, 2
          %v2119 = vadd.f32 %v2117, %v2118
          %v2120 = vrot.slane %v2119, 1
          %v2121 = vadd.f32 %v2119, %v2120
          %v2122 = vrot.slane %v2100, 4
          %v2123 = vadd.f32 %v2100, %v2122
          %v2124 = vrot.slane %v2123, 2
          %v2125 = vadd.f32 %v2123, %v2124
          %v2126 = vrot.slane %v2125, 1
          %v2127 = vadd.f32 %v2125, %v2126
          %v2132 = vrot.slane %v2115, 7
          %v2133 = vrot.slane %v2121, 6
          %v2134 = vrot.slane %v2127, 5
          %vm2135 = vcmask 1040384
          %v2136 = vsel %vm2135, %v2109, %v2132
          %vm2137 = vcmask 1042434
          %v2138 = vsel %vm2137, %v2133, %v2134
          %vm2139 = vcmask 1041408
          %v2140 = vsel %vm2139, %v2136, %v2138
          %v2142 = vadd.f32 %v2103, %v2140
          %v2143 = vlaneseq
          %vm2144 = vcmp.ge.s32.totalorder %v2143, 0
          %vm2145 = vcmp.lt.s32.totalorder %v2143, 512
          %vm2146 = vmand %vm2144, %vm2145
          %2147 = vst.msk [vmem:[#allocation3] ss:$2 sm:$0xf] %vm2146, %v2142
          %s2148 = scalar_lea.vmem [#allocation3], 1
          %v2149 = vld [vmem:[%s2148] ss:$2 sm:$0xf]
          %v2150 = vmul.f32 %v1944, %v1944
          %v2151 = vmul.f32 %v1996, %v1996
          %v2152 = vmul.f32 %v2048, %v2048
          %v2153 = vmul.f32 %v2100, %v2100
          %v2154 = vrot.slane %v2150, 4
          %v2155 = vadd.f32 %v2150, %v2154
          %v2156 = vrot.slane %v2155, 2
          %v2157 = vadd.f32 %v2155, %v2156
          %v2158 = vrot.slane %v2157, 1
          %v2159 = vadd.f32 %v2157, %v2158
          %v2160 = vrot.slane %v2151, 4
          %v2161 = vadd.f32 %v2151, %v2160
          %v2162 = vrot.slane %v2161, 2
          %v2163 = vadd.f32 %v2161, %v2162
          %v2164 = vrot.slane %v2163, 1
          %v2165 = vadd.f32 %v2163, %v2164
          %v2166 = vrot.slane %v2152, 4
          %v2167 = vadd.f32 %v2152, %v2166
          %v2168 = vrot.slane %v2167, 2
          %v2169 = vadd.f32 %v2167, %v2168
          %v2170 = vrot.slane %v2169, 1
          %v2171 = vadd.f32 %v2169, %v2170
          %v2172 = vrot.slane %v2153, 4
          %v2173 = vadd.f32 %v2153, %v2172
          %v2174 = vrot.slane %v2173, 2
          %v2175 = vadd.f32 %v2173, %v2174
          %v2176 = vrot.slane %v2175, 1
          %v2177 = vadd.f32 %v2175, %v2176
          %v2182 = vrot.slane %v2165, 7
          %v2183 = vrot.slane %v2171, 6
          %v2184 = vrot.slane %v2177, 5
          %v2185 = vsel %vm2135, %v2159, %v2182
          %v2186 = vsel %vm2137, %v2183, %v2184
          %v2187 = vsel %vm2139, %v2185, %v2186
          %v2189 = vadd.f32 %v2149, %v2187
          %2190 = vst.msk [vmem:[%s2148] ss:$2 sm:$0xf] %vm2146, %v2189
        $region100: #{tpu_custom_call.1} parent=55 // pred_fallthru
          _
        // Predicated region
        $region101: #{tpu_custom_call.1} parent=55 // pred_check
          %p2191 = pneg %p468
        $region102: #{tpu_custom_call.1} parent=55 // pred_check_branch
          %2193 = sbr.rel (%p2191) target = $region104
        $region103: #{tpu_custom_call.1} parent=55 // pred_region
          %v2194 = vld [vmem:[#allocation4] ss:$2 sm:$0xf]
          %v2196 = vperm.slane %v2194, 0
          %v2197 = vperm.slane %v2194, 1
          %v2198 = vperm.slane %v2194, 2
          %v2199 = vperm.slane %v2194, 3
          %v2204 = vmul.f32 %v915, %v2196
          %v2205 = vmul.f32 %v941, %v2197
          %v2206 = vmul.f32 %v967, %v2198
          %v2207 = vmul.f32 %v993, %v2199
          %s2208 = scalar_lea.vmem [#allocation4], 1
          %v2209 = vld [vmem:[%s2208] ss:$2 sm:$0xf]
          %v2211 = vperm.slane %v2209, 0
          %v2212 = vperm.slane %v2209, 1
          %v2213 = vperm.slane %v2209, 2
          %v2214 = vperm.slane %v2209, 3
          %v2219 = vadd.f32 %v2204, %v2211
          %v2220 = vadd.f32 %v2205, %v2212
          %v2221 = vadd.f32 %v2206, %v2213
          %v2222 = vadd.f32 %v2207, %v2214
          %v2223 = vmax.f32 %v2219, 0.0
          %v2224 = vmax.f32 %v2220, 0.0
          %v2225 = vmax.f32 %v2221, 0.0
          %v2226 = vmax.f32 %v2222, 0.0
          %v2227 = vpack.c.bf16 %v2223, %v2223
          %v2228 = vpack.c.bf16 %v2224, %v2224
          %v2229 = vpack.c.bf16 %v2225, %v2225
          %v2230 = vpack.c.bf16 %v2226, %v2226
          %v2231 = vld [vmem:[#allocation12] sm:$0xff]
          %v2232 = vld [vmem:[#allocation12 + $0x8] sm:$0xff]
          %v2233 = vld [vmem:[#allocation12 + $0x10] sm:$0xff]
          %v2234 = vld [vmem:[#allocation12 + $0x18] sm:$0xff]
          %v2235 = vld [vmem:[#allocation12 + $0x20] sm:$0xff]
          %v2236 = vld [vmem:[#allocation12 + $0x28] sm:$0xff]
          %v2237 = vld [vmem:[#allocation12 + $0x30] sm:$0xff]
          %v2238 = vld [vmem:[#allocation12 + $0x38] sm:$0xff]
          %v2239 = vld [vmem:[#allocation12 + $0x40] sm:$0xff]
          %v2240 = vld [vmem:[#allocation12 + $0x48] sm:$0xff]
          %v2241 = vld [vmem:[#allocation12 + $0x50] sm:$0xff]
          %v2242 = vld [vmem:[#allocation12 + $0x58] sm:$0xff]
          %v2243 = vld [vmem:[#allocation12 + $0x60] sm:$0xff]
          %v2244 = vld [vmem:[#allocation12 + $0x68] sm:$0xff]
          %v2245 = vld [vmem:[#allocation12 + $0x70] sm:$0xff]
          %v2246 = vld [vmem:[#allocation12 + $0x78] sm:$0xff]
          %v2247 = vld [vmem:[#allocation12 + $0x80] sm:$0xff]
          %v2248 = vld [vmem:[#allocation12 + $0x88] sm:$0xff]
          %v2249 = vld [vmem:[#allocation12 + $0x90] sm:$0xff]
          %v2250 = vld [vmem:[#allocation12 + $0x98] sm:$0xff]
          %v2251 = vld [vmem:[#allocation12 + $0xa0] sm:$0xff]
          %v2252 = vld [vmem:[#allocation12 + $0xa8] sm:$0xff]
          %v2253 = vld [vmem:[#allocation12 + $0xb0] sm:$0xff]
          %v2254 = vld [vmem:[#allocation12 + $0xb8] sm:$0xff]
          %v2255 = vld [vmem:[#allocation12 + $0xc0] sm:$0xff]
          %v2256 = vld [vmem:[#allocation12 + $0xc8] sm:$0xff]
          %v2257 = vld [vmem:[#allocation12 + $0xd0] sm:$0xff]
          %v2258 = vld [vmem:[#allocation12 + $0xd8] sm:$0xff]
          %v2259 = vld [vmem:[#allocation12 + $0xe0] sm:$0xff]
          %v2260 = vld [vmem:[#allocation12 + $0xe8] sm:$0xff]
          %v2261 = vld [vmem:[#allocation12 + $0xf0] sm:$0xff]
          %v2262 = vld [vmem:[#allocation12 + $0xf8] sm:$0xff]
          %v2263 = vld [vmem:[#allocation12 + $0x100] sm:$0xff]
          %v2264 = vld [vmem:[#allocation12 + $0x108] sm:$0xff]
          %v2265 = vld [vmem:[#allocation12 + $0x110] sm:$0xff]
          %v2266 = vld [vmem:[#allocation12 + $0x118] sm:$0xff]
          %v2267 = vld [vmem:[#allocation12 + $0x120] sm:$0xff]
          %v2268 = vld [vmem:[#allocation12 + $0x128] sm:$0xff]
          %v2269 = vld [vmem:[#allocation12 + $0x130] sm:$0xff]
          %v2270 = vld [vmem:[#allocation12 + $0x138] sm:$0xff]
          %v2271 = vld [vmem:[#allocation12 + $0x140] sm:$0xff]
          %v2272 = vld [vmem:[#allocation12 + $0x148] sm:$0xff]
          %v2273 = vld [vmem:[#allocation12 + $0x150] sm:$0xff]
          %v2274 = vld [vmem:[#allocation12 + $0x158] sm:$0xff]
          %v2275 = vld [vmem:[#allocation12 + $0x160] sm:$0xff]
          %v2276 = vld [vmem:[#allocation12 + $0x168] sm:$0xff]
          %v2277 = vld [vmem:[#allocation12 + $0x170] sm:$0xff]
          %v2278 = vld [vmem:[#allocation12 + $0x178] sm:$0xff]
          %v2279 = vld [vmem:[#allocation12 + $0x180] sm:$0xff]
          %v2280 = vld [vmem:[#allocation12 + $0x188] sm:$0xff]
          %v2281 = vld [vmem:[#allocation12 + $0x190] sm:$0xff]
          %v2282 = vld [vmem:[#allocation12 + $0x198] sm:$0xff]
          %v2283 = vld [vmem:[#allocation12 + $0x1a0] sm:$0xff]
          %v2284 = vld [vmem:[#allocation12 + $0x1a8] sm:$0xff]
          %v2285 = vld [vmem:[#allocation12 + $0x1b0] sm:$0xff]
          %v2286 = vld [vmem:[#allocation12 + $0x1b8] sm:$0xff]
          %v2287 = vld [vmem:[#allocation12 + $0x1c0] sm:$0xff]
          %v2288 = vld [vmem:[#allocation12 + $0x1c8] sm:$0xff]
          %v2289 = vld [vmem:[#allocation12 + $0x1d0] sm:$0xff]
          %v2290 = vld [vmem:[#allocation12 + $0x1d8] sm:$0xff]
          %v2291 = vld [vmem:[#allocation12 + $0x1e0] sm:$0xff]
          %v2292 = vld [vmem:[#allocation12 + $0x1e8] sm:$0xff]
          %v2293 = vld [vmem:[#allocation12 + $0x1f0] sm:$0xff]
          %v2294 = vld [vmem:[#allocation12 + $0x1f8] sm:$0xff]
          %v2295 = vld [vmem:[#allocation12 + $0x200] sm:$0xff]
          %v2296 = vld [vmem:[#allocation12 + $0x208] sm:$0xff]
          %v2297 = vld [vmem:[#allocation12 + $0x210] sm:$0xff]
          %v2298 = vld [vmem:[#allocation12 + $0x218] sm:$0xff]
          %v2299 = vld [vmem:[#allocation12 + $0x220] sm:$0xff]
          %v2300 = vld [vmem:[#allocation12 + $0x228] sm:$0xff]
          %v2301 = vld [vmem:[#allocation12 + $0x230] sm:$0xff]
          %v2302 = vld [vmem:[#allocation12 + $0x238] sm:$0xff]
          %v2303 = vld [vmem:[#allocation12 + $0x240] sm:$0xff]
          %v2304 = vld [vmem:[#allocation12 + $0x248] sm:$0xff]
          %v2305 = vld [vmem:[#allocation12 + $0x250] sm:$0xff]
          %v2306 = vld [vmem:[#allocation12 + $0x258] sm:$0xff]
          %v2307 = vld [vmem:[#allocation12 + $0x260] sm:$0xff]
          %v2308 = vld [vmem:[#allocation12 + $0x268] sm:$0xff]
          %v2309 = vld [vmem:[#allocation12 + $0x270] sm:$0xff]
          %v2310 = vld [vmem:[#allocation12 + $0x278] sm:$0xff]
          %v2311 = vld [vmem:[#allocation12 + $0x280] sm:$0xff]
          %v2312 = vld [vmem:[#allocation12 + $0x288] sm:$0xff]
          %v2313 = vld [vmem:[#allocation12 + $0x290] sm:$0xff]
          %v2314 = vld [vmem:[#allocation12 + $0x298] sm:$0xff]
          %v2315 = vld [vmem:[#allocation12 + $0x2a0] sm:$0xff]
          %v2316 = vld [vmem:[#allocation12 + $0x2a8] sm:$0xff]
          %v2317 = vld [vmem:[#allocation12 + $0x2b0] sm:$0xff]
          %v2318 = vld [vmem:[#allocation12 + $0x2b8] sm:$0xff]
          %v2319 = vld [vmem:[#allocation12 + $0x2c0] sm:$0xff]
          %v2320 = vld [vmem:[#allocation12 + $0x2c8] sm:$0xff]
          %v2321 = vld [vmem:[#allocation12 + $0x2d0] sm:$0xff]
          %v2322 = vld [vmem:[#allocation12 + $0x2d8] sm:$0xff]
          %v2323 = vld [vmem:[#allocation12 + $0x2e0] sm:$0xff]
          %v2324 = vld [vmem:[#allocation12 + $0x2e8] sm:$0xff]
          %v2325 = vld [vmem:[#allocation12 + $0x2f0] sm:$0xff]
          %v2326 = vld [vmem:[#allocation12 + $0x2f8] sm:$0xff]
          %v2327 = vld [vmem:[#allocation12 + $0x300] sm:$0xff]
          %v2328 = vld [vmem:[#allocation12 + $0x308] sm:$0xff]
          %v2329 = vld [vmem:[#allocation12 + $0x310] sm:$0xff]
          %v2330 = vld [vmem:[#allocation12 + $0x318] sm:$0xff]
          %v2331 = vld [vmem:[#allocation12 + $0x320] sm:$0xff]
          %v2332 = vld [vmem:[#allocation12 + $0x328] sm:$0xff]
          %v2333 = vld [vmem:[#allocation12 + $0x330] sm:$0xff]
          %v2334 = vld [vmem:[#allocation12 + $0x338] sm:$0xff]
          %v2335 = vld [vmem:[#allocation12 + $0x340] sm:$0xff]
          %v2336 = vld [vmem:[#allocation12 + $0x348] sm:$0xff]
          %v2337 = vld [vmem:[#allocation12 + $0x350] sm:$0xff]
          %v2338 = vld [vmem:[#allocation12 + $0x358] sm:$0xff]
          %v2339 = vld [vmem:[#allocation12 + $0x360] sm:$0xff]
          %v2340 = vld [vmem:[#allocation12 + $0x368] sm:$0xff]
          %v2341 = vld [vmem:[#allocation12 + $0x370] sm:$0xff]
          %v2342 = vld [vmem:[#allocation12 + $0x378] sm:$0xff]
          %v2343 = vld [vmem:[#allocation12 + $0x380] sm:$0xff]
          %v2344 = vld [vmem:[#allocation12 + $0x388] sm:$0xff]
          %v2345 = vld [vmem:[#allocation12 + $0x390] sm:$0xff]
          %v2346 = vld [vmem:[#allocation12 + $0x398] sm:$0xff]
          %v2347 = vld [vmem:[#allocation12 + $0x3a0] sm:$0xff]
          %v2348 = vld [vmem:[#allocation12 + $0x3a8] sm:$0xff]
          %v2349 = vld [vmem:[#allocation12 + $0x3b0] sm:$0xff]
          %v2350 = vld [vmem:[#allocation12 + $0x3b8] sm:$0xff]
          %v2351 = vld [vmem:[#allocation12 + $0x3c0] sm:$0xff]
          %v2352 = vld [vmem:[#allocation12 + $0x3c8] sm:$0xff]
          %v2353 = vld [vmem:[#allocation12 + $0x3d0] sm:$0xff]
          %v2354 = vld [vmem:[#allocation12 + $0x3d8] sm:$0xff]
          %v2355 = vld [vmem:[#allocation12 + $0x3e0] sm:$0xff]
          %v2356 = vld [vmem:[#allocation12 + $0x3e8] sm:$0xff]
          %v2357 = vld [vmem:[#allocation12 + $0x3f0] sm:$0xff]
          %v2358 = vld [vmem:[#allocation12 + $0x3f8] sm:$0xff]
          %v2487 = vunpack.c.l.b16 %v2231
          %v2488 = vunpack.c.h.b16 %v2231
          %v2489 = vunpack.c.l.b16 %v2232
          %v2490 = vunpack.c.h.b16 %v2232
          %v2491 = vunpack.c.l.b16 %v2233
          %v2492 = vunpack.c.h.b16 %v2233
          %v2493 = vunpack.c.l.b16 %v2234
          %v2494 = vunpack.c.h.b16 %v2234
          %v2495 = vunpack.c.l.b16 %v2235
          %v2496 = vunpack.c.h.b16 %v2235
          %v2497 = vunpack.c.l.b16 %v2236
          %v2498 = vunpack.c.h.b16 %v2236
          %v2499 = vunpack.c.l.b16 %v2237
          %v2500 = vunpack.c.h.b16 %v2237
          %v2501 = vunpack.c.l.b16 %v2238
          %v2502 = vunpack.c.h.b16 %v2238
          %v2503 = vunpack.c.l.b16 %v2239
          %v2504 = vunpack.c.h.b16 %v2239
          %v2505 = vunpack.c.l.b16 %v2240
          %v2506 = vunpack.c.h.b16 %v2240
          %v2507 = vunpack.c.l.b16 %v2241
          %v2508 = vunpack.c.h.b16 %v2241
          %v2509 = vunpack.c.l.b16 %v2242
          %v2510 = vunpack.c.h.b16 %v2242
          %v2511 = vunpack.c.l.b16 %v2243
          %v2512 = vunpack.c.h.b16 %v2243
          %v2513 = vunpack.c.l.b16 %v2244
          %v2514 = vunpack.c.h.b16 %v2244
          %v2515 = vunpack.c.l.b16 %v2245
          %v2516 = vunpack.c.h.b16 %v2245
          %v2517 = vunpack.c.l.b16 %v2246
          %v2518 = vunpack.c.h.b16 %v2246
          %v2519 = vunpack.c.l.b16 %v2247
          %v2520 = vunpack.c.h.b16 %v2247
          %v2521 = vunpack.c.l.b16 %v2248
          %v2522 = vunpack.c.h.b16 %v2248
          %v2523 = vunpack.c.l.b16 %v2249
          %v2524 = vunpack.c.h.b16 %v2249
          %v2525 = vunpack.c.l.b16 %v2250
          %v2526 = vunpack.c.h.b16 %v2250
          %v2527 = vunpack.c.l.b16 %v2251
          %v2528 = vunpack.c.h.b16 %v2251
          %v2529 = vunpack.c.l.b16 %v2252
          %v2530 = vunpack.c.h.b16 %v2252
          %v2531 = vunpack.c.l.b16 %v2253
          %v2532 = vunpack.c.h.b16 %v2253
          %v2533 = vunpack.c.l.b16 %v2254
          %v2534 = vunpack.c.h.b16 %v2254
          %v2535 = vunpack.c.l.b16 %v2255
          %v2536 = vunpack.c.h.b16 %v2255
          %v2537 = vunpack.c.l.b16 %v2256
          %v2538 = vunpack.c.h.b16 %v2256
          %v2539 = vunpack.c.l.b16 %v2257
          %v2540 = vunpack.c.h.b16 %v2257
          %v2541 = vunpack.c.l.b16 %v2258
          %v2542 = vunpack.c.h.b16 %v2258
          %v2543 = vunpack.c.l.b16 %v2259
          %v2544 = vunpack.c.h.b16 %v2259
          %v2545 = vunpack.c.l.b16 %v2260
          %v2546 = vunpack.c.h.b16 %v2260
          %v2547 = vunpack.c.l.b16 %v2261
          %v2548 = vunpack.c.h.b16 %v2261
          %v2549 = vunpack.c.l.b16 %v2262
          %v2550 = vunpack.c.h.b16 %v2262
          %v2551 = vunpack.c.l.b16 %v2263
          %v2552 = vunpack.c.h.b16 %v2263
          %v2553 = vunpack.c.l.b16 %v2264
          %v2554 = vunpack.c.h.b16 %v2264
          %v2555 = vunpack.c.l.b16 %v2265
          %v2556 = vunpack.c.h.b16 %v2265
          %v2557 = vunpack.c.l.b16 %v2266
          %v2558 = vunpack.c.h.b16 %v2266
          %v2559 = vunpack.c.l.b16 %v2267
          %v2560 = vunpack.c.h.b16 %v2267
          %v2561 = vunpack.c.l.b16 %v2268
          %v2562 = vunpack.c.h.b16 %v2268
          %v2563 = vunpack.c.l.b16 %v2269
          %v2564 = vunpack.c.h.b16 %v2269
          %v2565 = vunpack.c.l.b16 %v2270
          %v2566 = vunpack.c.h.b16 %v2270
          %v2567 = vunpack.c.l.b16 %v2271
          %v2568 = vunpack.c.h.b16 %v2271
          %v2569 = vunpack.c.l.b16 %v2272
          %v2570 = vunpack.c.h.b16 %v2272
          %v2571 = vunpack.c.l.b16 %v2273
          %v2572 = vunpack.c.h.b16 %v2273
          %v2573 = vunpack.c.l.b16 %v2274
          %v2574 = vunpack.c.h.b16 %v2274
          %v2575 = vunpack.c.l.b16 %v2275
          %v2576 = vunpack.c.h.b16 %v2275
          %v2577 = vunpack.c.l.b16 %v2276
          %v2578 = vunpack.c.h.b16 %v2276
          %v2579 = vunpack.c.l.b16 %v2277
          %v2580 = vunpack.c.h.b16 %v2277
          %v2581 = vunpack.c.l.b16 %v2278
          %v2582 = vunpack.c.h.b16 %v2278
          %v2583 = vunpack.c.l.b16 %v2279
          %v2584 = vunpack.c.h.b16 %v2279
          %v2585 = vunpack.c.l.b16 %v2280
          %v2586 = vunpack.c.h.b16 %v2280
          %v2587 = vunpack.c.l.b16 %v2281
          %v2588 = vunpack.c.h.b16 %v2281
          %v2589 = vunpack.c.l.b16 %v2282
          %v2590 = vunpack.c.h.b16 %v2282
          %v2591 = vunpack.c.l.b16 %v2283
          %v2592 = vunpack.c.h.b16 %v2283
          %v2593 = vunpack.c.l.b16 %v2284
          %v2594 = vunpack.c.h.b16 %v2284
          %v2595 = vunpack.c.l.b16 %v2285
          %v2596 = vunpack.c.h.b16 %v2285
          %v2597 = vunpack.c.l.b16 %v2286
          %v2598 = vunpack.c.h.b16 %v2286
          %v2599 = vunpack.c.l.b16 %v2287
          %v2600 = vunpack.c.h.b16 %v2287
          %v2601 = vunpack.c.l.b16 %v2288
          %v2602 = vunpack.c.h.b16 %v2288
          %v2603 = vunpack.c.l.b16 %v2289
          %v2604 = vunpack.c.h.b16 %v2289
          %v2605 = vunpack.c.l.b16 %v2290
          %v2606 = vunpack.c.h.b16 %v2290
          %v2607 = vunpack.c.l.b16 %v2291
          %v2608 = vunpack.c.h.b16 %v2291
          %v2609 = vunpack.c.l.b16 %v2292
          %v2610 = vunpack.c.h.b16 %v2292
          %v2611 = vunpack.c.l.b16 %v2293
          %v2612 = vunpack.c.h.b16 %v2293
          %v2613 = vunpack.c.l.b16 %v2294
          %v2614 = vunpack.c.h.b16 %v2294
          %v2615 = vunpack.c.l.b16 %v2295
          %v2616 = vunpack.c.h.b16 %v2295
          %v2617 = vunpack.c.l.b16 %v2296
          %v2618 = vunpack.c.h.b16 %v2296
          %v2619 = vunpack.c.l.b16 %v2297
          %v2620 = vunpack.c.h.b16 %v2297
          %v2621 = vunpack.c.l.b16 %v2298
          %v2622 = vunpack.c.h.b16 %v2298
          %v2623 = vunpack.c.l.b16 %v2299
          %v2624 = vunpack.c.h.b16 %v2299
          %v2625 = vunpack.c.l.b16 %v2300
          %v2626 = vunpack.c.h.b16 %v2300
          %v2627 = vunpack.c.l.b16 %v2301
          %v2628 = vunpack.c.h.b16 %v2301
          %v2629 = vunpack.c.l.b16 %v2302
          %v2630 = vunpack.c.h.b16 %v2302
          %v2631 = vunpack.c.l.b16 %v2303
          %v2632 = vunpack.c.h.b16 %v2303
          %v2633 = vunpack.c.l.b16 %v2304
          %v2634 = vunpack.c.h.b16 %v2304
          %v2635 = vunpack.c.l.b16 %v2305
          %v2636 = vunpack.c.h.b16 %v2305
          %v2637 = vunpack.c.l.b16 %v2306
          %v2638 = vunpack.c.h.b16 %v2306
          %v2639 = vunpack.c.l.b16 %v2307
          %v2640 = vunpack.c.h.b16 %v2307
          %v2641 = vunpack.c.l.b16 %v2308
          %v2642 = vunpack.c.h.b16 %v2308
          %v2643 = vunpack.c.l.b16 %v2309
          %v2644 = vunpack.c.h.b16 %v2309
          %v2645 = vunpack.c.l.b16 %v2310
          %v2646 = vunpack.c.h.b16 %v2310
          %v2647 = vunpack.c.l.b16 %v2311
          %v2648 = vunpack.c.h.b16 %v2311
          %v2649 = vunpack.c.l.b16 %v2312
          %v2650 = vunpack.c.h.b16 %v2312
          %v2651 = vunpack.c.l.b16 %v2313
          %v2652 = vunpack.c.h.b16 %v2313
          %v2653 = vunpack.c.l.b16 %v2314
          %v2654 = vunpack.c.h.b16 %v2314
          %v2655 = vunpack.c.l.b16 %v2315
          %v2656 = vunpack.c.h.b16 %v2315
          %v2657 = vunpack.c.l.b16 %v2316
          %v2658 = vunpack.c.h.b16 %v2316
          %v2659 = vunpack.c.l.b16 %v2317
          %v2660 = vunpack.c.h.b16 %v2317
          %v2661 = vunpack.c.l.b16 %v2318
          %v2662 = vunpack.c.h.b16 %v2318
          %v2663 = vunpack.c.l.b16 %v2319
          %v2664 = vunpack.c.h.b16 %v2319
          %v2665 = vunpack.c.l.b16 %v2320
          %v2666 = vunpack.c.h.b16 %v2320
          %v2667 = vunpack.c.l.b16 %v2321
          %v2668 = vunpack.c.h.b16 %v2321
          %v2669 = vunpack.c.l.b16 %v2322
          %v2670 = vunpack.c.h.b16 %v2322
          %v2671 = vunpack.c.l.b16 %v2323
          %v2672 = vunpack.c.h.b16 %v2323
          %v2673 = vunpack.c.l.b16 %v2324
          %v2674 = vunpack.c.h.b16 %v2324
          %v2675 = vunpack.c.l.b16 %v2325
          %v2676 = vunpack.c.h.b16 %v2325
          %v2677 = vunpack.c.l.b16 %v2326
          %v2678 = vunpack.c.h.b16 %v2326
          %v2679 = vunpack.c.l.b16 %v2327
          %v2680 = vunpack.c.h.b16 %v2327
          %v2681 = vunpack.c.l.b16 %v2328
          %v2682 = vunpack.c.h.b16 %v2328
          %v2683 = vunpack.c.l.b16 %v2329
          %v2684 = vunpack.c.h.b16 %v2329
          %v2685 = vunpack.c.l.b16 %v2330
          %v2686 = vunpack.c.h.b16 %v2330
          %v2687 = vunpack.c.l.b16 %v2331
          %v2688 = vunpack.c.h.b16 %v2331
          %v2689 = vunpack.c.l.b16 %v2332
          %v2690 = vunpack.c.h.b16 %v2332
          %v2691 = vunpack.c.l.b16 %v2333
          %v2692 = vunpack.c.h.b16 %v2333
          %v2693 = vunpack.c.l.b16 %v2334
          %v2694 = vunpack.c.h.b16 %v2334
          %v2695 = vunpack.c.l.b16 %v2335
          %v2696 = vunpack.c.h.b16 %v2335
          %v2697 = vunpack.c.l.b16 %v2336
          %v2698 = vunpack.c.h.b16 %v2336
          %v2699 = vunpack.c.l.b16 %v2337
          %v2700 = vunpack.c.h.b16 %v2337
          %v2701 = vunpack.c.l.b16 %v2338
          %v2702 = vunpack.c.h.b16 %v2338
          %v2703 = vunpack.c.l.b16 %v2339
          %v2704 = vunpack.c.h.b16 %v2339
          %v2705 = vunpack.c.l.b16 %v2340
          %v2706 = vunpack.c.h.b16 %v2340
          %v2707 = vunpack.c.l.b16 %v2341
          %v2708 = vunpack.c.h.b16 %v2341
          %v2709 = vunpack.c.l.b16 %v2342
          %v2710 = vunpack.c.h.b16 %v2342
          %v2711 = vunpack.c.l.b16 %v2343
          %v2712 = vunpack.c.h.b16 %v2343
          %v2713 = vunpack.c.l.b16 %v2344
          %v2714 = vunpack.c.h.b16 %v2344
          %v2715 = vunpack.c.l.b16 %v2345
          %v2716 = vunpack.c.h.b16 %v2345
          %v2717 = vunpack.c.l.b16 %v2346
          %v2718 = vunpack.c.h.b16 %v2346
          %v2719 = vunpack.c.l.b16 %v2347
          %v2720 = vunpack.c.h.b16 %v2347
          %v2721 = vunpack.c.l.b16 %v2348
          %v2722 = vunpack.c.h.b16 %v2348
          %v2723 = vunpack.c.l.b16 %v2349
          %v2724 = vunpack.c.h.b16 %v2349
          %v2725 = vunpack.c.l.b16 %v2350
          %v2726 = vunpack.c.h.b16 %v2350
          %v2727 = vunpack.c.l.b16 %v2351
          %v2728 = vunpack.c.h.b16 %v2351
          %v2729 = vunpack.c.l.b16 %v2352
          %v2730 = vunpack.c.h.b16 %v2352
          %v2731 = vunpack.c.l.b16 %v2353
          %v2732 = vunpack.c.h.b16 %v2353
          %v2733 = vunpack.c.l.b16 %v2354
          %v2734 = vunpack.c.h.b16 %v2354
          %v2735 = vunpack.c.l.b16 %v2355
          %v2736 = vunpack.c.h.b16 %v2355
          %v2737 = vunpack.c.l.b16 %v2356
          %v2738 = vunpack.c.h.b16 %v2356
          %v2739 = vunpack.c.l.b16 %v2357
          %v2740 = vunpack.c.h.b16 %v2357
          %v2741 = vunpack.c.l.b16 %v2358
          %v2742 = vunpack.c.h.b16 %v2358
          %v2743 = vpack.c.b16 %v2491, %v2487
          %v2744 = vpack.c.b16 %v2492, %v2488
          %v2745 = vpack.c.b16 %v2493, %v2489
          %v2746 = vpack.c.b16 %v2494, %v2490
          %v2747 = vpack.c.b16 %v2499, %v2495
          %v2748 = vpack.c.b16 %v2500, %v2496
          %v2749 = vpack.c.b16 %v2501, %v2497
          %v2750 = vpack.c.b16 %v2502, %v2498
          %v2751 = vpack.c.b16 %v2507, %v2503
          %v2752 = vpack.c.b16 %v2508, %v2504
          %v2753 = vpack.c.b16 %v2509, %v2505
          %v2754 = vpack.c.b16 %v2510, %v2506
          %v2755 = vpack.c.b16 %v2515, %v2511
          %v2756 = vpack.c.b16 %v2516, %v2512
          %v2757 = vpack.c.b16 %v2517, %v2513
          %v2758 = vpack.c.b16 %v2518, %v2514
          %v2759 = vpack.c.b16 %v2523, %v2519
          %v2760 = vpack.c.b16 %v2524, %v2520
          %v2761 = vpack.c.b16 %v2525, %v2521
          %v2762 = vpack.c.b16 %v2526, %v2522
          %v2763 = vpack.c.b16 %v2531, %v2527
          %v2764 = vpack.c.b16 %v2532, %v2528
          %v2765 = vpack.c.b16 %v2533, %v2529
          %v2766 = vpack.c.b16 %v2534, %v2530
          %v2767 = vpack.c.b16 %v2539, %v2535
          %v2768 = vpack.c.b16 %v2540, %v2536
          %v2769 = vpack.c.b16 %v2541, %v2537
          %v2770 = vpack.c.b16 %v2542, %v2538
          %v2771 = vpack.c.b16 %v2547, %v2543
          %v2772 = vpack.c.b16 %v2548, %v2544
          %v2773 = vpack.c.b16 %v2549, %v2545
          %v2774 = vpack.c.b16 %v2550, %v2546
          %v2775 = vpack.c.b16 %v2555, %v2551
          %v2776 = vpack.c.b16 %v2556, %v2552
          %v2777 = vpack.c.b16 %v2557, %v2553
          %v2778 = vpack.c.b16 %v2558, %v2554
          %v2779 = vpack.c.b16 %v2563, %v2559
          %v2780 = vpack.c.b16 %v2564, %v2560
          %v2781 = vpack.c.b16 %v2565, %v2561
          %v2782 = vpack.c.b16 %v2566, %v2562
          %v2783 = vpack.c.b16 %v2571, %v2567
          %v2784 = vpack.c.b16 %v2572, %v2568
          %v2785 = vpack.c.b16 %v2573, %v2569
          %v2786 = vpack.c.b16 %v2574, %v2570
          %v2787 = vpack.c.b16 %v2579, %v2575
          %v2788 = vpack.c.b16 %v2580, %v2576
          %v2789 = vpack.c.b16 %v2581, %v2577
          %v2790 = vpack.c.b16 %v2582, %v2578
          %v2791 = vpack.c.b16 %v2587, %v2583
          %v2792 = vpack.c.b16 %v2588, %v2584
          %v2793 = vpack.c.b16 %v2589, %v2585
          %v2794 = vpack.c.b16 %v2590, %v2586
          %v2795 = vpack.c.b16 %v2595, %v2591
          %v2796 = vpack.c.b16 %v2596, %v2592
          %v2797 = vpack.c.b16 %v2597, %v2593
          %v2798 = vpack.c.b16 %v2598, %v2594
          %v2799 = vpack.c.b16 %v2603, %v2599
          %v2800 = vpack.c.b16 %v2604, %v2600
          %v2801 = vpack.c.b16 %v2605, %v2601
          %v2802 = vpack.c.b16 %v2606, %v2602
          %v2803 = vpack.c.b16 %v2611, %v2607
          %v2804 = vpack.c.b16 %v2612, %v2608
          %v2805 = vpack.c.b16 %v2613, %v2609
          %v2806 = vpack.c.b16 %v2614, %v2610
          %v2807 = vpack.c.b16 %v2619, %v2615
          %v2808 = vpack.c.b16 %v2620, %v2616
          %v2809 = vpack.c.b16 %v2621, %v2617
          %v2810 = vpack.c.b16 %v2622, %v2618
          %v2811 = vpack.c.b16 %v2627, %v2623
          %v2812 = vpack.c.b16 %v2628, %v2624
          %v2813 = vpack.c.b16 %v2629, %v2625
          %v2814 = vpack.c.b16 %v2630, %v2626
          %v2815 = vpack.c.b16 %v2635, %v2631
          %v2816 = vpack.c.b16 %v2636, %v2632
          %v2817 = vpack.c.b16 %v2637, %v2633
          %v2818 = vpack.c.b16 %v2638, %v2634
          %v2819 = vpack.c.b16 %v2643, %v2639
          %v2820 = vpack.c.b16 %v2644, %v2640
          %v2821 = vpack.c.b16 %v2645, %v2641
          %v2822 = vpack.c.b16 %v2646, %v2642
          %v2823 = vpack.c.b16 %v2651, %v2647
          %v2824 = vpack.c.b16 %v2652, %v2648
          %v2825 = vpack.c.b16 %v2653, %v2649
          %v2826 = vpack.c.b16 %v2654, %v2650
          %v2827 = vpack.c.b16 %v2659, %v2655
          %v2828 = vpack.c.b16 %v2660, %v2656
          %v2829 = vpack.c.b16 %v2661, %v2657
          %v2830 = vpack.c.b16 %v2662, %v2658
          %v2831 = vpack.c.b16 %v2667, %v2663
          %v2832 = vpack.c.b16 %v2668, %v2664
          %v2833 = vpack.c.b16 %v2669, %v2665
          %v2834 = vpack.c.b16 %v2670, %v2666
          %v2835 = vpack.c.b16 %v2675, %v2671
          %v2836 = vpack.c.b16 %v2676, %v2672
          %v2837 = vpack.c.b16 %v2677, %v2673
          %v2838 = vpack.c.b16 %v2678, %v2674
          %v2839 = vpack.c.b16 %v2683, %v2679
          %v2840 = vpack.c.b16 %v2684, %v2680
          %v2841 = vpack.c.b16 %v2685, %v2681
          %v2842 = vpack.c.b16 %v2686, %v2682
          %v2843 = vpack.c.b16 %v2691, %v2687
          %v2844 = vpack.c.b16 %v2692, %v2688
          %v2845 = vpack.c.b16 %v2693, %v2689
          %v2846 = vpack.c.b16 %v2694, %v2690
          %v2847 = vpack.c.b16 %v2699, %v2695
          %v2848 = vpack.c.b16 %v2700, %v2696
          %v2849 = vpack.c.b16 %v2701, %v2697
          %v2850 = vpack.c.b16 %v2702, %v2698
          %v2851 = vpack.c.b16 %v2707, %v2703
          %v2852 = vpack.c.b16 %v2708, %v2704
          %v2853 = vpack.c.b16 %v2709, %v2705
          %v2854 = vpack.c.b16 %v2710, %v2706
          %v2855 = vpack.c.b16 %v2715, %v2711
          %v2856 = vpack.c.b16 %v2716, %v2712
          %v2857 = vpack.c.b16 %v2717, %v2713
          %v2858 = vpack.c.b16 %v2718, %v2714
          %v2859 = vpack.c.b16 %v2723, %v2719
          %v2860 = vpack.c.b16 %v2724, %v2720
          %v2861 = vpack.c.b16 %v2725, %v2721
          %v2862 = vpack.c.b16 %v2726, %v2722
          %v2863 = vpack.c.b16 %v2731, %v2727
          %v2864 = vpack.c.b16 %v2732, %v2728
          %v2865 = vpack.c.b16 %v2733, %v2729
          %v2866 = vpack.c.b16 %v2734, %v2730
          %v2867 = vpack.c.b16 %v2739, %v2735
          %v2868 = vpack.c.b16 %v2740, %v2736
          %v2869 = vpack.c.b16 %v2741, %v2737
          %v2870 = vpack.c.b16 %v2742, %v2738
          %2999 = vmatpush.bf16.msra.mxu0 %v2771
          %3000 = vmatpush.bf16.msra.mxu0 %v2767
          %3001 = vmatpush.bf16.msra.mxu0 %v2763
          %3002 = vmatpush.bf16.msra.mxu0 %v2759
          %3003 = vmatpush.bf16.msra.mxu0 %v2755
          %3004 = vmatpush.bf16.msra.mxu0 %v2751
          %3005 = vmatpush.bf16.msra.mxu0 %v2747
          %3006 = vmatpush.bf16.msra.mxu0 %v2743
          %3007 = vmatmul.bf16.gmra.mxu0 %v2227
          %v3008 = vpop.f32.mrf.mxu0
          %v3009 = vadd.f32 0.0, %v3008
          %v3010 = vpop.f32.mrf.mxu0
          %3011 = vdwg.mxu0
          %3012 = vmatpush.bf16.msra.mxu0 %v2803
          %3013 = vmatpush.bf16.msra.mxu0 %v2799
          %3014 = vmatpush.bf16.msra.mxu0 %v2795
          %3015 = vmatpush.bf16.msra.mxu0 %v2791
          %3016 = vmatpush.bf16.msra.mxu0 %v2787
          %3017 = vmatpush.bf16.msra.mxu0 %v2783
          %3018 = vmatpush.bf16.msra.mxu0 %v2779
          %3019 = vmatpush.bf16.msra.mxu0 %v2775
          %3020 = vmatmul.bf16.gmra.mxu0 %v2228
          %v3021 = vpop.f32.mrf.mxu0
          %v3022 = vadd.f32 %v3009, %v3021
          %v3023 = vpop.f32.mrf.mxu0
          %3024 = vdwg.mxu0
          %3025 = vmatpush.bf16.msra.mxu0 %v2835
          %3026 = vmatpush.bf16.msra.mxu0 %v2831
          %3027 = vmatpush.bf16.msra.mxu0 %v2827
          %3028 = vmatpush.bf16.msra.mxu0 %v2823
          %3029 = vmatpush.bf16.msra.mxu0 %v2819
          %3030 = vmatpush.bf16.msra.mxu0 %v2815
          %3031 = vmatpush.bf16.msra.mxu0 %v2811
          %3032 = vmatpush.bf16.msra.mxu0 %v2807
          %3033 = vmatmul.bf16.gmra.mxu0 %v2229
          %v3034 = vpop.f32.mrf.mxu0
          %v3035 = vadd.f32 %v3022, %v3034
          %v3036 = vpop.f32.mrf.mxu0
          %3037 = vdwg.mxu0
          %3038 = vmatpush.bf16.msra.mxu0 %v2867
          %3039 = vmatpush.bf16.msra.mxu0 %v2863
          %3040 = vmatpush.bf16.msra.mxu0 %v2859
          %3041 = vmatpush.bf16.msra.mxu0 %v2855
          %3042 = vmatpush.bf16.msra.mxu0 %v2851
          %3043 = vmatpush.bf16.msra.mxu0 %v2847
          %3044 = vmatpush.bf16.msra.mxu0 %v2843
          %3045 = vmatpush.bf16.msra.mxu0 %v2839
          %3046 = vmatmul.bf16.gmra.mxu0 %v2230
          %v3047 = vpop.f32.mrf.mxu0
          %v3048 = vadd.f32 %v3035, %v3047
          %v3049 = vpop.f32.mrf.mxu0
          %3050 = vdwg.mxu0
          %3051 = vmatpush.bf16.msra.mxu0 %v2772
          %3052 = vmatpush.bf16.msra.mxu0 %v2768
          %3053 = vmatpush.bf16.msra.mxu0 %v2764
          %3054 = vmatpush.bf16.msra.mxu0 %v2760
          %3055 = vmatpush.bf16.msra.mxu0 %v2756
          %3056 = vmatpush.bf16.msra.mxu0 %v2752
          %3057 = vmatpush.bf16.msra.mxu0 %v2748
          %3058 = vmatpush.bf16.msra.mxu0 %v2744
          %3059 = vmatmul.bf16.gmra.mxu0 %v2227
          %v3060 = vpop.f32.mrf.mxu0
          %v3061 = vadd.f32 0.0, %v3060
          %v3062 = vpop.f32.mrf.mxu0
          %3063 = vdwg.mxu0
          %3064 = vmatpush.bf16.msra.mxu0 %v2804
          %3065 = vmatpush.bf16.msra.mxu0 %v2800
          %3066 = vmatpush.bf16.msra.mxu0 %v2796
          %3067 = vmatpush.bf16.msra.mxu0 %v2792
          %3068 = vmatpush.bf16.msra.mxu0 %v2788
          %3069 = vmatpush.bf16.msra.mxu0 %v2784
          %3070 = vmatpush.bf16.msra.mxu0 %v2780
          %3071 = vmatpush.bf16.msra.mxu0 %v2776
          %3072 = vmatmul.bf16.gmra.mxu0 %v2228
          %v3073 = vpop.f32.mrf.mxu0
          %v3074 = vadd.f32 %v3061, %v3073
          %v3075 = vpop.f32.mrf.mxu0
          %3076 = vdwg.mxu0
          %3077 = vmatpush.bf16.msra.mxu0 %v2836
          %3078 = vmatpush.bf16.msra.mxu0 %v2832
          %3079 = vmatpush.bf16.msra.mxu0 %v2828
          %3080 = vmatpush.bf16.msra.mxu0 %v2824
          %3081 = vmatpush.bf16.msra.mxu0 %v2820
          %3082 = vmatpush.bf16.msra.mxu0 %v2816
          %3083 = vmatpush.bf16.msra.mxu0 %v2812
          %3084 = vmatpush.bf16.msra.mxu0 %v2808
          %3085 = vmatmul.bf16.gmra.mxu0 %v2229
          %v3086 = vpop.f32.mrf.mxu0
          %v3087 = vadd.f32 %v3074, %v3086
          %v3088 = vpop.f32.mrf.mxu0
          %3089 = vdwg.mxu0
          %3090 = vmatpush.bf16.msra.mxu0 %v2868
          %3091 = vmatpush.bf16.msra.mxu0 %v2864
          %3092 = vmatpush.bf16.msra.mxu0 %v2860
          %3093 = vmatpush.bf16.msra.mxu0 %v2856
          %3094 = vmatpush.bf16.msra.mxu0 %v2852
          %3095 = vmatpush.bf16.msra.mxu0 %v2848
          %3096 = vmatpush.bf16.msra.mxu0 %v2844
          %3097 = vmatpush.bf16.msra.mxu0 %v2840
          %3098 = vmatmul.bf16.gmra.mxu0 %v2230
          %v3099 = vpop.f32.mrf.mxu0
          %v3100 = vadd.f32 %v3087, %v3099
          %v3101 = vpop.f32.mrf.mxu0
          %3102 = vdwg.mxu0
          %3103 = vmatpush.bf16.msra.mxu0 %v2773
          %3104 = vmatpush.bf16.msra.mxu0 %v2769
          %3105 = vmatpush.bf16.msra.mxu0 %v2765
          %3106 = vmatpush.bf16.msra.mxu0 %v2761
          %3107 = vmatpush.bf16.msra.mxu0 %v2757
          %3108 = vmatpush.bf16.msra.mxu0 %v2753
          %3109 = vmatpush.bf16.msra.mxu0 %v2749
          %3110 = vmatpush.bf16.msra.mxu0 %v2745
          %3111 = vmatmul.bf16.gmra.mxu0 %v2227
          %v3112 = vpop.f32.mrf.mxu0
          %v3113 = vadd.f32 0.0, %v3112
          %v3114 = vpop.f32.mrf.mxu0
          %3115 = vdwg.mxu0
          %3116 = vmatpush.bf16.msra.mxu0 %v2805
          %3117 = vmatpush.bf16.msra.mxu0 %v2801
          %3118 = vmatpush.bf16.msra.mxu0 %v2797
          %3119 = vmatpush.bf16.msra.mxu0 %v2793
          %3120 = vmatpush.bf16.msra.mxu0 %v2789
          %3121 = vmatpush.bf16.msra.mxu0 %v2785
          %3122 = vmatpush.bf16.msra.mxu0 %v2781
          %3123 = vmatpush.bf16.msra.mxu0 %v2777
          %3124 = vmatmul.bf16.gmra.mxu0 %v2228
          %v3125 = vpop.f32.mrf.mxu0
          %v3126 = vadd.f32 %v3113, %v3125
          %v3127 = vpop.f32.mrf.mxu0
          %3128 = vdwg.mxu0
          %3129 = vmatpush.bf16.msra.mxu0 %v2837
          %3130 = vmatpush.bf16.msra.mxu0 %v2833
          %3131 = vmatpush.bf16.msra.mxu0 %v2829
          %3132 = vmatpush.bf16.msra.mxu0 %v2825
          %3133 = vmatpush.bf16.msra.mxu0 %v2821
          %3134 = vmatpush.bf16.msra.mxu0 %v2817
          %3135 = vmatpush.bf16.msra.mxu0 %v2813
          %3136 = vmatpush.bf16.msra.mxu0 %v2809
          %3137 = vmatmul.bf16.gmra.mxu0 %v2229
          %v3138 = vpop.f32.mrf.mxu0
          %v3139 = vadd.f32 %v3126, %v3138
          %v3140 = vpop.f32.mrf.mxu0
          %3141 = vdwg.mxu0
          %3142 = vmatpush.bf16.msra.mxu0 %v2869
          %3143 = vmatpush.bf16.msra.mxu0 %v2865
          %3144 = vmatpush.bf16.msra.mxu0 %v2861
          %3145 = vmatpush.bf16.msra.mxu0 %v2857
          %3146 = vmatpush.bf16.msra.mxu0 %v2853
          %3147 = vmatpush.bf16.msra.mxu0 %v2849
          %3148 = vmatpush.bf16.msra.mxu0 %v2845
          %3149 = vmatpush.bf16.msra.mxu0 %v2841
          %3150 = vmatmul.bf16.gmra.mxu0 %v2230
          %v3151 = vpop.f32.mrf.mxu0
          %v3152 = vadd.f32 %v3139, %v3151
          %v3153 = vpop.f32.mrf.mxu0
          %3154 = vdwg.mxu0
          %3155 = vmatpush.bf16.msra.mxu0 %v2774
          %3156 = vmatpush.bf16.msra.mxu0 %v2770
          %3157 = vmatpush.bf16.msra.mxu0 %v2766
          %3158 = vmatpush.bf16.msra.mxu0 %v2762
          %3159 = vmatpush.bf16.msra.mxu0 %v2758
          %3160 = vmatpush.bf16.msra.mxu0 %v2754
          %3161 = vmatpush.bf16.msra.mxu0 %v2750
          %3162 = vmatpush.bf16.msra.mxu0 %v2746
          %3163 = vmatmul.bf16.gmra.mxu0 %v2227
          %v3164 = vpop.f32.mrf.mxu0
          %v3165 = vadd.f32 0.0, %v3164
          %v3166 = vpop.f32.mrf.mxu0
          %3167 = vdwg.mxu0
          %3168 = vmatpush.bf16.msra.mxu0 %v2806
          %3169 = vmatpush.bf16.msra.mxu0 %v2802
          %3170 = vmatpush.bf16.msra.mxu0 %v2798
          %3171 = vmatpush.bf16.msra.mxu0 %v2794
          %3172 = vmatpush.bf16.msra.mxu0 %v2790
          %3173 = vmatpush.bf16.msra.mxu0 %v2786
          %3174 = vmatpush.bf16.msra.mxu0 %v2782
          %3175 = vmatpush.bf16.msra.mxu0 %v2778
          %3176 = vmatmul.bf16.gmra.mxu0 %v2228
          %v3177 = vpop.f32.mrf.mxu0
          %v3178 = vadd.f32 %v3165, %v3177
          %v3179 = vpop.f32.mrf.mxu0
          %3180 = vdwg.mxu0
          %3181 = vmatpush.bf16.msra.mxu0 %v2838
          %3182 = vmatpush.bf16.msra.mxu0 %v2834
          %3183 = vmatpush.bf16.msra.mxu0 %v2830
          %3184 = vmatpush.bf16.msra.mxu0 %v2826
          %3185 = vmatpush.bf16.msra.mxu0 %v2822
          %3186 = vmatpush.bf16.msra.mxu0 %v2818
          %3187 = vmatpush.bf16.msra.mxu0 %v2814
          %3188 = vmatpush.bf16.msra.mxu0 %v2810
          %3189 = vmatmul.bf16.gmra.mxu0 %v2229
          %v3190 = vpop.f32.mrf.mxu0
          %v3191 = vadd.f32 %v3178, %v3190
          %v3192 = vpop.f32.mrf.mxu0
          %3193 = vdwg.mxu0
          %3194 = vmatpush.bf16.msra.mxu0 %v2870
          %3195 = vmatpush.bf16.msra.mxu0 %v2866
          %3196 = vmatpush.bf16.msra.mxu0 %v2862
          %3197 = vmatpush.bf16.msra.mxu0 %v2858
          %3198 = vmatpush.bf16.msra.mxu0 %v2854
          %3199 = vmatpush.bf16.msra.mxu0 %v2850
          %3200 = vmatpush.bf16.msra.mxu0 %v2846
          %3201 = vmatpush.bf16.msra.mxu0 %v2842
          %3202 = vmatmul.bf16.gmra.mxu0 %v2230
          %v3203 = vpop.f32.mrf.mxu0
          %v3204 = vadd.f32 %v3191, %v3203
          %v3205 = vpop.f32.mrf.mxu0
          %3206 = vdwg.mxu0
          %v3207 = vld [vmem:[#allocation5] ss:$2 sm:$0xf]
          %v3209 = vperm.slane %v3207, 0
          %v3210 = vperm.slane %v3207, 1
          %v3211 = vperm.slane %v3207, 2
          %v3212 = vperm.slane %v3207, 3
          %v3217 = vmul.f32 %v3048, %v3209
          %v3218 = vmul.f32 %v3100, %v3210
          %v3219 = vmul.f32 %v3152, %v3211
          %v3220 = vmul.f32 %v3204, %v3212
          %s3221 = scalar_lea.vmem [#allocation5], 1
          %v3222 = vld [vmem:[%s3221] ss:$2 sm:$0xf]
          %v3224 = vperm.slane %v3222, 0
          %v3225 = vperm.slane %v3222, 1
          %v3226 = vperm.slane %v3222, 2
          %v3227 = vperm.slane %v3222, 3
          %v3232 = vadd.f32 %v3217, %v3224
          %v3233 = vadd.f32 %v3218, %v3225
          %v3234 = vadd.f32 %v3219, %v3226
          %v3235 = vadd.f32 %v3220, %v3227
          %v3236 = vmax.f32 %v3232, 0.0
          %v3237 = vmax.f32 %v3233, 0.0
          %v3238 = vmax.f32 %v3234, 0.0
          %v3239 = vmax.f32 %v3235, 0.0
          %v3240 = vld [vmem:[%s7] sm:$0xf]
          %v3242 = vperm.slane %v3240, 0
          %v3243 = vperm.slane %v3240, 1
          %v3244 = vperm.slane %v3240, 2
          %v3245 = vperm.slane %v3240, 3
          %v3250 = vmul.f32 %v3236, %v3242
          %v3251 = vmul.f32 %v3237, %v3243
          %v3252 = vmul.f32 %v3238, %v3244
          %v3253 = vmul.f32 %v3239, %v3245
          %v3254 = vadd.f32 %v3250, %v3251
          %v3255 = vadd.f32 %v3254, %v3252
          %v3256 = vadd.f32 %v3255, %v3253
          %3257 = vadd.xlane.f32.xlu0 %v3256
          %v3258 = vpop.xlane.xlu0 %3257
          %s3259 = sld [smem:[#allocation6]]
          %v3260 = vstv %s3259
          %v3261 = vadd.f32 %v3258, %v3260
          %vm3262 = vcmask 7168
          %3263 = vst.msk [vmem:[%s423] sm:$0xff] %vm3262, %v3261
        $region104: #{tpu_custom_call.1} parent=55 // pred_fallthru
          _
        %p3264 = scmp.lt.s32.totalorder %s30, 0
        %s3265 = scalar_select %p3264, %s30, 0
        %s3266 = smul.addr %s3265, 8
        %s3267 = scalar_lea.vmem %s9, %s3266
        // Predicated region
        $region105: #{tpu_custom_call.1} parent=55 // pred_check
          %p3268 = pneg %p249
        $region106: #{tpu_custom_call.1} parent=55 // pred_check_branch
          %3270 = sbr.rel (%p3268) target = $region108
        $region107: #{tpu_custom_call.1} parent=55 // pred_region
          _
        $region108: #{tpu_custom_call.1} parent=55 // pred_fallthru
          _
        // Predicated region
        $region109: #{tpu_custom_call.1} parent=55 // pred_check
          %p3271 = pneg %p249
        $region110: #{tpu_custom_call.1} parent=55 // pred_check_branch
          %3273 = sbr.rel (%p3271) target = $region112
        $region111: #{tpu_custom_call.1} parent=55 // pred_region
          %p3274 = scmp.lt.s32.totalorder %s30, 0
          %s3275 = scalar_select %p3274, %s30, 0
          %s3276 = smul.addr %s3275, 8
          %s3277 = scalar_lea.vmem %s9, %s3276
        $region112: #{tpu_custom_call.1} parent=55 // pred_fallthru
          _
      $region56: #{tpu_custom_call.1} parent=5 // pred_fallthru
        _
      %p3278 = scmp.le.s32.totalorder 2, %s20
      // Predicated region
      $region113: #{tpu_custom_call.1} parent=5 // pred_check
        %p3279 = pneg %p3278
      $region114: #{tpu_custom_call.1} parent=5 // pred_check_branch
        %3281 = sbr.rel (%p3279) target = $region116
      $region115: #{tpu_custom_call.1} parent=5 // pred_region
        %s3282 = ssub.s32 %s20, 2
      $region116: #{tpu_custom_call.1} parent=5 // pred_fallthru
        _
    $region6: #{tpu_custom_call.1} parent=1 // loop_footer
      %s24 = sadd.s32 1, %s20
    $region7: #{tpu_custom_call.1} parent=1 // loop_footer_branch
      %19 = sbr.rel target = $region3
    $region8: #{tpu_custom_call.1} parent=1 // loop_exit
      _
    %3283 = vsyncpa [#allocation8], 1
    %s3284 = scalar_lea.sflag [#allocation8], 1
    %3285 = vsyncpa %s3284, 1
    %3286 = vsyncpa [#allocation10], 1
    %3287 = vsyncpa [#allocation13], 1
    %3288 = vsyncpa [#allocation16], 1

</llo_original>
